<compile_context>
chip_gen: v7x
topology: tpu7x:2x2x1
jax: 0.10.0
libtpu: 0.0.40
codegen_flags: <defaults>
</compile_context>

<pallas_src>
import numpy as np

import jax
import jax.numpy as jnp
from jax.experimental import pallas as pl
from jax.experimental.pallas import tpu as pltpu

_BN_EPS = 1e-5


# ----------------------------------------------------------------------------
# Host-built 0/1 constants (tiny; replace the old 9*S^2 shift matrices).
# ----------------------------------------------------------------------------

def _border_masks(H, W, reps):
    """(9, reps*H*W): mask[t, b*S + y*W + x] = 1 iff tap t=(dy+1)*3+(dx+1) of a
    padding=1 3x3 conv reads an in-bounds pixel (implements zero padding and
    also kills any cross-image wrap of the lane rotation)."""
    S = H * W
    m = np.zeros((9, S), np.float32)
    for t in range(9):
        dy, dx = t // 3 - 1, t % 3 - 1
        for y in range(H):
            if not 0 <= y + dy < H:
                continue
            for x in range(W):
                if 0 <= x + dx < W:
                    m[t, y * W + x] = 1.0
    return np.tile(m, (1, reps))


def _pool_compact(H, W, B):
    """(B*H*W, B*(H/2)*(W/2)) block-diagonal 0/1 compaction: after roll+max has
    folded each 2x2 window's max into its top-left corner, column (b, yo, xo)
    selects lane b*S + (2yo)*W + 2xo."""
    Ho, Wo = H // 2, W // 2
    S, So = H * W, Ho * Wo
    G = np.zeros((B * S, B * So), np.float32)
    for b in range(B):
        for yo in range(Ho):
            for xo in range(Wo):
                G[b * S + (2 * yo) * W + 2 * xo, b * So + yo * Wo + xo] = 1.0
    return G


def _pool_avg_select(H, W, B):
    """(B*H*W, B): fuses the 2nd max-pool's compaction with
    AdaptiveAvgPool2d((1,1)) -- column b averages image b's window maxima."""
    Ho, Wo = H // 2, W // 2
    S = H * W
    inv = 1.0 / (Ho * Wo)
    v = np.zeros((B * S, B), np.float32)
    for b in range(B):
        for yo in range(Ho):
            for xo in range(Wo):
                v[b * S + (2 * yo) * W + 2 * xo, b] = inv
    return v


# ----------------------------------------------------------------------------
# The single fused Pallas kernel (whole network, B images per grid step).
# ----------------------------------------------------------------------------

def _make_kernel(W, W2):
    f32 = jnp.float32

    def conv_bn_relu(z, m_ref, w_ref, s_ref, b_ref, width):
        """3x3 conv (padding=1) + folded BN(eval) + ReLU, channel-major.

        z: (Cin, B*S) with spatial (image-major) on the lane axis.  Each tap is
        a lane rotation (XLU) times a 0/1 border mask (VPU); the 9 taps are
        stacked along the sublane/channel axis so the whole conv is ONE MXU
        matmul (Cout, 9*Cin) @ (9*Cin, B*S).
        """
        n = z.shape[1]
        taps = []
        for t in range(9):
            dy, dx = t // 3 - 1, t % 3 - 1
            off = dy * width + dx                  # within-image lane offset
            zz = z if off == 0 else pltpu.roll(z, shift=(-off) % n, axis=1)
            if off != 0:                           # center tap: mask is all-1
                zz = zz * m_ref[t:t + 1, :]
            taps.append(zz)
        stacked = jnp.concatenate(taps, axis=0)                 # (9*Cin, n)
        acc = jnp.dot(w_ref[...], stacked, preferred_element_type=f32)
        return jnp.maximum(acc * s_ref[...] + b_ref[...], 0.0)  # (Cout, n)

    def maxpool_fold(z, width):
        """Fold every 2x2 window's max onto its top-left lane (roll + max)."""
        n = z.shape[1]
        m = jnp.maximum(z, pltpu.roll(z, shift=n - 1, axis=1))          # +(0,1)
        return jnp.maximum(m, pltpu.roll(m, shift=n - width, axis=1))   # +(1,*)

    def kernel(x_ref, m1_ref, m2_ref, g1_ref, sel_ref,
               w1_ref, s1_ref, b1_ref,
               w2_ref, s2_ref, b2_ref,
               w3_ref, s3_ref, b3_ref,
               fw1_ref, fb1_ref, fw2_ref, fb2_ref,
               o_ref):
        x = x_ref[0]                                            # (8, B*S)
        # conv1 / bn1 / ReLU   (held separately by proxy_VGG2, same math)
        z = conv_bn_relu(x, m1_ref, w1_ref, s1_ref, b1_ref, W)  # (8,  B*S)
        # conv2 / bn / ReLU / MaxPool2
        z = conv_bn_relu(z, m1_ref, w2_ref, s2_ref, b2_ref, W)  # (16, B*S)
        z = jnp.dot(maxpool_fold(z, W), g1_ref[...],
                    preferred_element_type=f32)                 # (16, B*S/4)
        # conv3 / bn / ReLU / MaxPool2 + AdaptiveAvgPool (fused select-average)
        z = conv_bn_relu(z, m2_ref, w3_ref, s3_ref, b3_ref, W2)  # (32, B*S/4)
        feats = jnp.dot(maxpool_fold(z, W2), sel_ref[...],
                        preferred_element_type=f32)             # (32, B)
        # classifier: Linear -> ReLU -> Linear   (whole image block at once)
        h = jnp.maximum(
            jnp.dot(fw1_ref[...], feats, preferred_element_type=f32)
            + fb1_ref[...], 0.0)                                # (64, B)
        o_ref[0] = (jnp.dot(fw2_ref[...], h, preferred_element_type=f32)
                    + fb2_ref[...])                             # (n_cls, B)

    return kernel


# ----------------------------------------------------------------------------
# Wrapper
# ----------------------------------------------------------------------------

def _fold_conv_bn(c, cin_rows):
    """Fold conv bias + eval BatchNorm into per-channel scale/bias and reshape
    the (3,3,Cin,Cout) HWIO weight into (Cout, 9*cin_rows) matching the
    tap-stacked activation layout (Cin zero-padded to cin_rows)."""
    w = jnp.asarray(c["w"], jnp.float32)
    cin, cout = w.shape[2], w.shape[3]
    wt = jnp.transpose(w.reshape(9, cin, cout), (2, 0, 1))      # (cout, 9, cin)
    if cin_rows > cin:
        wt = jnp.pad(wt, ((0, 0), (0, 0), (0, cin_rows - cin)))
    w_mat = wt.reshape(cout, 9 * cin_rows)
    scale = c["gamma"] / jnp.sqrt(c["rvar"] + _BN_EPS)
    bias = c["beta"] - c["rmean"] * scale + c["conv_b"] * scale
    return (w_mat,
            scale.reshape(cout, 1).astype(jnp.float32),
            bias.reshape(cout, 1).astype(jnp.float32))


def proxy_vgg2_forward(params, x_nchw):
    """Forward of proxy_VGG2 (eval, noise_variance=0, ch_activation=[])."""
    x = jnp.asarray(x_nchw, jnp.float32)
    N, cin0, H, W = x.shape
    assert H % 4 == 0 and W % 4 == 0, "two 2x2 max-pools require H,W % 4 == 0"
    S, H2, W2 = H * W, H // 2, W // 2
    S2 = H2 * W2
    assert S % 128 == 0, "flattened spatial must be lane-aligned (e.g. 16x16)"

    # Images per grid step (lane-batched).  Prefer B=4 so N=8 gives grid=(2,)
    # (both v7x TensorCores busy) and keep B*S2 a multiple of 128 so every
    # pltpu.roll stays on a 128-aligned lane dim.
    B = 1
    for cand in (4, 8, 2, 1):
        if N % cand == 0 and (cand * S2) % 128 == 0:
            B = cand
            break

    # Fold conv bias + BN(eval); channel-major (Cout, 9*Cin) weights.  The RGB
    # input is zero-padded to 8 channels (one sublane tile) so the in-kernel
    # tap stacking concatenates 8/16-row (aligned) chunks only.
    cpad = 8
    cin2 = params["convs"][1]["w"].shape[2]
    cin3 = params["convs"][2]["w"].shape[2]
    assert cin2 % 8 == 0 and cin3 % 8 == 0
    (w1, s1, b1) = _fold_conv_bn(params["convs"][0], cpad)
    (w2, s2, b2) = _fold_conv_bn(params["convs"][1], cin2)
    (w3, s3, b3) = _fold_conv_bn(params["convs"][2], cin3)

    # Constant masks / pool matrices (host-built, ~1 MiB total at 16x16).
    m1 = jnp.asarray(_border_masks(H, W, B))            # (9, B*S)
    m2 = jnp.asarray(_border_masks(H2, W2, B))          # (9, B*S2)
    g1 = jnp.asarray(_pool_compact(H, W, B))            # (B*S, B*S2)
    sel = jnp.asarray(_pool_avg_select(H2, W2, B))      # (B*S2, B)
    # TODO(synk): at large H*W switch g1 to per-image (S, S/4) compactions (or
    # strided selects) and single-buffer the constant BlockSpecs
    # (pipeline_mode=pl.Buffered(1)) to stay under v7x's 64 MiB VMEM.

    fw1 = jnp.asarray(params["fc1_w"], jnp.float32).T            # (64, 32)
    fb1 = jnp.asarray(params["fc1_b"], jnp.float32).reshape(-1, 1)
    fw2 = jnp.asarray(params["fc2_w"], jnp.float32).T            # (10, 64)
    fb2 = jnp.asarray(params["fc2_b"], jnp.float32).reshape(-1, 1)
    n_cls = fw2.shape[0]

    # Channel-major, lane-batched input: (N//B, 8, B*S), image-major lanes.
    x_cs = x.reshape(N, cin0, S)
    if cpad > cin0:
        x_cs = jnp.pad(x_cs, ((0, 0), (0, cpad - cin0), (0, 0)))
    xb = (x_cs.reshape(N // B, B, cpad, S)
          .transpose(0, 2, 1, 3)
          .reshape(N // B, cpad, B * S))

    def const_spec(a):
        return pl.BlockSpec(a.shape, lambda n: (0, 0))

    out = pl.pallas_call(
        _make_kernel(W, W2),
        out_shape=jax.ShapeDtypeStruct((N // B, n_cls, B), jnp.float32),
        grid=(N // B,),
        in_specs=[
            pl.BlockSpec((1, cpad, B * S), lambda n: (n, 0, 0)),  # image block
            const_spec(m1), const_spec(m2), const_spec(g1), const_spec(sel),
            const_spec(w1), const_spec(s1), const_spec(b1),
            const_spec(w2), const_spec(s2), const_spec(b2),
            const_spec(w3), const_spec(s3), const_spec(b3),
            const_spec(fw1), const_spec(fb1), const_spec(fw2), const_spec(fb2),
        ],
        out_specs=pl.BlockSpec((1, n_cls, B), lambda n: (n, 0, 0)),
        compiler_params=pltpu.CompilerParams(
            dimension_semantics=("parallel",),   # batch blocks -> both v7x TCs
            vmem_limit_bytes=32 * 1024 * 1024),
    )(xb, m1, m2, g1, sel,
      w1, s1, b1, w2, s2, b2, w3, s3, b3,
      fw1, fb1, fw2, fb2)

    # (N//B, n_cls, B) -> (N, n_cls)
    return out.transpose(0, 2, 1).reshape(N, n_cls)


# ----------------------------------------------------------------------------
# Synthetic parameters + pure-JAX reference (correctness check)
# ----------------------------------------------------------------------------

def init_params(key):
    """Deterministic synthetic parameters (synthetic net, not a checkpoint)."""
    cfg = [(3, 8), (8, 16), (16, 32)]
    keys = jax.random.split(key, 6 * len(cfg) + 4)
    k = iter(keys)
    convs = []
    for cin, cout in cfg:
        convs.append(dict(
            w=0.1 * jax.random.normal(next(k), (3, 3, cin, cout), jnp.float32),
            conv_b=0.05 * jax.random.normal(next(k), (cout,), jnp.float32),
            gamma=1.0 + 0.1 * jax.random.normal(next(k), (cout,), jnp.float32),
            beta=0.05 * jax.random.normal(next(k), (cout,), jnp.float32),
            rmean=0.1 * jax.random.normal(next(k), (cout,), jnp.float32),
            rvar=0.5 + jax.random.uniform(next(k), (cout,), jnp.float32),
        ))
    params = {
        "convs": convs,
        "fc1_w": 0.1 * jax.random.normal(next(k), (32, 64), jnp.float32),
        "fc1_b": 0.02 * jax.random.normal(next(k), (64,), jnp.float32),
        "fc2_w": 0.1 * jax.random.normal(next(k), (64, 10), jnp.float32),
        "fc2_b": 0.02 * jax.random.normal(next(k), (10,), jnp.float32),
    }
    return params


def reference_forward(params, x_nchw):
    """Plain-JAX (high precision) reference of the same forward pass."""
    x = jnp.transpose(x_nchw, (0, 2, 3, 1)).astype(jnp.float32)
    for li, c in enumerate(params["convs"]):
        x = jax.lax.conv_general_dilated(
            x, c["w"], window_strides=(1, 1), padding="SAME",
            dimension_numbers=("NHWC", "HWIO", "NHWC"),
            precision=jax.lax.Precision.HIGHEST) + c["conv_b"]
        x = (x - c["rmean"]) / jnp.sqrt(c["rvar"] + _BN_EPS) * c["gamma"] + c["beta"]
        x = jnp.maximum(x, 0.0)
        if li >= 1:                            # MaxPool2d(2) after conv2, conv3
            x = jax.lax.reduce_window(x, -jnp.inf, jax.lax.max,
                                      (1, 2, 2, 1), (1, 2, 2, 1), "VALID")
    x = jnp.mean(x, axis=(1, 2))               # AdaptiveAvgPool2d((1,1)) + flatten
    h = jnp.maximum(
        jnp.dot(x, params["fc1_w"], precision=jax.lax.Precision.HIGHEST)
        + params["fc1_b"], 0.0)
    return (jnp.dot(h, params["fc2_w"], precision=jax.lax.Precision.HIGHEST)
            + params["fc2_b"])


if __name__ == "__main__":
    key = jax.random.PRNGKey(0)
    pkey, xkey = jax.random.split(key)
    params = init_params(pkey)
    x = jax.random.normal(xkey, (8, 3, 16, 16), jnp.float32)     # NCHW input

    fwd = jax.jit(proxy_vgg2_forward)
    out = jax.block_until_ready(fwd(params, x))
    assert out.shape == (8, 10) and out.dtype == jnp.float32

    ref = jax.block_until_ready(reference_forward(params, x))
    # Tightened relative tolerance (was 1e-2); absolute floor kept generous
    # enough to absorb MXU f32 multi-pass rounding differences.
    np.testing.assert_allclose(np.asarray(out), np.asarray(ref),
                               rtol=1e-3, atol=5e-3)
    print("KERNEL_OK")
</pallas_src>

<mosaic_0001>
module attributes {stable_mosaic.version = 11 : i64} {
  func.func @kernel(%arg0: i32, %arg1: memref<1x8x1024xf32, #tpu.memory_space<vmem>>, %arg2: memref<9x1024xf32, #tpu.memory_space<vmem>>, %arg3: memref<9x256xf32, #tpu.memory_space<vmem>>, %arg4: memref<1024x256xf32, #tpu.memory_space<vmem>>, %arg5: memref<256x4xf32, #tpu.memory_space<vmem>>, %arg6: memref<8x72xf32, #tpu.memory_space<vmem>>, %arg7: memref<8x1xf32, #tpu.memory_space<vmem>>, %arg8: memref<8x1xf32, #tpu.memory_space<vmem>>, %arg9: memref<16x72xf32, #tpu.memory_space<vmem>>, %arg10: memref<16x1xf32, #tpu.memory_space<vmem>>, %arg11: memref<16x1xf32, #tpu.memory_space<vmem>>, %arg12: memref<32x144xf32, #tpu.memory_space<vmem>>, %arg13: memref<32x1xf32, #tpu.memory_space<vmem>>, %arg14: memref<32x1xf32, #tpu.memory_space<vmem>>, %arg15: memref<64x32xf32, #tpu.memory_space<vmem>>, %arg16: memref<64x1xf32, #tpu.memory_space<vmem>>, %arg17: memref<10x64xf32, #tpu.memory_space<vmem>>, %arg18: memref<10x1xf32, #tpu.memory_space<vmem>>, %arg19: memref<1x10x4xf32, #tpu.memory_space<vmem>>) attributes {dimension_semantics = [#tpu.dimension_semantics<parallel>], iteration_bounds = array<i64: 2>, scalar_prefetch = 0 : i64, scratch_operands = 0 : i64, tpu.core_type = #tpu.core_type<tc>, window_params = [{transform_indices = @transform_0, window_bounds = array<i64: 1, 8, 1024>}, {pipeline_mode = #tpu.pipeline_mode<synchronous>, transform_indices = @transform_1, window_bounds = array<i64: 9, 1024>}, {pipeline_mode = #tpu.pipeline_mode<synchronous>, transform_indices = @transform_2, window_bounds = array<i64: 9, 256>}, {pipeline_mode = #tpu.pipeline_mode<synchronous>, transform_indices = @transform_3, window_bounds = array<i64: 1024, 256>}, {pipeline_mode = #tpu.pipeline_mode<synchronous>, transform_indices = @transform_4, window_bounds = array<i64: 256, 4>}, {pipeline_mode = #tpu.pipeline_mode<synchronous>, transform_indices = @transform_5, window_bounds = array<i64: 8, 72>}, {pipeline_mode = #tpu.pipeline_mode<synchronous>, transform_indices = @transform_6, window_bounds = array<i64: 8, 1>}, {pipeline_mode = #tpu.pipeline_mode<synchronous>, transform_indices = @transform_7, window_bounds = array<i64: 8, 1>}, {pipeline_mode = #tpu.pipeline_mode<synchronous>, transform_indices = @transform_8, window_bounds = array<i64: 16, 72>}, {pipeline_mode = #tpu.pipeline_mode<synchronous>, transform_indices = @transform_9, window_bounds = array<i64: 16, 1>}, {pipeline_mode = #tpu.pipeline_mode<synchronous>, transform_indices = @transform_10, window_bounds = array<i64: 16, 1>}, {pipeline_mode = #tpu.pipeline_mode<synchronous>, transform_indices = @transform_11, window_bounds = array<i64: 32, 144>}, {pipeline_mode = #tpu.pipeline_mode<synchronous>, transform_indices = @transform_12, window_bounds = array<i64: 32, 1>}, {pipeline_mode = #tpu.pipeline_mode<synchronous>, transform_indices = @transform_13, window_bounds = array<i64: 32, 1>}, {pipeline_mode = #tpu.pipeline_mode<synchronous>, transform_indices = @transform_14, window_bounds = array<i64: 64, 32>}, {pipeline_mode = #tpu.pipeline_mode<synchronous>, transform_indices = @transform_15, window_bounds = array<i64: 64, 1>}, {pipeline_mode = #tpu.pipeline_mode<synchronous>, transform_indices = @transform_16, window_bounds = array<i64: 10, 64>}, {pipeline_mode = #tpu.pipeline_mode<synchronous>, transform_indices = @transform_17, window_bounds = array<i64: 10, 1>}, {transform_indices = @transform_18, window_bounds = array<i64: 1, 10, 4>}]} {
    %c0 = arith.constant 0 : index
    %c0_0 = arith.constant 0 : index
    %c0_1 = arith.constant 0 : index
    %0 = vector.load %arg1[%c0, %c0_0, %c0_1] : memref<1x8x1024xf32, #tpu.memory_space<vmem>>, vector<1x8x1024xf32>
    %1 = vector.shape_cast %0 : vector<1x8x1024xf32> to vector<8x1024xf32>
    %c17_i32 = arith.constant 17 : i32
    %2 = tpu.dynamic_rotate %1 by %c17_i32 dim 1 : vector<8x1024xf32>, i32 -> vector<8x1024xf32>
    %c0_2 = arith.constant 0 : index
    %c0_3 = arith.constant 0 : index
    %3 = vector.load %arg2[%c0_2, %c0_3] : memref<9x1024xf32, #tpu.memory_space<vmem>>, vector<1x1024xf32>
    %4 = vector.broadcast %3 : vector<1x1024xf32> to vector<8x1024xf32>
    %5 = arith.mulf %2, %4 : vector<8x1024xf32>
    %c16_i32 = arith.constant 16 : i32
    %6 = tpu.dynamic_rotate %1 by %c16_i32 dim 1 : vector<8x1024xf32>, i32 -> vector<8x1024xf32>
    %c1 = arith.constant 1 : index
    %c0_4 = arith.constant 0 : index
    %7 = vector.load %arg2[%c1, %c0_4] : memref<9x1024xf32, #tpu.memory_space<vmem>>, vector<1x1024xf32>
    %8 = vector.broadcast %7 : vector<1x1024xf32> to vector<8x1024xf32>
    %9 = arith.mulf %6, %8 : vector<8x1024xf32>
    %c15_i32 = arith.constant 15 : i32
    %10 = tpu.dynamic_rotate %1 by %c15_i32 dim 1 : vector<8x1024xf32>, i32 -> vector<8x1024xf32>
    %c2 = arith.constant 2 : index
    %c0_5 = arith.constant 0 : index
    %11 = vector.load %arg2[%c2, %c0_5] : memref<9x1024xf32, #tpu.memory_space<vmem>>, vector<1x1024xf32>
    %12 = vector.broadcast %11 : vector<1x1024xf32> to vector<8x1024xf32>
    %13 = arith.mulf %10, %12 : vector<8x1024xf32>
    %c1_i32 = arith.constant 1 : i32
    %14 = tpu.dynamic_rotate %1 by %c1_i32 dim 1 : vector<8x1024xf32>, i32 -> vector<8x1024xf32>
    %c3 = arith.constant 3 : index
    %c0_6 = arith.constant 0 : index
    %15 = vector.load %arg2[%c3, %c0_6] : memref<9x1024xf32, #tpu.memory_space<vmem>>, vector<1x1024xf32>
    %16 = vector.broadcast %15 : vector<1x1024xf32> to vector<8x1024xf32>
    %17 = arith.mulf %14, %16 : vector<8x1024xf32>
    %c1023_i32 = arith.constant 1023 : i32
    %18 = tpu.dynamic_rotate %1 by %c1023_i32 dim 1 : vector<8x1024xf32>, i32 -> vector<8x1024xf32>
    %c5 = arith.constant 5 : index
    %c0_7 = arith.constant 0 : index
    %19 = vector.load %arg2[%c5, %c0_7] : memref<9x1024xf32, #tpu.memory_space<vmem>>, vector<1x1024xf32>
    %20 = vector.broadcast %19 : vector<1x1024xf32> to vector<8x1024xf32>
    %21 = arith.mulf %18, %20 : vector<8x1024xf32>
    %c1009_i32 = arith.constant 1009 : i32
    %22 = tpu.dynamic_rotate %1 by %c1009_i32 dim 1 : vector<8x1024xf32>, i32 -> vector<8x1024xf32>
    %c6 = arith.constant 6 : index
    %c0_8 = arith.constant 0 : index
    %23 = vector.load %arg2[%c6, %c0_8] : memref<9x1024xf32, #tpu.memory_space<vmem>>, vector<1x1024xf32>
    %24 = vector.broadcast %23 : vector<1x1024xf32> to vector<8x1024xf32>
    %25 = arith.mulf %22, %24 : vector<8x1024xf32>
    %c1008_i32 = arith.constant 1008 : i32
    %26 = tpu.dynamic_rotate %1 by %c1008_i32 dim 1 : vector<8x1024xf32>, i32 -> vector<8x1024xf32>
    %c7 = arith.constant 7 : index
    %c0_9 = arith.constant 0 : index
    %27 = vector.load %arg2[%c7, %c0_9] : memref<9x1024xf32, #tpu.memory_space<vmem>>, vector<1x1024xf32>
    %28 = vector.broadcast %27 : vector<1x1024xf32> to vector<8x1024xf32>
    %29 = arith.mulf %26, %28 : vector<8x1024xf32>
    %c1007_i32 = arith.constant 1007 : i32
    %30 = tpu.dynamic_rotate %1 by %c1007_i32 dim 1 : vector<8x1024xf32>, i32 -> vector<8x1024xf32>
    %c8 = arith.constant 8 : index
    %c0_10 = arith.constant 0 : index
    %31 = vector.load %arg2[%c8, %c0_10] : memref<9x1024xf32, #tpu.memory_space<vmem>>, vector<1x1024xf32>
    %32 = vector.broadcast %31 : vector<1x1024xf32> to vector<8x1024xf32>
    %33 = arith.mulf %30, %32 : vector<8x1024xf32>
    %34 = tpu.concatenate %5, %9, %13, %17, %1, %21, %25, %29, %33 in 0 : vector<8x1024xf32>, vector<8x1024xf32>, vector<8x1024xf32>, vector<8x1024xf32>, vector<8x1024xf32>, vector<8x1024xf32>, vector<8x1024xf32>, vector<8x1024xf32>, vector<8x1024xf32> -> vector<72x1024xf32>
    %c0_11 = arith.constant 0 : index
    %c0_12 = arith.constant 0 : index
    %35 = vector.load %arg6[%c0_11, %c0_12] : memref<8x72xf32, #tpu.memory_space<vmem>>, vector<8x72xf32>
    %cst = arith.constant dense<0.000000e+00> : vector<8x1024xf32>
    %36 = tpu.matmul %35, %34, %cst {dimension_numbers = #tpu.dot_dimension_numbers<[1], [0], [0], [1], [0, 0, 1, 1], [], []>} : vector<8x72xf32>, vector<72x1024xf32>, vector<8x1024xf32> -> vector<8x1024xf32>
    %c0_13 = arith.constant 0 : index
    %c0_14 = arith.constant 0 : index
    %37 = vector.load %arg7[%c0_13, %c0_14] : memref<8x1xf32, #tpu.memory_space<vmem>>, vector<8x1xf32>
    %38 = vector.broadcast %37 : vector<8x1xf32> to vector<8x1024xf32>
    %39 = arith.mulf %36, %38 : vector<8x1024xf32>
    %c0_15 = arith.constant 0 : index
    %c0_16 = arith.constant 0 : index
    %40 = vector.load %arg8[%c0_15, %c0_16] : memref<8x1xf32, #tpu.memory_space<vmem>>, vector<8x1xf32>
    %41 = vector.broadcast %40 : vector<8x1xf32> to vector<8x1024xf32>
    %42 = arith.addf %39, %41 : vector<8x1024xf32>
    %cst_17 = arith.constant 0.000000e+00 : f32
    %43 = vector.broadcast %cst_17 : f32 to vector<8x1024xf32>
    %44 = arith.maximumf %42, %43 : vector<8x1024xf32>
    %c17_i32_18 = arith.constant 17 : i32
    %45 = tpu.dynamic_rotate %44 by %c17_i32_18 dim 1 : vector<8x1024xf32>, i32 -> vector<8x1024xf32>
    %c0_19 = arith.constant 0 : index
    %c0_20 = arith.constant 0 : index
    %46 = vector.load %arg2[%c0_19, %c0_20] : memref<9x1024xf32, #tpu.memory_space<vmem>>, vector<1x1024xf32>
    %47 = vector.broadcast %46 : vector<1x1024xf32> to vector<8x1024xf32>
    %48 = arith.mulf %45, %47 : vector<8x1024xf32>
    %c16_i32_21 = arith.constant 16 : i32
    %49 = tpu.dynamic_rotate %44 by %c16_i32_21 dim 1 : vector<8x1024xf32>, i32 -> vector<8x1024xf32>
    %c1_22 = arith.constant 1 : index
    %c0_23 = arith.constant 0 : index
    %50 = vector.load %arg2[%c1_22, %c0_23] : memref<9x1024xf32, #tpu.memory_space<vmem>>, vector<1x1024xf32>
    %51 = vector.broadcast %50 : vector<1x1024xf32> to vector<8x1024xf32>
    %52 = arith.mulf %49, %51 : vector<8x1024xf32>
    %c15_i32_24 = arith.constant 15 : i32
    %53 = tpu.dynamic_rotate %44 by %c15_i32_24 dim 1 : vector<8x1024xf32>, i32 -> vector<8x1024xf32>
    %c2_25 = arith.constant 2 : index
    %c0_26 = arith.constant 0 : index
    %54 = vector.load %arg2[%c2_25, %c0_26] : memref<9x1024xf32, #tpu.memory_space<vmem>>, vector<1x1024xf32>
    %55 = vector.broadcast %54 : vector<1x1024xf32> to vector<8x1024xf32>
    %56 = arith.mulf %53, %55 : vector<8x1024xf32>
    %c1_i32_27 = arith.constant 1 : i32
    %57 = tpu.dynamic_rotate %44 by %c1_i32_27 dim 1 : vector<8x1024xf32>, i32 -> vector<8x1024xf32>
    %c3_28 = arith.constant 3 : index
    %c0_29 = arith.constant 0 : index
    %58 = vector.load %arg2[%c3_28, %c0_29] : memref<9x1024xf32, #tpu.memory_space<vmem>>, vector<1x1024xf32>
    %59 = vector.broadcast %58 : vector<1x1024xf32> to vector<8x1024xf32>
    %60 = arith.mulf %57, %59 : vector<8x1024xf32>
    %c1023_i32_30 = arith.constant 1023 : i32
    %61 = tpu.dynamic_rotate %44 by %c1023_i32_30 dim 1 : vector<8x1024xf32>, i32 -> vector<8x1024xf32>
    %c5_31 = arith.constant 5 : index
    %c0_32 = arith.constant 0 : index
    %62 = vector.load %arg2[%c5_31, %c0_32] : memref<9x1024xf32, #tpu.memory_space<vmem>>, vector<1x1024xf32>
    %63 = vector.broadcast %62 : vector<1x1024xf32> to vector<8x1024xf32>
    %64 = arith.mulf %61, %63 : vector<8x1024xf32>
    %c1009_i32_33 = arith.constant 1009 : i32
    %65 = tpu.dynamic_rotate %44 by %c1009_i32_33 dim 1 : vector<8x1024xf32>, i32 -> vector<8x1024xf32>
    %c6_34 = arith.constant 6 : index
    %c0_35 = arith.constant 0 : index
    %66 = vector.load %arg2[%c6_34, %c0_35] : memref<9x1024xf32, #tpu.memory_space<vmem>>, vector<1x1024xf32>
    %67 = vector.broadcast %66 : vector<1x1024xf32> to vector<8x1024xf32>
    %68 = arith.mulf %65, %67 : vector<8x1024xf32>
    %c1008_i32_36 = arith.constant 1008 : i32
    %69 = tpu.dynamic_rotate %44 by %c1008_i32_36 dim 1 : vector<8x1024xf32>, i32 -> vector<8x1024xf32>
    %c7_37 = arith.constant 7 : index
    %c0_38 = arith.constant 0 : index
    %70 = vector.load %arg2[%c7_37, %c0_38] : memref<9x1024xf32, #tpu.memory_space<vmem>>, vector<1x1024xf32>
    %71 = vector.broadcast %70 : vector<1x1024xf32> to vector<8x1024xf32>
    %72 = arith.mulf %69, %71 : vector<8x1024xf32>
    %c1007_i32_39 = arith.constant 1007 : i32
    %73 = tpu.dynamic_rotate %44 by %c1007_i32_39 dim 1 : vector<8x1024xf32>, i32 -> vector<8x1024xf32>
    %c8_40 = arith.constant 8 : index
    %c0_41 = arith.constant 0 : index
    %74 = vector.load %arg2[%c8_40, %c0_41] : memref<9x1024xf32, #tpu.memory_space<vmem>>, vector<1x1024xf32>
    %75 = vector.broadcast %74 : vector<1x1024xf32> to vector<8x1024xf32>
    %76 = arith.mulf %73, %75 : vector<8x1024xf32>
    %77 = tpu.concatenate %48, %52, %56, %60, %44, %64, %68, %72, %76 in 0 : vector<8x1024xf32>, vector<8x1024xf32>, vector<8x1024xf32>, vector<8x1024xf32>, vector<8x1024xf32>, vector<8x1024xf32>, vector<8x1024xf32>, vector<8x1024xf32>, vector<8x1024xf32> -> vector<72x1024xf32>
    %c0_42 = arith.constant 0 : index
    %c0_43 = arith.constant 0 : index
    %78 = vector.load %arg9[%c0_42, %c0_43] : memref<16x72xf32, #tpu.memory_space<vmem>>, vector<16x72xf32>
    %cst_44 = arith.constant dense<0.000000e+00> : vector<16x1024xf32>
    %79 = tpu.matmul %78, %77, %cst_44 {dimension_numbers = #tpu.dot_dimension_numbers<[1], [0], [0], [1], [0, 0, 1, 1], [], []>} : vector<16x72xf32>, vector<72x1024xf32>, vector<16x1024xf32> -> vector<16x1024xf32>
    %c0_45 = arith.constant 0 : index
    %c0_46 = arith.constant 0 : index
    %80 = vector.load %arg10[%c0_45, %c0_46] : memref<16x1xf32, #tpu.memory_space<vmem>>, vector<16x1xf32>
    %81 = vector.broadcast %80 : vector<16x1xf32> to vector<16x1024xf32>
    %82 = arith.mulf %79, %81 : vector<16x1024xf32>
    %c0_47 = arith.constant 0 : index
    %c0_48 = arith.constant 0 : index
    %83 = vector.load %arg11[%c0_47, %c0_48] : memref<16x1xf32, #tpu.memory_space<vmem>>, vector<16x1xf32>
    %84 = vector.broadcast %83 : vector<16x1xf32> to vector<16x1024xf32>
    %85 = arith.addf %82, %84 : vector<16x1024xf32>
    %cst_49 = arith.constant 0.000000e+00 : f32
    %86 = vector.broadcast %cst_49 : f32 to vector<16x1024xf32>
    %87 = arith.maximumf %85, %86 : vector<16x1024xf32>
    %c1023_i32_50 = arith.constant 1023 : i32
    %88 = tpu.dynamic_rotate %87 by %c1023_i32_50 dim 1 : vector<16x1024xf32>, i32 -> vector<16x1024xf32>
    %89 = arith.maximumf %87, %88 : vector<16x1024xf32>
    %c1008_i32_51 = arith.constant 1008 : i32
    %90 = tpu.dynamic_rotate %89 by %c1008_i32_51 dim 1 : vector<16x1024xf32>, i32 -> vector<16x1024xf32>
    %91 = arith.maximumf %89, %90 : vector<16x1024xf32>
    %c0_52 = arith.constant 0 : index
    %c0_53 = arith.constant 0 : index
    %92 = vector.load %arg4[%c0_52, %c0_53] : memref<1024x256xf32, #tpu.memory_space<vmem>>, vector<1024x256xf32>
    %cst_54 = arith.constant dense<0.000000e+00> : vector<16x256xf32>
    %93 = tpu.matmul %91, %92, %cst_54 {dimension_numbers = #tpu.dot_dimension_numbers<[1], [0], [0], [1], [0, 0, 1, 1], [], []>} : vector<16x1024xf32>, vector<1024x256xf32>, vector<16x256xf32> -> vector<16x256xf32>
    %c9_i32 = arith.constant 9 : i32
    %94 = tpu.dynamic_rotate %93 by %c9_i32 dim 1 : vector<16x256xf32>, i32 -> vector<16x256xf32>
    %c0_55 = arith.constant 0 : index
    %c0_56 = arith.constant 0 : index
    %95 = vector.load %arg3[%c0_55, %c0_56] : memref<9x256xf32, #tpu.memory_space<vmem>>, vector<1x256xf32>
    %96 = vector.broadcast %95 : vector<1x256xf32> to vector<16x256xf32>
    %97 = arith.mulf %94, %96 : vector<16x256xf32>
    %c8_i32 = arith.constant 8 : i32
    %98 = tpu.dynamic_rotate %93 by %c8_i32 dim 1 : vector<16x256xf32>, i32 -> vector<16x256xf32>
    %c1_57 = arith.constant 1 : index
    %c0_58 = arith.constant 0 : index
    %99 = vector.load %arg3[%c1_57, %c0_58] : memref<9x256xf32, #tpu.memory_space<vmem>>, vector<1x256xf32>
    %100 = vector.broadcast %99 : vector<1x256xf32> to vector<16x256xf32>
    %101 = arith.mulf %98, %100 : vector<16x256xf32>
    %c7_i32 = arith.constant 7 : i32
    %102 = tpu.dynamic_rotate %93 by %c7_i32 dim 1 : vector<16x256xf32>, i32 -> vector<16x256xf32>
    %c2_59 = arith.constant 2 : index
    %c0_60 = arith.constant 0 : index
    %103 = vector.load %arg3[%c2_59, %c0_60] : memref<9x256xf32, #tpu.memory_space<vmem>>, vector<1x256xf32>
    %104 = vector.broadcast %103 : vector<1x256xf32> to vector<16x256xf32>
    %105 = arith.mulf %102, %104 : vector<16x256xf32>
    %c1_i32_61 = arith.constant 1 : i32
    %106 = tpu.dynamic_rotate %93 by %c1_i32_61 dim 1 : vector<16x256xf32>, i32 -> vector<16x256xf32>
    %c3_62 = arith.constant 3 : index
    %c0_63 = arith.constant 0 : index
    %107 = vector.load %arg3[%c3_62, %c0_63] : memref<9x256xf32, #tpu.memory_space<vmem>>, vector<1x256xf32>
    %108 = vector.broadcast %107 : vector<1x256xf32> to vector<16x256xf32>
    %109 = arith.mulf %106, %108 : vector<16x256xf32>
    %c255_i32 = arith.constant 255 : i32
    %110 = tpu.dynamic_rotate %93 by %c255_i32 dim 1 : vector<16x256xf32>, i32 -> vector<16x256xf32>
    %c5_64 = arith.constant 5 : index
    %c0_65 = arith.constant 0 : index
    %111 = vector.load %arg3[%c5_64, %c0_65] : memref<9x256xf32, #tpu.memory_space<vmem>>, vector<1x256xf32>
    %112 = vector.broadcast %111 : vector<1x256xf32> to vector<16x256xf32>
    %113 = arith.mulf %110, %112 : vector<16x256xf32>
    %c249_i32 = arith.constant 249 : i32
    %114 = tpu.dynamic_rotate %93 by %c249_i32 dim 1 : vector<16x256xf32>, i32 -> vector<16x256xf32>
    %c6_66 = arith.constant 6 : index
    %c0_67 = arith.constant 0 : index
    %115 = vector.load %arg3[%c6_66, %c0_67] : memref<9x256xf32, #tpu.memory_space<vmem>>, vector<1x256xf32>
    %116 = vector.broadcast %115 : vector<1x256xf32> to vector<16x256xf32>
    %117 = arith.mulf %114, %116 : vector<16x256xf32>
    %c248_i32 = arith.constant 248 : i32
    %118 = tpu.dynamic_rotate %93 by %c248_i32 dim 1 : vector<16x256xf32>, i32 -> vector<16x256xf32>
    %c7_68 = arith.constant 7 : index
    %c0_69 = arith.constant 0 : index
    %119 = vector.load %arg3[%c7_68, %c0_69] : memref<9x256xf32, #tpu.memory_space<vmem>>, vector<1x256xf32>
    %120 = vector.broadcast %119 : vector<1x256xf32> to vector<16x256xf32>
    %121 = arith.mulf %118, %120 : vector<16x256xf32>
    %c247_i32 = arith.constant 247 : i32
    %122 = tpu.dynamic_rotate %93 by %c247_i32 dim 1 : vector<16x256xf32>, i32 -> vector<16x256xf32>
    %c8_70 = arith.constant 8 : index
    %c0_71 = arith.constant 0 : index
    %123 = vector.load %arg3[%c8_70, %c0_71] : memref<9x256xf32, #tpu.memory_space<vmem>>, vector<1x256xf32>
    %124 = vector.broadcast %123 : vector<1x256xf32> to vector<16x256xf32>
    %125 = arith.mulf %122, %124 : vector<16x256xf32>
    %126 = tpu.concatenate %97, %101, %105, %109, %93, %113, %117, %121, %125 in 0 : vector<16x256xf32>, vector<16x256xf32>, vector<16x256xf32>, vector<16x256xf32>, vector<16x256xf32>, vector<16x256xf32>, vector<16x256xf32>, vector<16x256xf32>, vector<16x256xf32> -> vector<144x256xf32>
    %c0_72 = arith.constant 0 : index
    %c0_73 = arith.constant 0 : index
    %127 = vector.load %arg12[%c0_72, %c0_73] : memref<32x144xf32, #tpu.memory_space<vmem>>, vector<32x144xf32>
    %cst_74 = arith.constant dense<0.000000e+00> : vector<32x256xf32>
    %128 = tpu.matmul %127, %126, %cst_74 {dimension_numbers = #tpu.dot_dimension_numbers<[1], [0], [0], [1], [0, 0, 1, 1], [], []>} : vector<32x144xf32>, vector<144x256xf32>, vector<32x256xf32> -> vector<32x256xf32>
    %c0_75 = arith.constant 0 : index
    %c0_76 = arith.constant 0 : index
    %129 = vector.load %arg13[%c0_75, %c0_76] : memref<32x1xf32, #tpu.memory_space<vmem>>, vector<32x1xf32>
    %130 = vector.broadcast %129 : vector<32x1xf32> to vector<32x256xf32>
    %131 = arith.mulf %128, %130 : vector<32x256xf32>
    %c0_77 = arith.constant 0 : index
    %c0_78 = arith.constant 0 : index
    %132 = vector.load %arg14[%c0_77, %c0_78] : memref<32x1xf32, #tpu.memory_space<vmem>>, vector<32x1xf32>
    %133 = vector.broadcast %132 : vector<32x1xf32> to vector<32x256xf32>
    %134 = arith.addf %131, %133 : vector<32x256xf32>
    %cst_79 = arith.constant 0.000000e+00 : f32
    %135 = vector.broadcast %cst_79 : f32 to vector<32x256xf32>
    %136 = arith.maximumf %134, %135 : vector<32x256xf32>
    %c255_i32_80 = arith.constant 255 : i32
    %137 = tpu.dynamic_rotate %136 by %c255_i32_80 dim 1 : vector<32x256xf32>, i32 -> vector<32x256xf32>
    %138 = arith.maximumf %136, %137 : vector<32x256xf32>
    %c248_i32_81 = arith.constant 248 : i32
    %139 = tpu.dynamic_rotate %138 by %c248_i32_81 dim 1 : vector<32x256xf32>, i32 -> vector<32x256xf32>
    %140 = arith.maximumf %138, %139 : vector<32x256xf32>
    %c0_82 = arith.constant 0 : index
    %c0_83 = arith.constant 0 : index
    %141 = vector.load %arg5[%c0_82, %c0_83] : memref<256x4xf32, #tpu.memory_space<vmem>>, vector<256x4xf32>
    %cst_84 = arith.constant dense<0.000000e+00> : vector<32x4xf32>
    %142 = tpu.matmul %140, %141, %cst_84 {dimension_numbers = #tpu.dot_dimension_numbers<[1], [0], [0], [1], [0, 0, 1, 1], [], []>} : vector<32x256xf32>, vector<256x4xf32>, vector<32x4xf32> -> vector<32x4xf32>
    %c0_85 = arith.constant 0 : index
    %c0_86 = arith.constant 0 : index
    %143 = vector.load %arg15[%c0_85, %c0_86] : memref<64x32xf32, #tpu.memory_space<vmem>>, vector<64x32xf32>
    %cst_87 = arith.constant dense<0.000000e+00> : vector<64x4xf32>
    %144 = tpu.matmul %143, %142, %cst_87 {dimension_numbers = #tpu.dot_dimension_numbers<[1], [0], [0], [1], [0, 0, 1, 1], [], []>} : vector<64x32xf32>, vector<32x4xf32>, vector<64x4xf32> -> vector<64x4xf32>
    %c0_88 = arith.constant 0 : index
    %c0_89 = arith.constant 0 : index
    %145 = vector.load %arg16[%c0_88, %c0_89] : memref<64x1xf32, #tpu.memory_space<vmem>>, vector<64x1xf32>
    %146 = vector.broadcast %145 : vector<64x1xf32> to vector<64x4xf32>
    %147 = arith.addf %144, %146 : vector<64x4xf32>
    %cst_90 = arith.constant 0.000000e+00 : f32
    %148 = vector.broadcast %cst_90 : f32 to vector<64x4xf32>
    %149 = arith.maximumf %147, %148 : vector<64x4xf32>
    %c0_91 = arith.constant 0 : index
    %c0_92 = arith.constant 0 : index
    %150 = vector.load %arg17[%c0_91, %c0_92] : memref<10x64xf32, #tpu.memory_space<vmem>>, vector<10x64xf32>
    %cst_93 = arith.constant dense<0.000000e+00> : vector<10x4xf32>
    %151 = tpu.matmul %150, %149, %cst_93 {dimension_numbers = #tpu.dot_dimension_numbers<[1], [0], [0], [1], [0, 0, 1, 1], [], []>} : vector<10x64xf32>, vector<64x4xf32>, vector<10x4xf32> -> vector<10x4xf32>
    %c0_94 = arith.constant 0 : index
    %c0_95 = arith.constant 0 : index
    %152 = vector.load %arg18[%c0_94, %c0_95] : memref<10x1xf32, #tpu.memory_space<vmem>>, vector<10x1xf32>
    %153 = vector.broadcast %152 : vector<10x1xf32> to vector<10x4xf32>
    %154 = arith.addf %151, %153 : vector<10x4xf32>
    %c0_96 = arith.constant 0 : index
    %c0_97 = arith.constant 0 : index
    %c0_98 = arith.constant 0 : index
    %155 = vector.load %arg19[%c0_96, %c0_97, %c0_98] : memref<1x10x4xf32, #tpu.memory_space<vmem>>, vector<1x10x4xf32>
    %156 = vector.shape_cast %155 : vector<1x10x4xf32> to vector<10x4xf32>
    %157 = vector.shape_cast %154 : vector<10x4xf32> to vector<1x10x4xf32>
    tpu.vector_store %arg19[%c0_96, %c0_97, %c0_98], %157 {strides = array<i32>} : memref<1x10x4xf32, #tpu.memory_space<vmem>>, vector<1x10x4xf32>,
    return
  }
  func.func @transform_0(%arg0: i32) -> (i32, i32, i32) {
    %c0_i32 = arith.constant 0 : i32
    %c0_i32_0 = arith.constant 0 : i32
    %c0_i32_1 = arith.constant 0 : i32
    return %arg0, %c0_i32, %c0_i32_0 : i32, i32, i32
  }
  func.func @transform_1(%arg0: i32) -> (i32, i32) {
    %c0_i32 = arith.constant 0 : i32
    %c0_i32_0 = arith.constant 0 : i32
    %c0_i32_1 = arith.constant 0 : i32
    return %c0_i32, %c0_i32_0 : i32, i32
  }
  func.func @transform_2(%arg0: i32) -> (i32, i32) {
    %c0_i32 = arith.constant 0 : i32
    %c0_i32_0 = arith.constant 0 : i32
    %c0_i32_1 = arith.constant 0 : i32
    return %c0_i32, %c0_i32_0 : i32, i32
  }
  func.func @transform_3(%arg0: i32) -> (i32, i32) {
    %c0_i32 = arith.constant 0 : i32
    %c0_i32_0 = arith.constant 0 : i32
    %c0_i32_1 = arith.constant 0 : i32
    return %c0_i32, %c0_i32_0 : i32, i32
  }
  func.func @transform_4(%arg0: i32) -> (i32, i32) {
    %c0_i32 = arith.constant 0 : i32
    %c0_i32_0 = arith.constant 0 : i32
    %c0_i32_1 = arith.constant 0 : i32
    return %c0_i32, %c0_i32_0 : i32, i32
  }
  func.func @transform_5(%arg0: i32) -> (i32, i32) {
    %c0_i32 = arith.constant 0 : i32
    %c0_i32_0 = arith.constant 0 : i32
    %c0_i32_1 = arith.constant 0 : i32
    return %c0_i32, %c0_i32_0 : i32, i32
  }
  func.func @transform_6(%arg0: i32) -> (i32, i32) {
    %c0_i32 = arith.constant 0 : i32
    %c0_i32_0 = arith.constant 0 : i32
    %c0_i32_1 = arith.constant 0 : i32
    return %c0_i32, %c0_i32_0 : i32, i32
  }
  func.func @transform_7(%arg0: i32) -> (i32, i32) {
    %c0_i32 = arith.constant 0 : i32
    %c0_i32_0 = arith.constant 0 : i32
    %c0_i32_1 = arith.constant 0 : i32
    return %c0_i32, %c0_i32_0 : i32, i32
  }
  func.func @transform_8(%arg0: i32) -> (i32, i32) {
    %c0_i32 = arith.constant 0 : i32
    %c0_i32_0 = arith.constant 0 : i32
    %c0_i32_1 = arith.constant 0 : i32
    return %c0_i32, %c0_i32_0 : i32, i32
  }
  func.func @transform_9(%arg0: i32) -> (i32, i32) {
    %c0_i32 = arith.constant 0 : i32
    %c0_i32_0 = arith.constant 0 : i32
    %c0_i32_1 = arith.constant 0 : i32
    return %c0_i32, %c0_i32_0 : i32, i32
  }
  func.func @transform_10(%arg0: i32) -> (i32, i32) {
    %c0_i32 = arith.constant 0 : i32
    %c0_i32_0 = arith.constant 0 : i32
    %c0_i32_1 = arith.constant 0 : i32
    return %c0_i32, %c0_i32_0 : i32, i32
  }
  func.func @transform_11(%arg0: i32) -> (i32, i32) {
    %c0_i32 = arith.constant 0 : i32
    %c0_i32_0 = arith.constant 0 : i32
    %c0_i32_1 = arith.constant 0 : i32
    return %c0_i32, %c0_i32_0 : i32, i32
  }
  func.func @transform_12(%arg0: i32) -> (i32, i32) {
    %c0_i32 = arith.constant 0 : i32
    %c0_i32_0 = arith.constant 0 : i32
    %c0_i32_1 = arith.constant 0 : i32
    return %c0_i32, %c0_i32_0 : i32, i32
  }
  func.func @transform_13(%arg0: i32) -> (i32, i32) {
    %c0_i32 = arith.constant 0 : i32
    %c0_i32_0 = arith.constant 0 : i32
    %c0_i32_1 = arith.constant 0 : i32
    return %c0_i32, %c0_i32_0 : i32, i32
  }
  func.func @transform_14(%arg0: i32) -> (i32, i32) {
    %c0_i32 = arith.constant 0 : i32
    %c0_i32_0 = arith.constant 0 : i32
    %c0_i32_1 = arith.constant 0 : i32
    return %c0_i32, %c0_i32_0 : i32, i32
  }
  func.func @transform_15(%arg0: i32) -> (i32, i32) {
    %c0_i32 = arith.constant 0 : i32
    %c0_i32_0 = arith.constant 0 : i32
    %c0_i32_1 = arith.constant 0 : i32
    return %c0_i32, %c0_i32_0 : i32, i32
  }
  func.func @transform_16(%arg0: i32) -> (i32, i32) {
    %c0_i32 = arith.constant 0 : i32
    %c0_i32_0 = arith.constant 0 : i32
    %c0_i32_1 = arith.constant 0 : i32
    return %c0_i32, %c0_i32_0 : i32, i32
  }
  func.func @transform_17(%arg0: i32) -> (i32, i32) {
    %c0_i32 = arith.constant 0 : i32
    %c0_i32_0 = arith.constant 0 : i32
    %c0_i32_1 = arith.constant 0 : i32
    return %c0_i32, %c0_i32_0 : i32, i32
  }
  func.func @transform_18(%arg0: i32) -> (i32, i32, i32) {
    %c0_i32 = arith.constant 0 : i32
    %c0_i32_0 = arith.constant 0 : i32
    %c0_i32_1 = arith.constant 0 : i32
    return %arg0, %c0_i32, %c0_i32_0 : i32, i32, i32
  }
}

</mosaic_0001>

<llo_original>
// kernel: proxy_vgg2_forward.1
$region0: #{proxy_vgg2_forward.1}
  #allocation0 [shape = 'u32[]', space=smem, size = 0x4, offset = 0x4, fixed_abs, tag = 'smem constant byte address 0x4 - core index']
  #allocation1 [shape = 'u32[144,128]{1,0:T(1,128)}', space=vmem, size = 0x12000, scoped, tag = 'internal scratch']
  %s0 = inlined_call_operand.vmem [shape: f32[2,8,1024], index: 0, kind: input, shape index: {}]
  %s1 = inlined_call_operand.vmem [shape: f32[9,1024], index: 1, kind: input, shape index: {}]
  %s2 = inlined_call_operand.vmem [shape: f32[9,256], index: 2, kind: input, shape index: {}]
  %s3 = inlined_call_operand.hbm [shape: f32[1024,256], index: 3, kind: input, shape index: {}]
  %s4 = inlined_call_operand.vmem [shape: f32[256,4], index: 4, kind: input, shape index: {}]
  %s5 = inlined_call_operand.vmem [shape: f32[8,72], index: 5, kind: input, shape index: {}]
  %s6 = inlined_call_operand.vmem [shape: f32[8,1], index: 6, kind: input, shape index: {}]
  %s7 = inlined_call_operand.vmem [shape: f32[8,1], index: 7, kind: input, shape index: {}]
  %s8 = inlined_call_operand.vmem [shape: f32[16,72], index: 8, kind: input, shape index: {}]
  %s9 = inlined_call_operand.vmem [shape: f32[16,1], index: 9, kind: input, shape index: {}]
  %s10 = inlined_call_operand.vmem [shape: f32[16,1], index: 10, kind: input, shape index: {}]
  %s11 = inlined_call_operand.vmem [shape: f32[32,144], index: 11, kind: input, shape index: {}]
  %s12 = inlined_call_operand.vmem [shape: f32[32,1], index: 12, kind: input, shape index: {}]
  %s13 = inlined_call_operand.vmem [shape: f32[32,1], index: 13, kind: input, shape index: {}]
  %s14 = inlined_call_operand.vmem [shape: f32[64,32], index: 14, kind: input, shape index: {}]
  %s15 = inlined_call_operand.vmem [shape: f32[64,1], index: 15, kind: input, shape index: {}]
  %s16 = inlined_call_operand.vmem [shape: f32[10,64], index: 16, kind: input, shape index: {}]
  %s17 = inlined_call_operand.vmem [shape: f32[10,1], index: 17, kind: input, shape index: {}]
  %s18 = inlined_call_operand.vmem [shape: f32[2,10,4], index: 18, kind: output, shape index: {}]
  %s19 = sld [smem:[#allocation0]]
  $region109: #{proxy_vgg2_forward.1} parent=0
    _
  %s21 = ssub.s32 1, %s19
  %s22 = scalar_select 0, %s21, %s19
  $region1: #{proxy_vgg2_forward.1} parent=0
    #allocation2 [shape = 'u8[1048576]{0}', space=vmem, size = 0x100000, scoped, tag = 'input window, operand 3, single buffered']
    #allocation3 [shape = 's32[2]{0}', space=sflag, size = 0x8, scoped, tag = 'scoped memory for proxy_vgg2_forward.1']
    %23 = vsyncpa [#allocation3], 0
    loop: start=0, step=1, limit=4
    $region2: #{proxy_vgg2_forward.1} parent=1 // loop_pre_header
      _
    $region3: #{proxy_vgg2_forward.1} parent=1 // loop_header
      %s25 = sphi 0, %s29
      %p26 = scmp.ge.s32.totalorder %s25, 4
      %s35 = sphi 0, %s37
      %s38 = sphi 0, %s35
      %s39 = sphi 0, %s38
      %s55 = sphi 0, %s39
      %s59 = sphi 0, %s59
      %s61 = sphi 0, %s59
      %s62 = sphi 0, %s61
      %s76 = sphi 0, %s62
      %s80 = sphi 0, %s80
      %s82 = sphi 0, %s80
      %s83 = sphi 0, %s82
      %s97 = sphi 0, %s83
      %s101 = sphi 0, %s101
      %s103 = sphi 0, %s101
      %s104 = sphi 0, %s103
      %s118 = sphi 0, %s104
      %s122 = sphi 0, %s122
      %s124 = sphi 0, %s122
      %s125 = sphi 0, %s124
      %s139 = sphi 0, %s125
      %s143 = sphi 0, %s143
      %s145 = sphi 0, %s143
      %s146 = sphi 0, %s145
      %s160 = sphi 0, %s146
      %s164 = sphi 0, %s164
      %s166 = sphi 0, %s164
      %s167 = sphi 0, %s166
      %s181 = sphi 0, %s167
      %s185 = sphi 0, %s185
      %s187 = sphi 0, %s185
      %s188 = sphi 0, %s187
      %s202 = sphi 0, %s188
      %s206 = sphi 0, %s206
      %s208 = sphi 0, %s206
      %s209 = sphi 0, %s208
      %s223 = sphi 0, %s209
      %s227 = sphi 0, %s227
      %s229 = sphi 0, %s227
      %s230 = sphi 0, %s229
      %s244 = sphi 0, %s230
      %s248 = sphi 0, %s248
      %s250 = sphi 0, %s248
      %s251 = sphi 0, %s250
      %s265 = sphi 0, %s251
      %s269 = sphi 0, %s269
      %s271 = sphi 0, %s269
      %s272 = sphi 0, %s271
      %s286 = sphi 0, %s272
      %s290 = sphi 0, %s290
      %s292 = sphi 0, %s290
      %s293 = sphi 0, %s292
      %s307 = sphi 0, %s293
      %s311 = sphi 0, %s311
      %s313 = sphi 0, %s311
      %s314 = sphi 0, %s313
      %s328 = sphi 0, %s314
      %s332 = sphi 0, %s332
      %s334 = sphi 0, %s332
      %s335 = sphi 0, %s334
      %s349 = sphi 0, %s335
      %s353 = sphi 0, %s353
      %s355 = sphi 0, %s353
      %s356 = sphi 0, %s355
      %s370 = sphi 0, %s356
      %s374 = sphi 0, %s374
      %s376 = sphi 0, %s374
      %s377 = sphi 0, %s376
      %s391 = sphi 0, %s377
      %s395 = sphi 0, %s395
      %s397 = sphi 0, %s395
      %s398 = sphi 0, %s397
      %s412 = sphi 0, %s398
      %s418 = sphi 0, %s420
      %s421 = sphi 0, %s418
      %s422 = sphi 0, %s421
      %s438 = sphi 0, %s422
    $region4: #{proxy_vgg2_forward.1} parent=1 // loop_header_branch
      %28 = sbr.rel (%p26) target = $region8
    $region5: #{proxy_vgg2_forward.1} parent=1 // loop_body
      %s30 = ssub.s32 %s25, 1
      %s31 = ssub.s32 %s25, 2
      %s32 = sadd.s32 %s25, 1
      %s33 = ssub.s32 %s25, %s32
      %p34 = scmp.eq.s32.totalorder %s33, 0
      %s36 = sadd.s32 %s35, 1
      %s37 = scalar_select %p34, %s35, %s36
      %p40 = pneg %p34
      %p41 = scmp.eq.s32.totalorder %s25, 1
      %p42 = por %p40, %p41
      %p43 = scmp.ne.s32.totalorder %s35, %s38
      %p44 = scmp.eq.s32.totalorder %s25, 0
      %p45 = por %p43, %p44
      %p46 = scmp.ne.s32.totalorder %s35, %s38
      %p47 = scmp.eq.s32.totalorder %s30, 1
      %p48 = por %p46, %p47
      %p49 = scmp.ne.s32.totalorder %s38, %s39
      %p50 = scmp.eq.s32.totalorder %s30, 0
      %p51 = por %p49, %p50
      %p52 = scmp.ne.s32.totalorder %s38, %s39
      %p53 = scmp.eq.s32.totalorder %s31, 1
      %p54 = por %p52, %p53
      %p56 = scmp.ne.s32.totalorder %s39, %s55
      %p57 = scmp.eq.s32.totalorder %s31, 0
      %p58 = por %p56, %p57
      %s60 = sadd.s32 %s59, 1
      %p63 = scmp.eq.s32.totalorder %s25, 1
      %p64 = scmp.ne.s32.totalorder %s59, %s61
      %p65 = scmp.eq.s32.totalorder %s25, 0
      %p66 = por %p64, %p65
      %p67 = scmp.ne.s32.totalorder %s59, %s61
      %p68 = scmp.eq.s32.totalorder %s30, 1
      %p69 = por %p67, %p68
      %p70 = scmp.ne.s32.totalorder %s61, %s62
      %p71 = scmp.eq.s32.totalorder %s30, 0
      %p72 = por %p70, %p71
      %p73 = scmp.ne.s32.totalorder %s61, %s62
      %p74 = scmp.eq.s32.totalorder %s31, 1
      %p75 = por %p73, %p74
      %p77 = scmp.ne.s32.totalorder %s62, %s76
      %p78 = scmp.eq.s32.totalorder %s31, 0
      %p79 = por %p77, %p78
      %s81 = sadd.s32 %s80, 1
      %p84 = scmp.eq.s32.totalorder %s25, 1
      %p85 = scmp.ne.s32.totalorder %s80, %s82
      %p86 = scmp.eq.s32.totalorder %s25, 0
      %p87 = por %p85, %p86
      %p88 = scmp.ne.s32.totalorder %s80, %s82
      %p89 = scmp.eq.s32.totalorder %s30, 1
      %p90 = por %p88, %p89
      %p91 = scmp.ne.s32.totalorder %s82, %s83
      %p92 = scmp.eq.s32.totalorder %s30, 0
      %p93 = por %p91, %p92
      %p94 = scmp.ne.s32.totalorder %s82, %s83
      %p95 = scmp.eq.s32.totalorder %s31, 1
      %p96 = por %p94, %p95
      %p98 = scmp.ne.s32.totalorder %s83, %s97
      %p99 = scmp.eq.s32.totalorder %s31, 0
      %p100 = por %p98, %p99
      %s102 = sadd.s32 %s101, 1
      %p105 = scmp.eq.s32.totalorder %s25, 1
      %p106 = scmp.ne.s32.totalorder %s101, %s103
      %p107 = scmp.eq.s32.totalorder %s25, 0
      %p108 = por %p106, %p107
      %p109 = scmp.ne.s32.totalorder %s101, %s103
      %p110 = scmp.eq.s32.totalorder %s30, 1
      %p111 = por %p109, %p110
      %p112 = scmp.ne.s32.totalorder %s103, %s104
      %p113 = scmp.eq.s32.totalorder %s30, 0
      %p114 = por %p112, %p113
      %p115 = scmp.ne.s32.totalorder %s103, %s104
      %p116 = scmp.eq.s32.totalorder %s31, 1
      %p117 = por %p115, %p116
      %p119 = scmp.ne.s32.totalorder %s104, %s118
      %p120 = scmp.eq.s32.totalorder %s31, 0
      %p121 = por %p119, %p120
      %s123 = sadd.s32 %s122, 1
      %p126 = scmp.eq.s32.totalorder %s25, 1
      %p127 = scmp.ne.s32.totalorder %s122, %s124
      %p128 = scmp.eq.s32.totalorder %s25, 0
      %p129 = por %p127, %p128
      %p130 = scmp.ne.s32.totalorder %s122, %s124
      %p131 = scmp.eq.s32.totalorder %s30, 1
      %p132 = por %p130, %p131
      %p133 = scmp.ne.s32.totalorder %s124, %s125
      %p134 = scmp.eq.s32.totalorder %s30, 0
      %p135 = por %p133, %p134
      %p136 = scmp.ne.s32.totalorder %s124, %s125
      %p137 = scmp.eq.s32.totalorder %s31, 1
      %p138 = por %p136, %p137
      %p140 = scmp.ne.s32.totalorder %s125, %s139
      %p141 = scmp.eq.s32.totalorder %s31, 0
      %p142 = por %p140, %p141
      %s144 = sadd.s32 %s143, 1
      %p147 = scmp.eq.s32.totalorder %s25, 1
      %p148 = scmp.ne.s32.totalorder %s143, %s145
      %p149 = scmp.eq.s32.totalorder %s25, 0
      %p150 = por %p148, %p149
      %p151 = scmp.ne.s32.totalorder %s143, %s145
      %p152 = scmp.eq.s32.totalorder %s30, 1
      %p153 = por %p151, %p152
      %p154 = scmp.ne.s32.totalorder %s145, %s146
      %p155 = scmp.eq.s32.totalorder %s30, 0
      %p156 = por %p154, %p155
      %p157 = scmp.ne.s32.totalorder %s145, %s146
      %p158 = scmp.eq.s32.totalorder %s31, 1
      %p159 = por %p157, %p158
      %p161 = scmp.ne.s32.totalorder %s146, %s160
      %p162 = scmp.eq.s32.totalorder %s31, 0
      %p163 = por %p161, %p162
      %s165 = sadd.s32 %s164, 1
      %p168 = scmp.eq.s32.totalorder %s25, 1
      %p169 = scmp.ne.s32.totalorder %s164, %s166
      %p170 = scmp.eq.s32.totalorder %s25, 0
      %p171 = por %p169, %p170
      %p172 = scmp.ne.s32.totalorder %s164, %s166
      %p173 = scmp.eq.s32.totalorder %s30, 1
      %p174 = por %p172, %p173
      %p175 = scmp.ne.s32.totalorder %s166, %s167
      %p176 = scmp.eq.s32.totalorder %s30, 0
      %p177 = por %p175, %p176
      %p178 = scmp.ne.s32.totalorder %s166, %s167
      %p179 = scmp.eq.s32.totalorder %s31, 1
      %p180 = por %p178, %p179
      %p182 = scmp.ne.s32.totalorder %s167, %s181
      %p183 = scmp.eq.s32.totalorder %s31, 0
      %p184 = por %p182, %p183
      %s186 = sadd.s32 %s185, 1
      %p189 = scmp.eq.s32.totalorder %s25, 1
      %p190 = scmp.ne.s32.totalorder %s185, %s187
      %p191 = scmp.eq.s32.totalorder %s25, 0
      %p192 = por %p190, %p191
      %p193 = scmp.ne.s32.totalorder %s185, %s187
      %p194 = scmp.eq.s32.totalorder %s30, 1
      %p195 = por %p193, %p194
      %p196 = scmp.ne.s32.totalorder %s187, %s188
      %p197 = scmp.eq.s32.totalorder %s30, 0
      %p198 = por %p196, %p197
      %p199 = scmp.ne.s32.totalorder %s187, %s188
      %p200 = scmp.eq.s32.totalorder %s31, 1
      %p201 = por %p199, %p200
      %p203 = scmp.ne.s32.totalorder %s188, %s202
      %p204 = scmp.eq.s32.totalorder %s31, 0
      %p205 = por %p203, %p204
      %s207 = sadd.s32 %s206, 1
      %p210 = scmp.eq.s32.totalorder %s25, 1
      %p211 = scmp.ne.s32.totalorder %s206, %s208
      %p212 = scmp.eq.s32.totalorder %s25, 0
      %p213 = por %p211, %p212
      %p214 = scmp.ne.s32.totalorder %s206, %s208
      %p215 = scmp.eq.s32.totalorder %s30, 1
      %p216 = por %p214, %p215
      %p217 = scmp.ne.s32.totalorder %s208, %s209
      %p218 = scmp.eq.s32.totalorder %s30, 0
      %p219 = por %p217, %p218
      %p220 = scmp.ne.s32.totalorder %s208, %s209
      %p221 = scmp.eq.s32.totalorder %s31, 1
      %p222 = por %p220, %p221
      %p224 = scmp.ne.s32.totalorder %s209, %s223
      %p225 = scmp.eq.s32.totalorder %s31, 0
      %p226 = por %p224, %p225
      %s228 = sadd.s32 %s227, 1
      %p231 = scmp.eq.s32.totalorder %s25, 1
      %p232 = scmp.ne.s32.totalorder %s227, %s229
      %p233 = scmp.eq.s32.totalorder %s25, 0
      %p234 = por %p232, %p233
      %p235 = scmp.ne.s32.totalorder %s227, %s229
      %p236 = scmp.eq.s32.totalorder %s30, 1
      %p237 = por %p235, %p236
      %p238 = scmp.ne.s32.totalorder %s229, %s230
      %p239 = scmp.eq.s32.totalorder %s30, 0
      %p240 = por %p238, %p239
      %p241 = scmp.ne.s32.totalorder %s229, %s230
      %p242 = scmp.eq.s32.totalorder %s31, 1
      %p243 = por %p241, %p242
      %p245 = scmp.ne.s32.totalorder %s230, %s244
      %p246 = scmp.eq.s32.totalorder %s31, 0
      %p247 = por %p245, %p246
      %s249 = sadd.s32 %s248, 1
      %p252 = scmp.eq.s32.totalorder %s25, 1
      %p253 = scmp.ne.s32.totalorder %s248, %s250
      %p254 = scmp.eq.s32.totalorder %s25, 0
      %p255 = por %p253, %p254
      %p256 = scmp.ne.s32.totalorder %s248, %s250
      %p257 = scmp.eq.s32.totalorder %s30, 1
      %p258 = por %p256, %p257
      %p259 = scmp.ne.s32.totalorder %s250, %s251
      %p260 = scmp.eq.s32.totalorder %s30, 0
      %p261 = por %p259, %p260
      %p262 = scmp.ne.s32.totalorder %s250, %s251
      %p263 = scmp.eq.s32.totalorder %s31, 1
      %p264 = por %p262, %p263
      %p266 = scmp.ne.s32.totalorder %s251, %s265
      %p267 = scmp.eq.s32.totalorder %s31, 0
      %p268 = por %p266, %p267
      %s270 = sadd.s32 %s269, 1
      %p273 = scmp.eq.s32.totalorder %s25, 1
      %p274 = scmp.ne.s32.totalorder %s269, %s271
      %p275 = scmp.eq.s32.totalorder %s25, 0
      %p276 = por %p274, %p275
      %p277 = scmp.ne.s32.totalorder %s269, %s271
      %p278 = scmp.eq.s32.totalorder %s30, 1
      %p279 = por %p277, %p278
      %p280 = scmp.ne.s32.totalorder %s271, %s272
      %p281 = scmp.eq.s32.totalorder %s30, 0
      %p282 = por %p280, %p281
      %p283 = scmp.ne.s32.totalorder %s271, %s272
      %p284 = scmp.eq.s32.totalorder %s31, 1
      %p285 = por %p283, %p284
      %p287 = scmp.ne.s32.totalorder %s272, %s286
      %p288 = scmp.eq.s32.totalorder %s31, 0
      %p289 = por %p287, %p288
      %s291 = sadd.s32 %s290, 1
      %p294 = scmp.eq.s32.totalorder %s25, 1
      %p295 = scmp.ne.s32.totalorder %s290, %s292
      %p296 = scmp.eq.s32.totalorder %s25, 0
      %p297 = por %p295, %p296
      %p298 = scmp.ne.s32.totalorder %s290, %s292
      %p299 = scmp.eq.s32.totalorder %s30, 1
      %p300 = por %p298, %p299
      %p301 = scmp.ne.s32.totalorder %s292, %s293
      %p302 = scmp.eq.s32.totalorder %s30, 0
      %p303 = por %p301, %p302
      %p304 = scmp.ne.s32.totalorder %s292, %s293
      %p305 = scmp.eq.s32.totalorder %s31, 1
      %p306 = por %p304, %p305
      %p308 = scmp.ne.s32.totalorder %s293, %s307
      %p309 = scmp.eq.s32.totalorder %s31, 0
      %p310 = por %p308, %p309
      %s312 = sadd.s32 %s311, 1
      %p315 = scmp.eq.s32.totalorder %s25, 1
      %p316 = scmp.ne.s32.totalorder %s311, %s313
      %p317 = scmp.eq.s32.totalorder %s25, 0
      %p318 = por %p316, %p317
      %p319 = scmp.ne.s32.totalorder %s311, %s313
      %p320 = scmp.eq.s32.totalorder %s30, 1
      %p321 = por %p319, %p320
      %p322 = scmp.ne.s32.totalorder %s313, %s314
      %p323 = scmp.eq.s32.totalorder %s30, 0
      %p324 = por %p322, %p323
      %p325 = scmp.ne.s32.totalorder %s313, %s314
      %p326 = scmp.eq.s32.totalorder %s31, 1
      %p327 = por %p325, %p326
      %p329 = scmp.ne.s32.totalorder %s314, %s328
      %p330 = scmp.eq.s32.totalorder %s31, 0
      %p331 = por %p329, %p330
      %s333 = sadd.s32 %s332, 1
      %p336 = scmp.eq.s32.totalorder %s25, 1
      %p337 = scmp.ne.s32.totalorder %s332, %s334
      %p338 = scmp.eq.s32.totalorder %s25, 0
      %p339 = por %p337, %p338
      %p340 = scmp.ne.s32.totalorder %s332, %s334
      %p341 = scmp.eq.s32.totalorder %s30, 1
      %p342 = por %p340, %p341
      %p343 = scmp.ne.s32.totalorder %s334, %s335
      %p344 = scmp.eq.s32.totalorder %s30, 0
      %p345 = por %p343, %p344
      %p346 = scmp.ne.s32.totalorder %s334, %s335
      %p347 = scmp.eq.s32.totalorder %s31, 1
      %p348 = por %p346, %p347
      %p350 = scmp.ne.s32.totalorder %s335, %s349
      %p351 = scmp.eq.s32.totalorder %s31, 0
      %p352 = por %p350, %p351
      %s354 = sadd.s32 %s353, 1
      %p357 = scmp.eq.s32.totalorder %s25, 1
      %p358 = scmp.ne.s32.totalorder %s353, %s355
      %p359 = scmp.eq.s32.totalorder %s25, 0
      %p360 = por %p358, %p359
      %p361 = scmp.ne.s32.totalorder %s353, %s355
      %p362 = scmp.eq.s32.totalorder %s30, 1
      %p363 = por %p361, %p362
      %p364 = scmp.ne.s32.totalorder %s355, %s356
      %p365 = scmp.eq.s32.totalorder %s30, 0
      %p366 = por %p364, %p365
      %p367 = scmp.ne.s32.totalorder %s355, %s356
      %p368 = scmp.eq.s32.totalorder %s31, 1
      %p369 = por %p367, %p368
      %p371 = scmp.ne.s32.totalorder %s356, %s370
      %p372 = scmp.eq.s32.totalorder %s31, 0
      %p373 = por %p371, %p372
      %s375 = sadd.s32 %s374, 1
      %p378 = scmp.eq.s32.totalorder %s25, 1
      %p379 = scmp.ne.s32.totalorder %s374, %s376
      %p380 = scmp.eq.s32.totalorder %s25, 0
      %p381 = por %p379, %p380
      %p382 = scmp.ne.s32.totalorder %s374, %s376
      %p383 = scmp.eq.s32.totalorder %s30, 1
      %p384 = por %p382, %p383
      %p385 = scmp.ne.s32.totalorder %s376, %s377
      %p386 = scmp.eq.s32.totalorder %s30, 0
      %p387 = por %p385, %p386
      %p388 = scmp.ne.s32.totalorder %s376, %s377
      %p389 = scmp.eq.s32.totalorder %s31, 1
      %p390 = por %p388, %p389
      %p392 = scmp.ne.s32.totalorder %s377, %s391
      %p393 = scmp.eq.s32.totalorder %s31, 0
      %p394 = por %p392, %p393
      %s396 = sadd.s32 %s395, 1
      %p399 = scmp.eq.s32.totalorder %s25, 1
      %p400 = scmp.ne.s32.totalorder %s395, %s397
      %p401 = scmp.eq.s32.totalorder %s25, 0
      %p402 = por %p400, %p401
      %p403 = scmp.ne.s32.totalorder %s395, %s397
      %p404 = scmp.eq.s32.totalorder %s30, 1
      %p405 = por %p403, %p404
      %p406 = scmp.ne.s32.totalorder %s397, %s398
      %p407 = scmp.eq.s32.totalorder %s30, 0
      %p408 = por %p406, %p407
      %p409 = scmp.ne.s32.totalorder %s397, %s398
      %p410 = scmp.eq.s32.totalorder %s31, 1
      %p411 = por %p409, %p410
      %p413 = scmp.ne.s32.totalorder %s398, %s412
      %p414 = scmp.eq.s32.totalorder %s31, 0
      %p415 = por %p413, %p414
      %s416 = ssub.s32 %s25, %s32
      %p417 = scmp.eq.s32.totalorder %s416, 0
      %s419 = sadd.s32 %s418, 1
      %s420 = scalar_select %p417, %s418, %s419
      %p423 = pneg %p417
      %p424 = scmp.eq.s32.totalorder %s25, 1
      %p425 = por %p423, %p424
      %p426 = scmp.ne.s32.totalorder %s418, %s421
      %p427 = scmp.eq.s32.totalorder %s25, 0
      %p428 = por %p426, %p427
      %p429 = scmp.ne.s32.totalorder %s418, %s421
      %p430 = scmp.eq.s32.totalorder %s30, 1
      %p431 = por %p429, %p430
      %p432 = scmp.ne.s32.totalorder %s421, %s422
      %p433 = scmp.eq.s32.totalorder %s30, 0
      %p434 = por %p432, %p433
      %p435 = scmp.ne.s32.totalorder %s421, %s422
      %p436 = scmp.eq.s32.totalorder %s31, 1
      %p437 = por %p435, %p436
      %p439 = scmp.ne.s32.totalorder %s422, %s438
      %p440 = scmp.eq.s32.totalorder %s31, 0
      %p441 = por %p439, %p440
      %p442 = scmp.le.s32.totalorder 1, %s25
      %p443 = scmp.lt.s32.totalorder %s25, 3
      %p444 = pnand %p442, %p443
      %p445 = pneg %p444
      // Predicated region
      $region9: #{proxy_vgg2_forward.1} parent=5 // pred_check
        _
      $region10: #{proxy_vgg2_forward.1} parent=5 // pred_check_branch
        %447 = sbr.rel (%p444) target = $region12
      $region11: #{proxy_vgg2_forward.1} parent=5 // pred_region
        %s448 = ssub.s32 %s25, 1
        // Predicated region
        $region13: #{proxy_vgg2_forward.1} parent=11 // pred_check
          %p449 = pneg %p72
        $region14: #{proxy_vgg2_forward.1} parent=11 // pred_check_branch
          %451 = sbr.rel (%p449) target = $region16
        $region15: #{proxy_vgg2_forward.1} parent=11 // pred_region
          _
        $region16: #{proxy_vgg2_forward.1} parent=11 // pred_fallthru
          _
        // Predicated region
        $region17: #{proxy_vgg2_forward.1} parent=11 // pred_check
          %p452 = pneg %p93
        $region18: #{proxy_vgg2_forward.1} parent=11 // pred_check_branch
          %454 = sbr.rel (%p452) target = $region20
        $region19: #{proxy_vgg2_forward.1} parent=11 // pred_region
          _
        $region20: #{proxy_vgg2_forward.1} parent=11 // pred_fallthru
          _
        // Predicated region
        $region21: #{proxy_vgg2_forward.1} parent=11 // pred_check
          %p455 = pneg %p114
        $region22: #{proxy_vgg2_forward.1} parent=11 // pred_check_branch
          %457 = sbr.rel (%p455) target = $region24
        $region23: #{proxy_vgg2_forward.1} parent=11 // pred_region
          %s459 = ssub.s32 32768, 32768
          %460 = vsyncadd [#allocation3], %s459
          %s461 = sshll.u32 [#allocation2], 4
          %s462 = int_to_ptr.vmem [resolvable:$true] %s461
          %467 = dma.hbm_to_vmem [thread:$0]  %s3, 32768, %s462, [#allocation3], 256, 256, 16
        $region24: #{proxy_vgg2_forward.1} parent=11 // pred_fallthru
          _
        // Predicated region
        $region25: #{proxy_vgg2_forward.1} parent=11 // pred_check
          %p468 = pneg %p135
        $region26: #{proxy_vgg2_forward.1} parent=11 // pred_check_branch
          %470 = sbr.rel (%p468) target = $region28
        $region27: #{proxy_vgg2_forward.1} parent=11 // pred_region
          _
        $region28: #{proxy_vgg2_forward.1} parent=11 // pred_fallthru
          _
        // Predicated region
        $region29: #{proxy_vgg2_forward.1} parent=11 // pred_check
          %p471 = pneg %p156
        $region30: #{proxy_vgg2_forward.1} parent=11 // pred_check_branch
          %473 = sbr.rel (%p471) target = $region32
        $region31: #{proxy_vgg2_forward.1} parent=11 // pred_region
          _
        $region32: #{proxy_vgg2_forward.1} parent=11 // pred_fallthru
          _
        // Predicated region
        $region33: #{proxy_vgg2_forward.1} parent=11 // pred_check
          %p474 = pneg %p177
        $region34: #{proxy_vgg2_forward.1} parent=11 // pred_check_branch
          %476 = sbr.rel (%p474) target = $region36
        $region35: #{proxy_vgg2_forward.1} parent=11 // pred_region
          _
        $region36: #{proxy_vgg2_forward.1} parent=11 // pred_fallthru
          _
        // Predicated region
        $region37: #{proxy_vgg2_forward.1} parent=11 // pred_check
          %p477 = pneg %p198
        $region38: #{proxy_vgg2_forward.1} parent=11 // pred_check_branch
          %479 = sbr.rel (%p477) target = $region40
        $region39: #{proxy_vgg2_forward.1} parent=11 // pred_region
          _
        $region40: #{proxy_vgg2_forward.1} parent=11 // pred_fallthru
          _
        // Predicated region
        $region41: #{proxy_vgg2_forward.1} parent=11 // pred_check
          %p480 = pneg %p219
        $region42: #{proxy_vgg2_forward.1} parent=11 // pred_check_branch
          %482 = sbr.rel (%p480) target = $region44
        $region43: #{proxy_vgg2_forward.1} parent=11 // pred_region
          _
        $region44: #{proxy_vgg2_forward.1} parent=11 // pred_fallthru
          _
        // Predicated region
        $region45: #{proxy_vgg2_forward.1} parent=11 // pred_check
          %p483 = pneg %p240
        $region46: #{proxy_vgg2_forward.1} parent=11 // pred_check_branch
          %485 = sbr.rel (%p483) target = $region48
        $region47: #{proxy_vgg2_forward.1} parent=11 // pred_region
          _
        $region48: #{proxy_vgg2_forward.1} parent=11 // pred_fallthru
          _
        // Predicated region
        $region49: #{proxy_vgg2_forward.1} parent=11 // pred_check
          %p486 = pneg %p261
        $region50: #{proxy_vgg2_forward.1} parent=11 // pred_check_branch
          %488 = sbr.rel (%p486) target = $region52
        $region51: #{proxy_vgg2_forward.1} parent=11 // pred_region
          _
        $region52: #{proxy_vgg2_forward.1} parent=11 // pred_fallthru
          _
        // Predicated region
        $region53: #{proxy_vgg2_forward.1} parent=11 // pred_check
          %p489 = pneg %p282
        $region54: #{proxy_vgg2_forward.1} parent=11 // pred_check_branch
          %491 = sbr.rel (%p489) target = $region56
        $region55: #{proxy_vgg2_forward.1} parent=11 // pred_region
          _
        $region56: #{proxy_vgg2_forward.1} parent=11 // pred_fallthru
          _
        // Predicated region
        $region57: #{proxy_vgg2_forward.1} parent=11 // pred_check
          %p492 = pneg %p303
        $region58: #{proxy_vgg2_forward.1} parent=11 // pred_check_branch
          %494 = sbr.rel (%p492) target = $region60
        $region59: #{proxy_vgg2_forward.1} parent=11 // pred_region
          _
        $region60: #{proxy_vgg2_forward.1} parent=11 // pred_fallthru
          _
        // Predicated region
        $region61: #{proxy_vgg2_forward.1} parent=11 // pred_check
          %p495 = pneg %p324
        $region62: #{proxy_vgg2_forward.1} parent=11 // pred_check_branch
          %497 = sbr.rel (%p495) target = $region64
        $region63: #{proxy_vgg2_forward.1} parent=11 // pred_region
          _
        $region64: #{proxy_vgg2_forward.1} parent=11 // pred_fallthru
          _
        // Predicated region
        $region65: #{proxy_vgg2_forward.1} parent=11 // pred_check
          %p498 = pneg %p345
        $region66: #{proxy_vgg2_forward.1} parent=11 // pred_check_branch
          %500 = sbr.rel (%p498) target = $region68
        $region67: #{proxy_vgg2_forward.1} parent=11 // pred_region
          _
        $region68: #{proxy_vgg2_forward.1} parent=11 // pred_fallthru
          _
        // Predicated region
        $region69: #{proxy_vgg2_forward.1} parent=11 // pred_check
          %p501 = pneg %p366
        $region70: #{proxy_vgg2_forward.1} parent=11 // pred_check_branch
          %503 = sbr.rel (%p501) target = $region72
        $region71: #{proxy_vgg2_forward.1} parent=11 // pred_region
          _
        $region72: #{proxy_vgg2_forward.1} parent=11 // pred_fallthru
          _
        // Predicated region
        $region73: #{proxy_vgg2_forward.1} parent=11 // pred_check
          %p504 = pneg %p387
        $region74: #{proxy_vgg2_forward.1} parent=11 // pred_check_branch
          %506 = sbr.rel (%p504) target = $region76
        $region75: #{proxy_vgg2_forward.1} parent=11 // pred_region
          _
        $region76: #{proxy_vgg2_forward.1} parent=11 // pred_fallthru
          _
        // Predicated region
        $region77: #{proxy_vgg2_forward.1} parent=11 // pred_check
          %p507 = pneg %p408
        $region78: #{proxy_vgg2_forward.1} parent=11 // pred_check_branch
          %509 = sbr.rel (%p507) target = $region80
        $region79: #{proxy_vgg2_forward.1} parent=11 // pred_region
          _
        $region80: #{proxy_vgg2_forward.1} parent=11 // pred_fallthru
          _
      $region12: #{proxy_vgg2_forward.1} parent=5 // pred_fallthru
        _
      %p510 = scmp.lt.s32.totalorder %s25, 2
      // Predicated region
      $region81: #{proxy_vgg2_forward.1} parent=5 // pred_check
        %p511 = pneg %p510
      $region82: #{proxy_vgg2_forward.1} parent=5 // pred_check_branch
        %513 = sbr.rel (%p511) target = $region84
      $region83: #{proxy_vgg2_forward.1} parent=5 // pred_region
        // Predicated region
        $region85: #{proxy_vgg2_forward.1} parent=83 // pred_check
          %p514 = pneg %p45
        $region86: #{proxy_vgg2_forward.1} parent=83 // pred_check_branch
          %516 = sbr.rel (%p514) target = $region88
        $region87: #{proxy_vgg2_forward.1} parent=83 // pred_region
          %p517 = scmp.lt.s32.totalorder %s25, 1
          %s518 = scalar_select %p517, %s25, 1
          %s519 = smul.addr %s518, 8
          %s520 = smul.addr %s519, 8
          %s521 = scalar_lea.vmem %s0, %s520
        $region88: #{proxy_vgg2_forward.1} parent=83 // pred_fallthru
          _
      $region84: #{proxy_vgg2_forward.1} parent=5 // pred_fallthru
        _
      %p522 = scmp.le.s32.totalorder 1, %s25
      %p523 = scmp.lt.s32.totalorder %s25, 3
      %p524 = pnand %p522, %p523
      %p525 = pneg %p524
      // Predicated region
      $region89: #{proxy_vgg2_forward.1} parent=5 // pred_check
        _
      $region90: #{proxy_vgg2_forward.1} parent=5 // pred_check_branch
        %527 = sbr.rel (%p524) target = $region92
      $region91: #{proxy_vgg2_forward.1} parent=5 // pred_region
        %s528 = ssub.s32 %s25, 1
        // Predicated region
        $region93: #{proxy_vgg2_forward.1} parent=91 // pred_check
          %p529 = pneg %p114
        $region94: #{proxy_vgg2_forward.1} parent=91 // pred_check_branch
          %531 = sbr.rel (%p529) target = $region96
        $region95: #{proxy_vgg2_forward.1} parent=91 // pred_region
          %532 = dma.done [#allocation3], 32768
        $region96: #{proxy_vgg2_forward.1} parent=91 // pred_fallthru
          _
        %p533 = scmp.lt.s32.totalorder %s30, 1
        %s534 = scalar_select %p533, %s30, 1
        %s535 = smul.addr %s534, 8
        %s536 = smul.addr %s535, 8
        %s537 = scalar_lea.vmem %s0, %s536
        %p538 = pneg %p51
        %p539 = pneg %p48
        %p540 = pneg %p72
        %p541 = pneg %p69
        %p542 = pneg %p93
        %p543 = pneg %p90
        %p544 = pneg %p114
        %p545 = pneg %p111
        %p546 = pneg %p135
        %p547 = pneg %p132
        %p548 = pneg %p156
        %p549 = pneg %p153
        %p550 = pneg %p177
        %p551 = pneg %p174
        %p552 = pneg %p198
        %p553 = pneg %p195
        %p554 = pneg %p219
        %p555 = pneg %p216
        %p556 = pneg %p240
        %p557 = pneg %p237
        %p558 = pneg %p261
        %p559 = pneg %p258
        %p560 = pneg %p282
        %p561 = pneg %p279
        %p562 = pneg %p303
        %p563 = pneg %p300
        %p564 = pneg %p324
        %p565 = pneg %p321
        %p566 = pneg %p345
        %p567 = pneg %p342
        %p568 = pneg %p366
        %p569 = pneg %p363
        %p570 = pneg %p387
        %p571 = pneg %p384
        %p572 = pneg %p408
        %p573 = pneg %p405
        %p574 = pneg %p434
        %p575 = pneg %p431
        %p576 = scmp.lt.s32.totalorder %s30, 1
        %s577 = scalar_select %p576, %s30, 1
        %s578 = smul.addr %s577, 2
        %s579 = smul.addr %s578, 8
        %s580 = scalar_lea.vmem %s18, %s579
        %p581 = scmp.lt.s32.totalorder %s30, 1
        %s582 = scalar_select %p581, %s30, 1
        %s583 = smul.addr %s582, 8
        %s584 = smul.addr %s583, 8
        %s585 = scalar_lea.vmem %s0, %s584
        %p586 = scmp.lt.s32.totalorder %s30, 1
        %s587 = scalar_select %p586, %s30, 1
        %s588 = smul.addr %s587, 2
        %s589 = smul.addr %s588, 8
        %s590 = scalar_lea.vmem %s18, %s589
        %v591 = vld [vmem:[%s585] sm:$0xff]
        %v592 = vld [vmem:[%s585 + $0x8] sm:$0xff]
        %v593 = vld [vmem:[%s585 + $0x10] sm:$0xff]
        %v594 = vld [vmem:[%s585 + $0x18] sm:$0xff]
        %v595 = vld [vmem:[%s585 + $0x20] sm:$0xff]
        %v596 = vld [vmem:[%s585 + $0x28] sm:$0xff]
        %v597 = vld [vmem:[%s585 + $0x30] sm:$0xff]
        %v598 = vld [vmem:[%s585 + $0x38] sm:$0xff]
        %599 = vrot.lane.b32.xlu0 %v591, 17
        %v600 = vpop.permute.xlu0 %599
        %601 = vrot.lane.b32.xlu0 %v592, 17
        %v602 = vpop.permute.xlu0 %601
        %603 = vrot.lane.b32.xlu0 %v593, 17
        %v604 = vpop.permute.xlu0 %603
        %605 = vrot.lane.b32.xlu0 %v594, 17
        %v606 = vpop.permute.xlu0 %605
        %607 = vrot.lane.b32.xlu0 %v595, 17
        %v608 = vpop.permute.xlu0 %607
        %609 = vrot.lane.b32.xlu0 %v596, 17
        %v610 = vpop.permute.xlu0 %609
        %611 = vrot.lane.b32.xlu0 %v597, 17
        %v612 = vpop.permute.xlu0 %611
        %613 = vrot.lane.b32.xlu0 %v598, 17
        %v614 = vpop.permute.xlu0 %613
        %v615 = vlaneseq
        %v616 = vand.u32 %v615, 127
        %vm617 = vcmp.lt.s32.totalorder %v616, 17
        %v618 = vsel %vm617, %v612, %v614
        %v619 = vsel %vm617, %v610, %v612
        %v620 = vsel %vm617, %v608, %v610
        %v621 = vsel %vm617, %v606, %v608
        %v622 = vsel %vm617, %v604, %v606
        %v623 = vsel %vm617, %v602, %v604
        %v624 = vsel %vm617, %v600, %v602
        %v625 = vsel %vm617, %v614, %v600
        %v626 = vld [vmem:[%s1] ss:$8 sm:$0xf]
        %v627 = vld [vmem:[%s1] ss:$8 sm:$0xf0]
        %v628 = vor.u32 %v626, %v627
        %v630 = vlaneseq
        %v631 = vshrl.u32 %v630, 7
        %v632 = vsub.s32 0, %v631
        %v633 = vrot.slane %v628, %v632
        %v634 = vlaneseq
        %v635 = vshrl.u32 %v634, 7
        %v636 = vsub.s32 1, %v635
        %v637 = vrot.slane %v628, %v636
        %v638 = vlaneseq
        %v639 = vshrl.u32 %v638, 7
        %v640 = vsub.s32 2, %v639
        %v641 = vrot.slane %v628, %v640
        %v642 = vlaneseq
        %v643 = vshrl.u32 %v642, 7
        %v644 = vsub.s32 3, %v643
        %v645 = vrot.slane %v628, %v644
        %v646 = vlaneseq
        %v647 = vshrl.u32 %v646, 7
        %v648 = vsub.s32 4, %v647
        %v649 = vrot.slane %v628, %v648
        %v650 = vlaneseq
        %v651 = vshrl.u32 %v650, 7
        %v652 = vsub.s32 5, %v651
        %v653 = vrot.slane %v628, %v652
        %v654 = vlaneseq
        %v655 = vshrl.u32 %v654, 7
        %v656 = vsub.s32 6, %v655
        %v657 = vrot.slane %v628, %v656
        %v658 = vlaneseq
        %v659 = vshrl.u32 %v658, 7
        %v660 = vsub.s32 7, %v659
        %v661 = vrot.slane %v628, %v660
        %v670 = vmul.f32 %v625, %v633
        %v671 = vmul.f32 %v624, %v637
        %v672 = vmul.f32 %v623, %v641
        %v673 = vmul.f32 %v622, %v645
        %v674 = vmul.f32 %v621, %v649
        %v675 = vmul.f32 %v620, %v653
        %v676 = vmul.f32 %v619, %v657
        %v677 = vmul.f32 %v618, %v661
        %678 = vrot.lane.b32.xlu0 %v591, 16
        %v679 = vpop.permute.xlu0 %678
        %680 = vrot.lane.b32.xlu0 %v592, 16
        %v681 = vpop.permute.xlu0 %680
        %682 = vrot.lane.b32.xlu0 %v593, 16
        %v683 = vpop.permute.xlu0 %682
        %684 = vrot.lane.b32.xlu0 %v594, 16
        %v685 = vpop.permute.xlu0 %684
        %686 = vrot.lane.b32.xlu0 %v595, 16
        %v687 = vpop.permute.xlu0 %686
        %688 = vrot.lane.b32.xlu0 %v596, 16
        %v689 = vpop.permute.xlu0 %688
        %690 = vrot.lane.b32.xlu0 %v597, 16
        %v691 = vpop.permute.xlu0 %690
        %692 = vrot.lane.b32.xlu0 %v598, 16
        %v693 = vpop.permute.xlu0 %692
        %vm694 = vcmp.lt.s32.totalorder %v616, 16
        %v695 = vsel %vm694, %v691, %v693
        %v696 = vsel %vm694, %v689, %v691
        %v697 = vsel %vm694, %v687, %v689
        %v698 = vsel %vm694, %v685, %v687
        %v699 = vsel %vm694, %v683, %v685
        %v700 = vsel %vm694, %v681, %v683
        %v701 = vsel %vm694, %v679, %v681
        %v702 = vsel %vm694, %v693, %v679
        %s703 = scalar_lea.vmem %s1, 1
        %v704 = vld [vmem:[%s703] ss:$8 sm:$0xf]
        %v705 = vld [vmem:[%s703] ss:$8 sm:$0xf0]
        %v706 = vor.u32 %v704, %v705
        %v708 = vlaneseq
        %v709 = vshrl.u32 %v708, 7
        %v710 = vsub.s32 0, %v709
        %v711 = vrot.slane %v706, %v710
        %v712 = vlaneseq
        %v713 = vshrl.u32 %v712, 7
        %v714 = vsub.s32 1, %v713
        %v715 = vrot.slane %v706, %v714
        %v716 = vlaneseq
        %v717 = vshrl.u32 %v716, 7
        %v718 = vsub.s32 2, %v717
        %v719 = vrot.slane %v706, %v718
        %v720 = vlaneseq
        %v721 = vshrl.u32 %v720, 7
        %v722 = vsub.s32 3, %v721
        %v723 = vrot.slane %v706, %v722
        %v724 = vlaneseq
        %v725 = vshrl.u32 %v724, 7
        %v726 = vsub.s32 4, %v725
        %v727 = vrot.slane %v706, %v726
        %v728 = vlaneseq
        %v729 = vshrl.u32 %v728, 7
        %v730 = vsub.s32 5, %v729
        %v731 = vrot.slane %v706, %v730
        %v732 = vlaneseq
        %v733 = vshrl.u32 %v732, 7
        %v734 = vsub.s32 6, %v733
        %v735 = vrot.slane %v706, %v734
        %v736 = vlaneseq
        %v737 = vshrl.u32 %v736, 7
        %v738 = vsub.s32 7, %v737
        %v739 = vrot.slane %v706, %v738
        %v748 = vmul.f32 %v702, %v711
        %v749 = vmul.f32 %v701, %v715
        %v750 = vmul.f32 %v700, %v719
        %v751 = vmul.f32 %v699, %v723
        %v752 = vmul.f32 %v698, %v727
        %v753 = vmul.f32 %v697, %v731
        %v754 = vmul.f32 %v696, %v735
        %v755 = vmul.f32 %v695, %v739
        %756 = vrot.lane.b32.xlu0 %v591, 15
        %v757 = vpop.permute.xlu0 %756
        %758 = vrot.lane.b32.xlu0 %v592, 15
        %v759 = vpop.permute.xlu0 %758
        %760 = vrot.lane.b32.xlu0 %v593, 15
        %v761 = vpop.permute.xlu0 %760
        %762 = vrot.lane.b32.xlu0 %v594, 15
        %v763 = vpop.permute.xlu0 %762
        %764 = vrot.lane.b32.xlu0 %v595, 15
        %v765 = vpop.permute.xlu0 %764
        %766 = vrot.lane.b32.xlu0 %v596, 15
        %v767 = vpop.permute.xlu0 %766
        %768 = vrot.lane.b32.xlu0 %v597, 15
        %v769 = vpop.permute.xlu0 %768
        %770 = vrot.lane.b32.xlu0 %v598, 15
        %v771 = vpop.permute.xlu0 %770
        %vm772 = vcmp.lt.s32.totalorder %v616, 15
        %v773 = vsel %vm772, %v769, %v771
        %v774 = vsel %vm772, %v767, %v769
        %v775 = vsel %vm772, %v765, %v767
        %v776 = vsel %vm772, %v763, %v765
        %v777 = vsel %vm772, %v761, %v763
        %v778 = vsel %vm772, %v759, %v761
        %v779 = vsel %vm772, %v757, %v759
        %v780 = vsel %vm772, %v771, %v757
        %s781 = scalar_lea.vmem %s1, 2
        %v782 = vld [vmem:[%s781] ss:$8 sm:$0xf]
        %v783 = vld [vmem:[%s781] ss:$8 sm:$0xf0]
        %v784 = vor.u32 %v782, %v783
        %v786 = vlaneseq
        %v787 = vshrl.u32 %v786, 7
        %v788 = vsub.s32 0, %v787
        %v789 = vrot.slane %v784, %v788
        %v790 = vlaneseq
        %v791 = vshrl.u32 %v790, 7
        %v792 = vsub.s32 1, %v791
        %v793 = vrot.slane %v784, %v792
        %v794 = vlaneseq
        %v795 = vshrl.u32 %v794, 7
        %v796 = vsub.s32 2, %v795
        %v797 = vrot.slane %v784, %v796
        %v798 = vlaneseq
        %v799 = vshrl.u32 %v798, 7
        %v800 = vsub.s32 3, %v799
        %v801 = vrot.slane %v784, %v800
        %v802 = vlaneseq
        %v803 = vshrl.u32 %v802, 7
        %v804 = vsub.s32 4, %v803
        %v805 = vrot.slane %v784, %v804
        %v806 = vlaneseq
        %v807 = vshrl.u32 %v806, 7
        %v808 = vsub.s32 5, %v807
        %v809 = vrot.slane %v784, %v808
        %v810 = vlaneseq
        %v811 = vshrl.u32 %v810, 7
        %v812 = vsub.s32 6, %v811
        %v813 = vrot.slane %v784, %v812
        %v814 = vlaneseq
        %v815 = vshrl.u32 %v814, 7
        %v816 = vsub.s32 7, %v815
        %v817 = vrot.slane %v784, %v816
        %v826 = vmul.f32 %v780, %v789
        %v827 = vmul.f32 %v779, %v793
        %v828 = vmul.f32 %v778, %v797
        %v829 = vmul.f32 %v777, %v801
        %v830 = vmul.f32 %v776, %v805
        %v831 = vmul.f32 %v775, %v809
        %v832 = vmul.f32 %v774, %v813
        %v833 = vmul.f32 %v773, %v817
        %834 = vrot.lane.b32.xlu0 %v591, 1
        %v835 = vpop.permute.xlu0 %834
        %836 = vrot.lane.b32.xlu0 %v592, 1
        %v837 = vpop.permute.xlu0 %836
        %838 = vrot.lane.b32.xlu0 %v593, 1
        %v839 = vpop.permute.xlu0 %838
        %840 = vrot.lane.b32.xlu0 %v594, 1
        %v841 = vpop.permute.xlu0 %840
        %842 = vrot.lane.b32.xlu0 %v595, 1
        %v843 = vpop.permute.xlu0 %842
        %844 = vrot.lane.b32.xlu0 %v596, 1
        %v845 = vpop.permute.xlu0 %844
        %846 = vrot.lane.b32.xlu0 %v597, 1
        %v847 = vpop.permute.xlu0 %846
        %848 = vrot.lane.b32.xlu0 %v598, 1
        %v849 = vpop.permute.xlu0 %848
        %vm850 = vcmp.lt.s32.totalorder %v616, 1
        %v851 = vsel %vm850, %v847, %v849
        %v852 = vsel %vm850, %v845, %v847
        %v853 = vsel %vm850, %v843, %v845
        %v854 = vsel %vm850, %v841, %v843
        %v855 = vsel %vm850, %v839, %v841
        %v856 = vsel %vm850, %v837, %v839
        %v857 = vsel %vm850, %v835, %v837
        %v858 = vsel %vm850, %v849, %v835
        %s859 = scalar_lea.vmem %s1, 3
        %v860 = vld [vmem:[%s859] ss:$8 sm:$0xf]
        %v861 = vld [vmem:[%s859] ss:$8 sm:$0xf0]
        %v862 = vor.u32 %v860, %v861
        %v864 = vlaneseq
        %v865 = vshrl.u32 %v864, 7
        %v866 = vsub.s32 0, %v865
        %v867 = vrot.slane %v862, %v866
        %v868 = vlaneseq
        %v869 = vshrl.u32 %v868, 7
        %v870 = vsub.s32 1, %v869
        %v871 = vrot.slane %v862, %v870
        %v872 = vlaneseq
        %v873 = vshrl.u32 %v872, 7
        %v874 = vsub.s32 2, %v873
        %v875 = vrot.slane %v862, %v874
        %v876 = vlaneseq
        %v877 = vshrl.u32 %v876, 7
        %v878 = vsub.s32 3, %v877
        %v879 = vrot.slane %v862, %v878
        %v880 = vlaneseq
        %v881 = vshrl.u32 %v880, 7
        %v882 = vsub.s32 4, %v881
        %v883 = vrot.slane %v862, %v882
        %v884 = vlaneseq
        %v885 = vshrl.u32 %v884, 7
        %v886 = vsub.s32 5, %v885
        %v887 = vrot.slane %v862, %v886
        %v888 = vlaneseq
        %v889 = vshrl.u32 %v888, 7
        %v890 = vsub.s32 6, %v889
        %v891 = vrot.slane %v862, %v890
        %v892 = vlaneseq
        %v893 = vshrl.u32 %v892, 7
        %v894 = vsub.s32 7, %v893
        %v895 = vrot.slane %v862, %v894
        %v904 = vmul.f32 %v858, %v867
        %v905 = vmul.f32 %v857, %v871
        %v906 = vmul.f32 %v856, %v875
        %v907 = vmul.f32 %v855, %v879
        %v908 = vmul.f32 %v854, %v883
        %v909 = vmul.f32 %v853, %v887
        %v910 = vmul.f32 %v852, %v891
        %v911 = vmul.f32 %v851, %v895
        %912 = vrot.lane.b32.xlu0 %v591, 127
        %v913 = vpop.permute.xlu0 %912
        %914 = vrot.lane.b32.xlu0 %v592, 127
        %v915 = vpop.permute.xlu0 %914
        %916 = vrot.lane.b32.xlu0 %v593, 127
        %v917 = vpop.permute.xlu0 %916
        %918 = vrot.lane.b32.xlu0 %v594, 127
        %v919 = vpop.permute.xlu0 %918
        %920 = vrot.lane.b32.xlu0 %v595, 127
        %v921 = vpop.permute.xlu0 %920
        %922 = vrot.lane.b32.xlu0 %v596, 127
        %v923 = vpop.permute.xlu0 %922
        %924 = vrot.lane.b32.xlu0 %v597, 127
        %v925 = vpop.permute.xlu0 %924
        %926 = vrot.lane.b32.xlu0 %v598, 127
        %v927 = vpop.permute.xlu0 %926
        %vm928 = vcmp.lt.s32.totalorder %v616, 127
        %v929 = vsel %vm928, %v925, %v927
        %v930 = vsel %vm928, %v923, %v925
        %v931 = vsel %vm928, %v921, %v923
        %v932 = vsel %vm928, %v919, %v921
        %v933 = vsel %vm928, %v917, %v919
        %v934 = vsel %vm928, %v915, %v917
        %v935 = vsel %vm928, %v913, %v915
        %v936 = vsel %vm928, %v927, %v913
        %s937 = scalar_lea.vmem %s1, 5
        %v938 = vld [vmem:[%s937] ss:$8 sm:$0xf]
        %v939 = vld [vmem:[%s937] ss:$8 sm:$0xf0]
        %v940 = vor.u32 %v938, %v939
        %v942 = vlaneseq
        %v943 = vshrl.u32 %v942, 7
        %v944 = vsub.s32 0, %v943
        %v945 = vrot.slane %v940, %v944
        %v946 = vlaneseq
        %v947 = vshrl.u32 %v946, 7
        %v948 = vsub.s32 1, %v947
        %v949 = vrot.slane %v940, %v948
        %v950 = vlaneseq
        %v951 = vshrl.u32 %v950, 7
        %v952 = vsub.s32 2, %v951
        %v953 = vrot.slane %v940, %v952
        %v954 = vlaneseq
        %v955 = vshrl.u32 %v954, 7
        %v956 = vsub.s32 3, %v955
        %v957 = vrot.slane %v940, %v956
        %v958 = vlaneseq
        %v959 = vshrl.u32 %v958, 7
        %v960 = vsub.s32 4, %v959
        %v961 = vrot.slane %v940, %v960
        %v962 = vlaneseq
        %v963 = vshrl.u32 %v962, 7
        %v964 = vsub.s32 5, %v963
        %v965 = vrot.slane %v940, %v964
        %v966 = vlaneseq
        %v967 = vshrl.u32 %v966, 7
        %v968 = vsub.s32 6, %v967
        %v969 = vrot.slane %v940, %v968
        %v970 = vlaneseq
        %v971 = vshrl.u32 %v970, 7
        %v972 = vsub.s32 7, %v971
        %v973 = vrot.slane %v940, %v972
        %v982 = vmul.f32 %v935, %v945
        %v983 = vmul.f32 %v934, %v949
        %v984 = vmul.f32 %v933, %v953
        %v985 = vmul.f32 %v932, %v957
        %v986 = vmul.f32 %v931, %v961
        %v987 = vmul.f32 %v930, %v965
        %v988 = vmul.f32 %v929, %v969
        %v989 = vmul.f32 %v936, %v973
        %990 = vrot.lane.b32.xlu0 %v591, 113
        %v991 = vpop.permute.xlu0 %990
        %992 = vrot.lane.b32.xlu0 %v592, 113
        %v993 = vpop.permute.xlu0 %992
        %994 = vrot.lane.b32.xlu0 %v593, 113
        %v995 = vpop.permute.xlu0 %994
        %996 = vrot.lane.b32.xlu0 %v594, 113
        %v997 = vpop.permute.xlu0 %996
        %998 = vrot.lane.b32.xlu0 %v595, 113
        %v999 = vpop.permute.xlu0 %998
        %1000 = vrot.lane.b32.xlu0 %v596, 113
        %v1001 = vpop.permute.xlu0 %1000
        %1002 = vrot.lane.b32.xlu0 %v597, 113
        %v1003 = vpop.permute.xlu0 %1002
        %1004 = vrot.lane.b32.xlu0 %v598, 113
        %v1005 = vpop.permute.xlu0 %1004
        %vm1006 = vcmp.lt.s32.totalorder %v616, 113
        %v1007 = vsel %vm1006, %v1003, %v1005
        %v1008 = vsel %vm1006, %v1001, %v1003
        %v1009 = vsel %vm1006, %v999, %v1001
        %v1010 = vsel %vm1006, %v997, %v999
        %v1011 = vsel %vm1006, %v995, %v997
        %v1012 = vsel %vm1006, %v993, %v995
        %v1013 = vsel %vm1006, %v991, %v993
        %v1014 = vsel %vm1006, %v1005, %v991
        %s1015 = scalar_lea.vmem %s1, 6
        %v1016 = vld [vmem:[%s1015] ss:$8 sm:$0xf]
        %v1017 = vld [vmem:[%s1015] ss:$8 sm:$0xf0]
        %v1018 = vor.u32 %v1016, %v1017
        %v1020 = vlaneseq
        %v1021 = vshrl.u32 %v1020, 7
        %v1022 = vsub.s32 0, %v1021
        %v1023 = vrot.slane %v1018, %v1022
        %v1024 = vlaneseq
        %v1025 = vshrl.u32 %v1024, 7
        %v1026 = vsub.s32 1, %v1025
        %v1027 = vrot.slane %v1018, %v1026
        %v1028 = vlaneseq
        %v1029 = vshrl.u32 %v1028, 7
        %v1030 = vsub.s32 2, %v1029
        %v1031 = vrot.slane %v1018, %v1030
        %v1032 = vlaneseq
        %v1033 = vshrl.u32 %v1032, 7
        %v1034 = vsub.s32 3, %v1033
        %v1035 = vrot.slane %v1018, %v1034
        %v1036 = vlaneseq
        %v1037 = vshrl.u32 %v1036, 7
        %v1038 = vsub.s32 4, %v1037
        %v1039 = vrot.slane %v1018, %v1038
        %v1040 = vlaneseq
        %v1041 = vshrl.u32 %v1040, 7
        %v1042 = vsub.s32 5, %v1041
        %v1043 = vrot.slane %v1018, %v1042
        %v1044 = vlaneseq
        %v1045 = vshrl.u32 %v1044, 7
        %v1046 = vsub.s32 6, %v1045
        %v1047 = vrot.slane %v1018, %v1046
        %v1048 = vlaneseq
        %v1049 = vshrl.u32 %v1048, 7
        %v1050 = vsub.s32 7, %v1049
        %v1051 = vrot.slane %v1018, %v1050
        %v1060 = vmul.f32 %v1013, %v1023
        %v1061 = vmul.f32 %v1012, %v1027
        %v1062 = vmul.f32 %v1011, %v1031
        %v1063 = vmul.f32 %v1010, %v1035
        %v1064 = vmul.f32 %v1009, %v1039
        %v1065 = vmul.f32 %v1008, %v1043
        %v1066 = vmul.f32 %v1007, %v1047
        %v1067 = vmul.f32 %v1014, %v1051
        %1068 = vrot.lane.b32.xlu0 %v591, 112
        %v1069 = vpop.permute.xlu0 %1068
        %1070 = vrot.lane.b32.xlu0 %v592, 112
        %v1071 = vpop.permute.xlu0 %1070
        %1072 = vrot.lane.b32.xlu0 %v593, 112
        %v1073 = vpop.permute.xlu0 %1072
        %1074 = vrot.lane.b32.xlu0 %v594, 112
        %v1075 = vpop.permute.xlu0 %1074
        %1076 = vrot.lane.b32.xlu0 %v595, 112
        %v1077 = vpop.permute.xlu0 %1076
        %1078 = vrot.lane.b32.xlu0 %v596, 112
        %v1079 = vpop.permute.xlu0 %1078
        %1080 = vrot.lane.b32.xlu0 %v597, 112
        %v1081 = vpop.permute.xlu0 %1080
        %1082 = vrot.lane.b32.xlu0 %v598, 112
        %v1083 = vpop.permute.xlu0 %1082
        %vm1084 = vcmp.lt.s32.totalorder %v616, 112
        %v1085 = vsel %vm1084, %v1081, %v1083
        %v1086 = vsel %vm1084, %v1079, %v1081
        %v1087 = vsel %vm1084, %v1077, %v1079
        %v1088 = vsel %vm1084, %v1075, %v1077
        %v1089 = vsel %vm1084, %v1073, %v1075
        %v1090 = vsel %vm1084, %v1071, %v1073
        %v1091 = vsel %vm1084, %v1069, %v1071
        %v1092 = vsel %vm1084, %v1083, %v1069
        %s1093 = scalar_lea.vmem %s1, 7
        %v1094 = vld [vmem:[%s1093] ss:$8 sm:$0xf]
        %v1095 = vld [vmem:[%s1093] ss:$8 sm:$0xf0]
        %v1096 = vor.u32 %v1094, %v1095
        %v1098 = vlaneseq
        %v1099 = vshrl.u32 %v1098, 7
        %v1100 = vsub.s32 0, %v1099
        %v1101 = vrot.slane %v1096, %v1100
        %v1102 = vlaneseq
        %v1103 = vshrl.u32 %v1102, 7
        %v1104 = vsub.s32 1, %v1103
        %v1105 = vrot.slane %v1096, %v1104
        %v1106 = vlaneseq
        %v1107 = vshrl.u32 %v1106, 7
        %v1108 = vsub.s32 2, %v1107
        %v1109 = vrot.slane %v1096, %v1108
        %v1110 = vlaneseq
        %v1111 = vshrl.u32 %v1110, 7
        %v1112 = vsub.s32 3, %v1111
        %v1113 = vrot.slane %v1096, %v1112
        %v1114 = vlaneseq
        %v1115 = vshrl.u32 %v1114, 7
        %v1116 = vsub.s32 4, %v1115
        %v1117 = vrot.slane %v1096, %v1116
        %v1118 = vlaneseq
        %v1119 = vshrl.u32 %v1118, 7
        %v1120 = vsub.s32 5, %v1119
        %v1121 = vrot.slane %v1096, %v1120
        %v1122 = vlaneseq
        %v1123 = vshrl.u32 %v1122, 7
        %v1124 = vsub.s32 6, %v1123
        %v1125 = vrot.slane %v1096, %v1124
        %v1126 = vlaneseq
        %v1127 = vshrl.u32 %v1126, 7
        %v1128 = vsub.s32 7, %v1127
        %v1129 = vrot.slane %v1096, %v1128
        %v1138 = vmul.f32 %v1091, %v1101
        %v1139 = vmul.f32 %v1090, %v1105
        %v1140 = vmul.f32 %v1089, %v1109
        %v1141 = vmul.f32 %v1088, %v1113
        %v1142 = vmul.f32 %v1087, %v1117
        %v1143 = vmul.f32 %v1086, %v1121
        %v1144 = vmul.f32 %v1085, %v1125
        %v1145 = vmul.f32 %v1092, %v1129
        %1146 = vrot.lane.b32.xlu0 %v591, 111
        %v1147 = vpop.permute.xlu0 %1146
        %1148 = vrot.lane.b32.xlu0 %v592, 111
        %v1149 = vpop.permute.xlu0 %1148
        %1150 = vrot.lane.b32.xlu0 %v593, 111
        %v1151 = vpop.permute.xlu0 %1150
        %1152 = vrot.lane.b32.xlu0 %v594, 111
        %v1153 = vpop.permute.xlu0 %1152
        %1154 = vrot.lane.b32.xlu0 %v595, 111
        %v1155 = vpop.permute.xlu0 %1154
        %1156 = vrot.lane.b32.xlu0 %v596, 111
        %v1157 = vpop.permute.xlu0 %1156
        %1158 = vrot.lane.b32.xlu0 %v597, 111
        %v1159 = vpop.permute.xlu0 %1158
        %1160 = vrot.lane.b32.xlu0 %v598, 111
        %v1161 = vpop.permute.xlu0 %1160
        %vm1162 = vcmp.lt.s32.totalorder %v616, 111
        %v1163 = vsel %vm1162, %v1159, %v1161
        %v1164 = vsel %vm1162, %v1157, %v1159
        %v1165 = vsel %vm1162, %v1155, %v1157
        %v1166 = vsel %vm1162, %v1153, %v1155
        %v1167 = vsel %vm1162, %v1151, %v1153
        %v1168 = vsel %vm1162, %v1149, %v1151
        %v1169 = vsel %vm1162, %v1147, %v1149
        %v1170 = vsel %vm1162, %v1161, %v1147
        %s1171 = scalar_lea.vmem %s1, 64
        %v1172 = vld [vmem:[%s1171] ss:$8 sm:$0xf]
        %v1173 = vld [vmem:[%s1171] ss:$8 sm:$0xf0]
        %v1174 = vor.u32 %v1172, %v1173
        %v1176 = vlaneseq
        %v1177 = vshrl.u32 %v1176, 7
        %v1178 = vsub.s32 0, %v1177
        %v1179 = vrot.slane %v1174, %v1178
        %v1180 = vlaneseq
        %v1181 = vshrl.u32 %v1180, 7
        %v1182 = vsub.s32 1, %v1181
        %v1183 = vrot.slane %v1174, %v1182
        %v1184 = vlaneseq
        %v1185 = vshrl.u32 %v1184, 7
        %v1186 = vsub.s32 2, %v1185
        %v1187 = vrot.slane %v1174, %v1186
        %v1188 = vlaneseq
        %v1189 = vshrl.u32 %v1188, 7
        %v1190 = vsub.s32 3, %v1189
        %v1191 = vrot.slane %v1174, %v1190
        %v1192 = vlaneseq
        %v1193 = vshrl.u32 %v1192, 7
        %v1194 = vsub.s32 4, %v1193
        %v1195 = vrot.slane %v1174, %v1194
        %v1196 = vlaneseq
        %v1197 = vshrl.u32 %v1196, 7
        %v1198 = vsub.s32 5, %v1197
        %v1199 = vrot.slane %v1174, %v1198
        %v1200 = vlaneseq
        %v1201 = vshrl.u32 %v1200, 7
        %v1202 = vsub.s32 6, %v1201
        %v1203 = vrot.slane %v1174, %v1202
        %v1204 = vlaneseq
        %v1205 = vshrl.u32 %v1204, 7
        %v1206 = vsub.s32 7, %v1205
        %v1207 = vrot.slane %v1174, %v1206
        %v1216 = vmul.f32 %v1169, %v1179
        %v1217 = vmul.f32 %v1168, %v1183
        %v1218 = vmul.f32 %v1167, %v1187
        %v1219 = vmul.f32 %v1166, %v1191
        %v1220 = vmul.f32 %v1165, %v1195
        %v1221 = vmul.f32 %v1164, %v1199
        %v1222 = vmul.f32 %v1163, %v1203
        %v1223 = vmul.f32 %v1170, %v1207
        %v1224 = vld [vmem:[%s5] sm:$0xff]
        %vm1225 = vcmask 588800
        %v1227 = vsel %vm1225, %v1224, 0
        %1229 = vmatprep.subr.mxu0 %v671
        %1230 = vmatpush1.msra.mxu0 %v670
        %1231 = vmatprep.subr.mxu0 %v749
        %1232 = vmatpush1.msra.mxu0 %v748
        %1233 = vmatprep.subr.mxu0 %v827
        %1234 = vmatpush1.msra.mxu0 %v826
        %1235 = vmatprep.subr.mxu0 %v905
        %1236 = vmatpush1.msra.mxu0 %v904
        %1237 = vmatprep.subr.mxu0 %v592
        %1238 = vmatpush1.msra.mxu0 %v591
        %1239 = vmatprep.subr.mxu0 %v983
        %1240 = vmatpush1.msra.mxu0 %v982
        %1241 = vmatprep.subr.mxu0 %v1061
        %1242 = vmatpush1.msra.mxu0 %v1060
        %1243 = vmatprep.subr.mxu0 %v1139
        %1244 = vmatpush1.msra.mxu0 %v1138
        %1245 = vmatprep.subr.mxu0 %v1217
        %1246 = vmatpush1.msra.mxu0 %v1216
        %1247 = vmatprep.subr.mxu0 0.0
        %1248 = vmatpush1.msra.mxu0 0.0
        %1249 = vmatprep.subr.mxu0 0.0
        %1250 = vmatpush1.msra.mxu0 0.0
        %1251 = vmatprep.subr.mxu0 0.0
        %1252 = vmatpush1.msra.mxu0 0.0
        %1253 = vmatprep.subr.mxu0 0.0
        %1254 = vmatpush1.msra.mxu0 0.0
        %1255 = vmatprep.subr.mxu0 0.0
        %1256 = vmatpush1.msra.mxu0 0.0
        %1257 = vmatprep.subr.mxu0 0.0
        %1258 = vmatpush1.msra.mxu0 0.0
        %1259 = vmatprep.subr.mxu0 0.0
        %1260 = vmatpush1.msra.mxu0 0.0
        %1261 = vmatprep.subr.mxu0 0.0
        %1262 = vmatpush1.msra.mxu0 0.0
        %1263 = vmatprep.subr.mxu0 0.0
        %1264 = vmatpush1.msra.mxu0 0.0
        %1265 = vmatprep.subr.mxu0 0.0
        %1266 = vmatpush1.msra.mxu0 0.0
        %1267 = vmatprep.subr.mxu0 0.0
        %1268 = vmatpush1.msra.mxu0 0.0
        %1269 = vmatprep.subr.mxu0 0.0
        %1270 = vmatpush1.msra.mxu0 0.0
        %1271 = vmatprep.subr.mxu0 0.0
        %1272 = vmatpush1.msra.mxu0 0.0
        %1273 = vmatprep.subr.mxu0 0.0
        %1274 = vmatpush1.msra.mxu0 0.0
        %1275 = vmatprep.subr.mxu0 0.0
        %1276 = vmatpush1.msra.mxu0 0.0
        %1277 = vmatprep.subr.mxu0 0.0
        %1278 = vmatpush1.msra.mxu0 0.0
        %1279 = vmatprep.subr.mxu0 0.0
        %1280 = vmatpush1.msra.mxu0 0.0
        %1281 = vmatprep.subr.mxu0 0.0
        %1282 = vmatpush1.msra.mxu0 0.0
        %1283 = vmatprep.subr.mxu0 0.0
        %1284 = vmatpush1.msra.mxu0 0.0
        %1285 = vmatprep.subr.mxu0 0.0
        %1286 = vmatpush1.msra.mxu0 0.0
        %1287 = vmatprep.subr.mxu0 0.0
        %1288 = vmatpush1.msra.mxu0 0.0
        %1289 = vmatprep.subr.mxu0 0.0
        %1290 = vmatpush1.msra.mxu0 0.0
        %1291 = vmatprep.subr.mxu0 0.0
        %1292 = vmatpush1.msra.mxu0 0.0
        %1293 = vmatprep.mubr.f32.mxu0 0.0
        %1294 = vmatmul.mubr.f32.gmra.mrb[0].mxu0 %v1227
        %v1295 = vpop.f32.mrb[0].mxu0
        %v1296 = vadd.f32 0.0, %v1295
        %v1297 = vpop.f32.mrb[0].mxu0
        %v1298 = vadd.f32 0.0, %v1297
        %1299 = vdwg.mxu0
        %1300 = vmatprep.subr.mxu0 %v673
        %1301 = vmatpush1.msra.mxu0 %v672
        %1302 = vmatprep.subr.mxu0 %v751
        %1303 = vmatpush1.msra.mxu0 %v750
        %1304 = vmatprep.subr.mxu0 %v829
        %1305 = vmatpush1.msra.mxu0 %v828
        %1306 = vmatprep.subr.mxu0 %v907
        %1307 = vmatpush1.msra.mxu0 %v906
        %1308 = vmatprep.subr.mxu0 %v594
        %1309 = vmatpush1.msra.mxu0 %v593
        %1310 = vmatprep.subr.mxu0 %v985
        %1311 = vmatpush1.msra.mxu0 %v984
        %1312 = vmatprep.subr.mxu0 %v1063
        %1313 = vmatpush1.msra.mxu0 %v1062
        %1314 = vmatprep.subr.mxu0 %v1141
        %1315 = vmatpush1.msra.mxu0 %v1140
        %1316 = vmatprep.subr.mxu0 %v1219
        %1317 = vmatpush1.msra.mxu0 %v1218
        %1318 = vmatprep.subr.mxu0 0.0
        %1319 = vmatpush1.msra.mxu0 0.0
        %1320 = vmatprep.subr.mxu0 0.0
        %1321 = vmatpush1.msra.mxu0 0.0
        %1322 = vmatprep.subr.mxu0 0.0
        %1323 = vmatpush1.msra.mxu0 0.0
        %1324 = vmatprep.subr.mxu0 0.0
        %1325 = vmatpush1.msra.mxu0 0.0
        %1326 = vmatprep.subr.mxu0 0.0
        %1327 = vmatpush1.msra.mxu0 0.0
        %1328 = vmatprep.subr.mxu0 0.0
        %1329 = vmatpush1.msra.mxu0 0.0
        %1330 = vmatprep.subr.mxu0 0.0
        %1331 = vmatpush1.msra.mxu0 0.0
        %1332 = vmatprep.subr.mxu0 0.0
        %1333 = vmatpush1.msra.mxu0 0.0
        %1334 = vmatprep.subr.mxu0 0.0
        %1335 = vmatpush1.msra.mxu0 0.0
        %1336 = vmatprep.subr.mxu0 0.0
        %1337 = vmatpush1.msra.mxu0 0.0
        %1338 = vmatprep.subr.mxu0 0.0
        %1339 = vmatpush1.msra.mxu0 0.0
        %1340 = vmatprep.subr.mxu0 0.0
        %1341 = vmatpush1.msra.mxu0 0.0
        %1342 = vmatprep.subr.mxu0 0.0
        %1343 = vmatpush1.msra.mxu0 0.0
        %1344 = vmatprep.subr.mxu0 0.0
        %1345 = vmatpush1.msra.mxu0 0.0
        %1346 = vmatprep.subr.mxu0 0.0
        %1347 = vmatpush1.msra.mxu0 0.0
        %1348 = vmatprep.subr.mxu0 0.0
        %1349 = vmatpush1.msra.mxu0 0.0
        %1350 = vmatprep.subr.mxu0 0.0
        %1351 = vmatpush1.msra.mxu0 0.0
        %1352 = vmatprep.subr.mxu0 0.0
        %1353 = vmatpush1.msra.mxu0 0.0
        %1354 = vmatprep.subr.mxu0 0.0
        %1355 = vmatpush1.msra.mxu0 0.0
        %1356 = vmatprep.subr.mxu0 0.0
        %1357 = vmatpush1.msra.mxu0 0.0
        %1358 = vmatprep.subr.mxu0 0.0
        %1359 = vmatpush1.msra.mxu0 0.0
        %1360 = vmatprep.subr.mxu0 0.0
        %1361 = vmatpush1.msra.mxu0 0.0
        %1362 = vmatprep.subr.mxu0 0.0
        %1363 = vmatpush1.msra.mxu0 0.0
        %1364 = vmatprep.mubr.f32.mxu0 0.0
        %1365 = vmatmul.mubr.f32.gmra.mrb[0].mxu0 %v1227
        %v1366 = vpop.f32.mrb[0].mxu0
        %v1367 = vadd.f32 0.0, %v1366
        %v1368 = vpop.f32.mrb[0].mxu0
        %v1369 = vadd.f32 0.0, %v1368
        %1370 = vdwg.mxu0
        %1371 = vmatprep.subr.mxu0 %v675
        %1372 = vmatpush1.msra.mxu0 %v674
        %1373 = vmatprep.subr.mxu0 %v753
        %1374 = vmatpush1.msra.mxu0 %v752
        %1375 = vmatprep.subr.mxu0 %v831
        %1376 = vmatpush1.msra.mxu0 %v830
        %1377 = vmatprep.subr.mxu0 %v909
        %1378 = vmatpush1.msra.mxu0 %v908
        %1379 = vmatprep.subr.mxu0 %v596
        %1380 = vmatpush1.msra.mxu0 %v595
        %1381 = vmatprep.subr.mxu0 %v987
        %1382 = vmatpush1.msra.mxu0 %v986
        %1383 = vmatprep.subr.mxu0 %v1065
        %1384 = vmatpush1.msra.mxu0 %v1064
        %1385 = vmatprep.subr.mxu0 %v1143
        %1386 = vmatpush1.msra.mxu0 %v1142
        %1387 = vmatprep.subr.mxu0 %v1221
        %1388 = vmatpush1.msra.mxu0 %v1220
        %1389 = vmatprep.subr.mxu0 0.0
        %1390 = vmatpush1.msra.mxu0 0.0
        %1391 = vmatprep.subr.mxu0 0.0
        %1392 = vmatpush1.msra.mxu0 0.0
        %1393 = vmatprep.subr.mxu0 0.0
        %1394 = vmatpush1.msra.mxu0 0.0
        %1395 = vmatprep.subr.mxu0 0.0
        %1396 = vmatpush1.msra.mxu0 0.0
        %1397 = vmatprep.subr.mxu0 0.0
        %1398 = vmatpush1.msra.mxu0 0.0
        %1399 = vmatprep.subr.mxu0 0.0
        %1400 = vmatpush1.msra.mxu0 0.0
        %1401 = vmatprep.subr.mxu0 0.0
        %1402 = vmatpush1.msra.mxu0 0.0
        %1403 = vmatprep.subr.mxu0 0.0
        %1404 = vmatpush1.msra.mxu0 0.0
        %1405 = vmatprep.subr.mxu0 0.0
        %1406 = vmatpush1.msra.mxu0 0.0
        %1407 = vmatprep.subr.mxu0 0.0
        %1408 = vmatpush1.msra.mxu0 0.0
        %1409 = vmatprep.subr.mxu0 0.0
        %1410 = vmatpush1.msra.mxu0 0.0
        %1411 = vmatprep.subr.mxu0 0.0
        %1412 = vmatpush1.msra.mxu0 0.0
        %1413 = vmatprep.subr.mxu0 0.0
        %1414 = vmatpush1.msra.mxu0 0.0
        %1415 = vmatprep.subr.mxu0 0.0
        %1416 = vmatpush1.msra.mxu0 0.0
        %1417 = vmatprep.subr.mxu0 0.0
        %1418 = vmatpush1.msra.mxu0 0.0
        %1419 = vmatprep.subr.mxu0 0.0
        %1420 = vmatpush1.msra.mxu0 0.0
        %1421 = vmatprep.subr.mxu0 0.0
        %1422 = vmatpush1.msra.mxu0 0.0
        %1423 = vmatprep.subr.mxu0 0.0
        %1424 = vmatpush1.msra.mxu0 0.0
        %1425 = vmatprep.subr.mxu0 0.0
        %1426 = vmatpush1.msra.mxu0 0.0
        %1427 = vmatprep.subr.mxu0 0.0
        %1428 = vmatpush1.msra.mxu0 0.0
        %1429 = vmatprep.subr.mxu0 0.0
        %1430 = vmatpush1.msra.mxu0 0.0
        %1431 = vmatprep.subr.mxu0 0.0
        %1432 = vmatpush1.msra.mxu0 0.0
        %1433 = vmatprep.subr.mxu0 0.0
        %1434 = vmatpush1.msra.mxu0 0.0
        %1435 = vmatprep.mubr.f32.mxu0 0.0
        %1436 = vmatmul.mubr.f32.gmra.mrb[0].mxu0 %v1227
        %v1437 = vpop.f32.mrb[0].mxu0
        %v1438 = vadd.f32 0.0, %v1437
        %v1439 = vpop.f32.mrb[0].mxu0
        %v1440 = vadd.f32 0.0, %v1439
        %1441 = vdwg.mxu0
        %1442 = vmatprep.subr.mxu0 %v677
        %1443 = vmatpush1.msra.mxu0 %v676
        %1444 = vmatprep.subr.mxu0 %v755
        %1445 = vmatpush1.msra.mxu0 %v754
        %1446 = vmatprep.subr.mxu0 %v833
        %1447 = vmatpush1.msra.mxu0 %v832
        %1448 = vmatprep.subr.mxu0 %v911
        %1449 = vmatpush1.msra.mxu0 %v910
        %1450 = vmatprep.subr.mxu0 %v598
        %1451 = vmatpush1.msra.mxu0 %v597
        %1452 = vmatprep.subr.mxu0 %v989
        %1453 = vmatpush1.msra.mxu0 %v988
        %1454 = vmatprep.subr.mxu0 %v1067
        %1455 = vmatpush1.msra.mxu0 %v1066
        %1456 = vmatprep.subr.mxu0 %v1145
        %1457 = vmatpush1.msra.mxu0 %v1144
        %1458 = vmatprep.subr.mxu0 %v1223
        %1459 = vmatpush1.msra.mxu0 %v1222
        %1460 = vmatprep.subr.mxu0 0.0
        %1461 = vmatpush1.msra.mxu0 0.0
        %1462 = vmatprep.subr.mxu0 0.0
        %1463 = vmatpush1.msra.mxu0 0.0
        %1464 = vmatprep.subr.mxu0 0.0
        %1465 = vmatpush1.msra.mxu0 0.0
        %1466 = vmatprep.subr.mxu0 0.0
        %1467 = vmatpush1.msra.mxu0 0.0
        %1468 = vmatprep.subr.mxu0 0.0
        %1469 = vmatpush1.msra.mxu0 0.0
        %1470 = vmatprep.subr.mxu0 0.0
        %1471 = vmatpush1.msra.mxu0 0.0
        %1472 = vmatprep.subr.mxu0 0.0
        %1473 = vmatpush1.msra.mxu0 0.0
        %1474 = vmatprep.subr.mxu0 0.0
        %1475 = vmatpush1.msra.mxu0 0.0
        %1476 = vmatprep.subr.mxu0 0.0
        %1477 = vmatpush1.msra.mxu0 0.0
        %1478 = vmatprep.subr.mxu0 0.0
        %1479 = vmatpush1.msra.mxu0 0.0
        %1480 = vmatprep.subr.mxu0 0.0
        %1481 = vmatpush1.msra.mxu0 0.0
        %1482 = vmatprep.subr.mxu0 0.0
        %1483 = vmatpush1.msra.mxu0 0.0
        %1484 = vmatprep.subr.mxu0 0.0
        %1485 = vmatpush1.msra.mxu0 0.0
        %1486 = vmatprep.subr.mxu0 0.0
        %1487 = vmatpush1.msra.mxu0 0.0
        %1488 = vmatprep.subr.mxu0 0.0
        %1489 = vmatpush1.msra.mxu0 0.0
        %1490 = vmatprep.subr.mxu0 0.0
        %1491 = vmatpush1.msra.mxu0 0.0
        %1492 = vmatprep.subr.mxu0 0.0
        %1493 = vmatpush1.msra.mxu0 0.0
        %1494 = vmatprep.subr.mxu0 0.0
        %1495 = vmatpush1.msra.mxu0 0.0
        %1496 = vmatprep.subr.mxu0 0.0
        %1497 = vmatpush1.msra.mxu0 0.0
        %1498 = vmatprep.subr.mxu0 0.0
        %1499 = vmatpush1.msra.mxu0 0.0
        %1500 = vmatprep.subr.mxu0 0.0
        %1501 = vmatpush1.msra.mxu0 0.0
        %1502 = vmatprep.subr.mxu0 0.0
        %1503 = vmatpush1.msra.mxu0 0.0
        %1504 = vmatprep.subr.mxu0 0.0
        %1505 = vmatpush1.msra.mxu0 0.0
        %1506 = vmatprep.mubr.f32.mxu0 0.0
        %1507 = vmatmul.mubr.f32.gmra.mrb[0].mxu0 %v1227
        %v1508 = vpop.f32.mrb[0].mxu0
        %v1509 = vadd.f32 0.0, %v1508
        %v1510 = vpop.f32.mrb[0].mxu0
        %v1511 = vadd.f32 0.0, %v1510
        %1512 = vdwg.mxu0
        %v1513 = vld [vmem:[%s6] sm:$0xff]
        %1515 = vset.pattern.permute.xlu0 0
        %1516 = vperm.xlu0 %1515, %v1513
        %v1517 = vpop.permute.xlu0 %1516
        %v1519 = vmul.f32 %v1296, %v1517
        %v1520 = vmul.f32 %v1298, %v1517
        %v1521 = vmul.f32 %v1367, %v1517
        %v1522 = vmul.f32 %v1369, %v1517
        %v1523 = vmul.f32 %v1438, %v1517
        %v1524 = vmul.f32 %v1440, %v1517
        %v1525 = vmul.f32 %v1509, %v1517
        %v1526 = vmul.f32 %v1511, %v1517
        %v1527 = vld [vmem:[%s7] sm:$0xff]
        %1529 = vset.pattern.permute.xlu0 0
        %1530 = vperm.xlu0 %1529, %v1527
        %v1531 = vpop.permute.xlu0 %1530
        %v1533 = vadd.f32 %v1519, %v1531
        %v1534 = vadd.f32 %v1520, %v1531
        %v1535 = vadd.f32 %v1521, %v1531
        %v1536 = vadd.f32 %v1522, %v1531
        %v1537 = vadd.f32 %v1523, %v1531
        %v1538 = vadd.f32 %v1524, %v1531
        %v1539 = vadd.f32 %v1525, %v1531
        %v1540 = vadd.f32 %v1526, %v1531
        %v1541 = vmax.f32 %v1533, 0.0
        %v1542 = vmax.f32 %v1534, 0.0
        %v1543 = vmax.f32 %v1535, 0.0
        %v1544 = vmax.f32 %v1536, 0.0
        %v1545 = vmax.f32 %v1537, 0.0
        %v1546 = vmax.f32 %v1538, 0.0
        %v1547 = vmax.f32 %v1539, 0.0
        %v1548 = vmax.f32 %v1540, 0.0
        %1549 = vrot.lane.b32.xlu0 %v1541, 17
        %v1550 = vpop.permute.xlu0 %1549
        %1551 = vrot.lane.b32.xlu0 %v1542, 17
        %v1552 = vpop.permute.xlu0 %1551
        %1553 = vrot.lane.b32.xlu0 %v1543, 17
        %v1554 = vpop.permute.xlu0 %1553
        %1555 = vrot.lane.b32.xlu0 %v1544, 17
        %v1556 = vpop.permute.xlu0 %1555
        %1557 = vrot.lane.b32.xlu0 %v1545, 17
        %v1558 = vpop.permute.xlu0 %1557
        %1559 = vrot.lane.b32.xlu0 %v1546, 17
        %v1560 = vpop.permute.xlu0 %1559
        %1561 = vrot.lane.b32.xlu0 %v1547, 17
        %v1562 = vpop.permute.xlu0 %1561
        %1563 = vrot.lane.b32.xlu0 %v1548, 17
        %v1564 = vpop.permute.xlu0 %1563
        %v1565 = vsel %vm617, %v1562, %v1564
        %v1566 = vsel %vm617, %v1560, %v1562
        %v1567 = vsel %vm617, %v1558, %v1560
        %v1568 = vsel %vm617, %v1556, %v1558
        %v1569 = vsel %vm617, %v1554, %v1556
        %v1570 = vsel %vm617, %v1552, %v1554
        %v1571 = vsel %vm617, %v1550, %v1552
        %v1572 = vsel %vm617, %v1564, %v1550
        %v1573 = vmul.f32 %v1572, %v633
        %v1574 = vmul.f32 %v1571, %v637
        %v1575 = vmul.f32 %v1570, %v641
        %v1576 = vmul.f32 %v1569, %v645
        %v1577 = vmul.f32 %v1568, %v649
        %v1578 = vmul.f32 %v1567, %v653
        %v1579 = vmul.f32 %v1566, %v657
        %v1580 = vmul.f32 %v1565, %v661
        %1581 = vrot.lane.b32.xlu0 %v1541, 16
        %v1582 = vpop.permute.xlu0 %1581
        %1583 = vrot.lane.b32.xlu0 %v1542, 16
        %v1584 = vpop.permute.xlu0 %1583
        %1585 = vrot.lane.b32.xlu0 %v1543, 16
        %v1586 = vpop.permute.xlu0 %1585
        %1587 = vrot.lane.b32.xlu0 %v1544, 16
        %v1588 = vpop.permute.xlu0 %1587
        %1589 = vrot.lane.b32.xlu0 %v1545, 16
        %v1590 = vpop.permute.xlu0 %1589
        %1591 = vrot.lane.b32.xlu0 %v1546, 16
        %v1592 = vpop.permute.xlu0 %1591
        %1593 = vrot.lane.b32.xlu0 %v1547, 16
        %v1594 = vpop.permute.xlu0 %1593
        %1595 = vrot.lane.b32.xlu0 %v1548, 16
        %v1596 = vpop.permute.xlu0 %1595
        %v1597 = vsel %vm694, %v1594, %v1596
        %v1598 = vsel %vm694, %v1592, %v1594
        %v1599 = vsel %vm694, %v1590, %v1592
        %v1600 = vsel %vm694, %v1588, %v1590
        %v1601 = vsel %vm694, %v1586, %v1588
        %v1602 = vsel %vm694, %v1584, %v1586
        %v1603 = vsel %vm694, %v1582, %v1584
        %v1604 = vsel %vm694, %v1596, %v1582
        %v1605 = vmul.f32 %v1604, %v711
        %v1606 = vmul.f32 %v1603, %v715
        %v1607 = vmul.f32 %v1602, %v719
        %v1608 = vmul.f32 %v1601, %v723
        %v1609 = vmul.f32 %v1600, %v727
        %v1610 = vmul.f32 %v1599, %v731
        %v1611 = vmul.f32 %v1598, %v735
        %v1612 = vmul.f32 %v1597, %v739
        %1613 = vrot.lane.b32.xlu0 %v1541, 15
        %v1614 = vpop.permute.xlu0 %1613
        %1615 = vrot.lane.b32.xlu0 %v1542, 15
        %v1616 = vpop.permute.xlu0 %1615
        %1617 = vrot.lane.b32.xlu0 %v1543, 15
        %v1618 = vpop.permute.xlu0 %1617
        %1619 = vrot.lane.b32.xlu0 %v1544, 15
        %v1620 = vpop.permute.xlu0 %1619
        %1621 = vrot.lane.b32.xlu0 %v1545, 15
        %v1622 = vpop.permute.xlu0 %1621
        %1623 = vrot.lane.b32.xlu0 %v1546, 15
        %v1624 = vpop.permute.xlu0 %1623
        %1625 = vrot.lane.b32.xlu0 %v1547, 15
        %v1626 = vpop.permute.xlu0 %1625
        %1627 = vrot.lane.b32.xlu0 %v1548, 15
        %v1628 = vpop.permute.xlu0 %1627
        %v1629 = vsel %vm772, %v1626, %v1628
        %v1630 = vsel %vm772, %v1624, %v1626
        %v1631 = vsel %vm772, %v1622, %v1624
        %v1632 = vsel %vm772, %v1620, %v1622
        %v1633 = vsel %vm772, %v1618, %v1620
        %v1634 = vsel %vm772, %v1616, %v1618
        %v1635 = vsel %vm772, %v1614, %v1616
        %v1636 = vsel %vm772, %v1628, %v1614
        %v1637 = vmul.f32 %v1636, %v789
        %v1638 = vmul.f32 %v1635, %v793
        %v1639 = vmul.f32 %v1634, %v797
        %v1640 = vmul.f32 %v1633, %v801
        %v1641 = vmul.f32 %v1632, %v805
        %v1642 = vmul.f32 %v1631, %v809
        %v1643 = vmul.f32 %v1630, %v813
        %v1644 = vmul.f32 %v1629, %v817
        %1645 = vrot.lane.b32.xlu0 %v1541, 1
        %v1646 = vpop.permute.xlu0 %1645
        %1647 = vrot.lane.b32.xlu0 %v1542, 1
        %v1648 = vpop.permute.xlu0 %1647
        %1649 = vrot.lane.b32.xlu0 %v1543, 1
        %v1650 = vpop.permute.xlu0 %1649
        %1651 = vrot.lane.b32.xlu0 %v1544, 1
        %v1652 = vpop.permute.xlu0 %1651
        %1653 = vrot.lane.b32.xlu0 %v1545, 1
        %v1654 = vpop.permute.xlu0 %1653
        %1655 = vrot.lane.b32.xlu0 %v1546, 1
        %v1656 = vpop.permute.xlu0 %1655
        %1657 = vrot.lane.b32.xlu0 %v1547, 1
        %v1658 = vpop.permute.xlu0 %1657
        %1659 = vrot.lane.b32.xlu0 %v1548, 1
        %v1660 = vpop.permute.xlu0 %1659
        %v1661 = vsel %vm850, %v1658, %v1660
        %v1662 = vsel %vm850, %v1656, %v1658
        %v1663 = vsel %vm850, %v1654, %v1656
        %v1664 = vsel %vm850, %v1652, %v1654
        %v1665 = vsel %vm850, %v1650, %v1652
        %v1666 = vsel %vm850, %v1648, %v1650
        %v1667 = vsel %vm850, %v1646, %v1648
        %v1668 = vsel %vm850, %v1660, %v1646
        %v1669 = vmul.f32 %v1668, %v867
        %v1670 = vmul.f32 %v1667, %v871
        %v1671 = vmul.f32 %v1666, %v875
        %v1672 = vmul.f32 %v1665, %v879
        %v1673 = vmul.f32 %v1664, %v883
        %v1674 = vmul.f32 %v1663, %v887
        %v1675 = vmul.f32 %v1662, %v891
        %v1676 = vmul.f32 %v1661, %v895
        %1677 = vrot.lane.b32.xlu0 %v1541, 127
        %v1678 = vpop.permute.xlu0 %1677
        %1679 = vrot.lane.b32.xlu0 %v1542, 127
        %v1680 = vpop.permute.xlu0 %1679
        %1681 = vrot.lane.b32.xlu0 %v1543, 127
        %v1682 = vpop.permute.xlu0 %1681
        %1683 = vrot.lane.b32.xlu0 %v1544, 127
        %v1684 = vpop.permute.xlu0 %1683
        %1685 = vrot.lane.b32.xlu0 %v1545, 127
        %v1686 = vpop.permute.xlu0 %1685
        %1687 = vrot.lane.b32.xlu0 %v1546, 127
        %v1688 = vpop.permute.xlu0 %1687
        %1689 = vrot.lane.b32.xlu0 %v1547, 127
        %v1690 = vpop.permute.xlu0 %1689
        %1691 = vrot.lane.b32.xlu0 %v1548, 127
        %v1692 = vpop.permute.xlu0 %1691
        %v1693 = vsel %vm928, %v1690, %v1692
        %v1694 = vsel %vm928, %v1688, %v1690
        %v1695 = vsel %vm928, %v1686, %v1688
        %v1696 = vsel %vm928, %v1684, %v1686
        %v1697 = vsel %vm928, %v1682, %v1684
        %v1698 = vsel %vm928, %v1680, %v1682
        %v1699 = vsel %vm928, %v1678, %v1680
        %v1700 = vsel %vm928, %v1692, %v1678
        %v1701 = vmul.f32 %v1699, %v945
        %v1702 = vmul.f32 %v1698, %v949
        %v1703 = vmul.f32 %v1697, %v953
        %v1704 = vmul.f32 %v1696, %v957
        %v1705 = vmul.f32 %v1695, %v961
        %v1706 = vmul.f32 %v1694, %v965
        %v1707 = vmul.f32 %v1693, %v969
        %v1708 = vmul.f32 %v1700, %v973
        %1709 = vrot.lane.b32.xlu0 %v1541, 113
        %v1710 = vpop.permute.xlu0 %1709
        %1711 = vrot.lane.b32.xlu0 %v1542, 113
        %v1712 = vpop.permute.xlu0 %1711
        %1713 = vrot.lane.b32.xlu0 %v1543, 113
        %v1714 = vpop.permute.xlu0 %1713
        %1715 = vrot.lane.b32.xlu0 %v1544, 113
        %v1716 = vpop.permute.xlu0 %1715
        %1717 = vrot.lane.b32.xlu0 %v1545, 113
        %v1718 = vpop.permute.xlu0 %1717
        %1719 = vrot.lane.b32.xlu0 %v1546, 113
        %v1720 = vpop.permute.xlu0 %1719
        %1721 = vrot.lane.b32.xlu0 %v1547, 113
        %v1722 = vpop.permute.xlu0 %1721
        %1723 = vrot.lane.b32.xlu0 %v1548, 113
        %v1724 = vpop.permute.xlu0 %1723
        %v1725 = vsel %vm1006, %v1722, %v1724
        %v1726 = vsel %vm1006, %v1720, %v1722
        %v1727 = vsel %vm1006, %v1718, %v1720
        %v1728 = vsel %vm1006, %v1716, %v1718
        %v1729 = vsel %vm1006, %v1714, %v1716
        %v1730 = vsel %vm1006, %v1712, %v1714
        %v1731 = vsel %vm1006, %v1710, %v1712
        %v1732 = vsel %vm1006, %v1724, %v1710
        %v1733 = vmul.f32 %v1731, %v1023
        %v1734 = vmul.f32 %v1730, %v1027
        %v1735 = vmul.f32 %v1729, %v1031
        %v1736 = vmul.f32 %v1728, %v1035
        %v1737 = vmul.f32 %v1727, %v1039
        %v1738 = vmul.f32 %v1726, %v1043
        %v1739 = vmul.f32 %v1725, %v1047
        %v1740 = vmul.f32 %v1732, %v1051
        %1741 = vrot.lane.b32.xlu0 %v1541, 112
        %v1742 = vpop.permute.xlu0 %1741
        %1743 = vrot.lane.b32.xlu0 %v1542, 112
        %v1744 = vpop.permute.xlu0 %1743
        %1745 = vrot.lane.b32.xlu0 %v1543, 112
        %v1746 = vpop.permute.xlu0 %1745
        %1747 = vrot.lane.b32.xlu0 %v1544, 112
        %v1748 = vpop.permute.xlu0 %1747
        %1749 = vrot.lane.b32.xlu0 %v1545, 112
        %v1750 = vpop.permute.xlu0 %1749
        %1751 = vrot.lane.b32.xlu0 %v1546, 112
        %v1752 = vpop.permute.xlu0 %1751
        %1753 = vrot.lane.b32.xlu0 %v1547, 112
        %v1754 = vpop.permute.xlu0 %1753
        %1755 = vrot.lane.b32.xlu0 %v1548, 112
        %v1756 = vpop.permute.xlu0 %1755
        %v1757 = vsel %vm1084, %v1754, %v1756
        %v1758 = vsel %vm1084, %v1752, %v1754
        %v1759 = vsel %vm1084, %v1750, %v1752
        %v1760 = vsel %vm1084, %v1748, %v1750
        %v1761 = vsel %vm1084, %v1746, %v1748
        %v1762 = vsel %vm1084, %v1744, %v1746
        %v1763 = vsel %vm1084, %v1742, %v1744
        %v1764 = vsel %vm1084, %v1756, %v1742
        %v1765 = vmul.f32 %v1763, %v1101
        %v1766 = vmul.f32 %v1762, %v1105
        %v1767 = vmul.f32 %v1761, %v1109
        %v1768 = vmul.f32 %v1760, %v1113
        %v1769 = vmul.f32 %v1759, %v1117
        %v1770 = vmul.f32 %v1758, %v1121
        %v1771 = vmul.f32 %v1757, %v1125
        %v1772 = vmul.f32 %v1764, %v1129
        %1773 = vrot.lane.b32.xlu0 %v1541, 111
        %v1774 = vpop.permute.xlu0 %1773
        %1775 = vrot.lane.b32.xlu0 %v1542, 111
        %v1776 = vpop.permute.xlu0 %1775
        %1777 = vrot.lane.b32.xlu0 %v1543, 111
        %v1778 = vpop.permute.xlu0 %1777
        %1779 = vrot.lane.b32.xlu0 %v1544, 111
        %v1780 = vpop.permute.xlu0 %1779
        %1781 = vrot.lane.b32.xlu0 %v1545, 111
        %v1782 = vpop.permute.xlu0 %1781
        %1783 = vrot.lane.b32.xlu0 %v1546, 111
        %v1784 = vpop.permute.xlu0 %1783
        %1785 = vrot.lane.b32.xlu0 %v1547, 111
        %v1786 = vpop.permute.xlu0 %1785
        %1787 = vrot.lane.b32.xlu0 %v1548, 111
        %v1788 = vpop.permute.xlu0 %1787
        %v1789 = vsel %vm1162, %v1786, %v1788
        %v1790 = vsel %vm1162, %v1784, %v1786
        %v1791 = vsel %vm1162, %v1782, %v1784
        %v1792 = vsel %vm1162, %v1780, %v1782
        %v1793 = vsel %vm1162, %v1778, %v1780
        %v1794 = vsel %vm1162, %v1776, %v1778
        %v1795 = vsel %vm1162, %v1774, %v1776
        %v1796 = vsel %vm1162, %v1788, %v1774
        %v1797 = vmul.f32 %v1795, %v1179
        %v1798 = vmul.f32 %v1794, %v1183
        %v1799 = vmul.f32 %v1793, %v1187
        %v1800 = vmul.f32 %v1792, %v1191
        %v1801 = vmul.f32 %v1791, %v1195
        %v1802 = vmul.f32 %v1790, %v1199
        %v1803 = vmul.f32 %v1789, %v1203
        %v1804 = vmul.f32 %v1796, %v1207
        %v1805 = vld [vmem:[%s8] sm:$0xff]
        %v1806 = vld [vmem:[%s8 + $0x8] sm:$0xff]
        %v1808 = vsel %vm1225, %v1805, 0
        %v1811 = vsel %vm1225, %v1806, 0
        %1813 = vmatprep.subr.mxu0 %v1574
        %1814 = vmatpush1.msra.mxu0 %v1573
        %1815 = vmatprep.subr.mxu0 %v1606
        %1816 = vmatpush1.msra.mxu0 %v1605
        %1817 = vmatprep.subr.mxu0 %v1638
        %1818 = vmatpush1.msra.mxu0 %v1637
        %1819 = vmatprep.subr.mxu0 %v1670
        %1820 = vmatpush1.msra.mxu0 %v1669
        %1821 = vmatprep.subr.mxu0 %v1542
        %1822 = vmatpush1.msra.mxu0 %v1541
        %1823 = vmatprep.subr.mxu0 %v1702
        %1824 = vmatpush1.msra.mxu0 %v1701
        %1825 = vmatprep.subr.mxu0 %v1734
        %1826 = vmatpush1.msra.mxu0 %v1733
        %1827 = vmatprep.subr.mxu0 %v1766
        %1828 = vmatpush1.msra.mxu0 %v1765
        %1829 = vmatprep.subr.mxu0 %v1798
        %1830 = vmatpush1.msra.mxu0 %v1797
        %1831 = vmatprep.subr.mxu0 0.0
        %1832 = vmatpush1.msra.mxu0 0.0
        %1833 = vmatprep.subr.mxu0 0.0
        %1834 = vmatpush1.msra.mxu0 0.0
        %1835 = vmatprep.subr.mxu0 0.0
        %1836 = vmatpush1.msra.mxu0 0.0
        %1837 = vmatprep.subr.mxu0 0.0
        %1838 = vmatpush1.msra.mxu0 0.0
        %1839 = vmatprep.subr.mxu0 0.0
        %1840 = vmatpush1.msra.mxu0 0.0
        %1841 = vmatprep.subr.mxu0 0.0
        %1842 = vmatpush1.msra.mxu0 0.0
        %1843 = vmatprep.subr.mxu0 0.0
        %1844 = vmatpush1.msra.mxu0 0.0
        %1845 = vmatprep.subr.mxu0 0.0
        %1846 = vmatpush1.msra.mxu0 0.0
        %1847 = vmatprep.subr.mxu0 0.0
        %1848 = vmatpush1.msra.mxu0 0.0
        %1849 = vmatprep.subr.mxu0 0.0
        %1850 = vmatpush1.msra.mxu0 0.0
        %1851 = vmatprep.subr.mxu0 0.0
        %1852 = vmatpush1.msra.mxu0 0.0
        %1853 = vmatprep.subr.mxu0 0.0
        %1854 = vmatpush1.msra.mxu0 0.0
        %1855 = vmatprep.subr.mxu0 0.0
        %1856 = vmatpush1.msra.mxu0 0.0
        %1857 = vmatprep.subr.mxu0 0.0
        %1858 = vmatpush1.msra.mxu0 0.0
        %1859 = vmatprep.subr.mxu0 0.0
        %1860 = vmatpush1.msra.mxu0 0.0
        %1861 = vmatprep.subr.mxu0 0.0
        %1862 = vmatpush1.msra.mxu0 0.0
        %1863 = vmatprep.subr.mxu0 0.0
        %1864 = vmatpush1.msra.mxu0 0.0
        %1865 = vmatprep.subr.mxu0 0.0
        %1866 = vmatpush1.msra.mxu0 0.0
        %1867 = vmatprep.subr.mxu0 0.0
        %1868 = vmatpush1.msra.mxu0 0.0
        %1869 = vmatprep.subr.mxu0 0.0
        %1870 = vmatpush1.msra.mxu0 0.0
        %1871 = vmatprep.subr.mxu0 0.0
        %1872 = vmatpush1.msra.mxu0 0.0
        %1873 = vmatprep.subr.mxu0 0.0
        %1874 = vmatpush1.msra.mxu0 0.0
        %1875 = vmatprep.subr.mxu0 0.0
        %1876 = vmatpush1.msra.mxu0 0.0
        %1877 = vmatprep.mubr.f32.mxu0 0.0
        %1878 = vmatmul.mubr.f32.gmra.mrb[0].mxu0 %v1808
        %v1879 = vpop.f32.mrb[0].mxu0
        %v1880 = vadd.f32 0.0, %v1879
        %v1881 = vpop.f32.mrb[0].mxu0
        %v1882 = vadd.f32 0.0, %v1881
        %1883 = vmatprep.mubr.f32.mxu0 0.0
        %1884 = vmatmul.mubr.f32.gmra.mrb[0].mxu0 %v1811
        %v1885 = vpop.f32.mrb[0].mxu0
        %v1886 = vadd.f32 0.0, %v1885
        %v1887 = vpop.f32.mrb[0].mxu0
        %v1888 = vadd.f32 0.0, %v1887
        %1889 = vdwg.mxu0
        %1890 = vmatprep.subr.mxu0 %v1576
        %1891 = vmatpush1.msra.mxu0 %v1575
        %1892 = vmatprep.subr.mxu0 %v1608
        %1893 = vmatpush1.msra.mxu0 %v1607
        %1894 = vmatprep.subr.mxu0 %v1640
        %1895 = vmatpush1.msra.mxu0 %v1639
        %1896 = vmatprep.subr.mxu0 %v1672
        %1897 = vmatpush1.msra.mxu0 %v1671
        %1898 = vmatprep.subr.mxu0 %v1544
        %1899 = vmatpush1.msra.mxu0 %v1543
        %1900 = vmatprep.subr.mxu0 %v1704
        %1901 = vmatpush1.msra.mxu0 %v1703
        %1902 = vmatprep.subr.mxu0 %v1736
        %1903 = vmatpush1.msra.mxu0 %v1735
        %1904 = vmatprep.subr.mxu0 %v1768
        %1905 = vmatpush1.msra.mxu0 %v1767
        %1906 = vmatprep.subr.mxu0 %v1800
        %1907 = vmatpush1.msra.mxu0 %v1799
        %1908 = vmatprep.subr.mxu0 0.0
        %1909 = vmatpush1.msra.mxu0 0.0
        %1910 = vmatprep.subr.mxu0 0.0
        %1911 = vmatpush1.msra.mxu0 0.0
        %1912 = vmatprep.subr.mxu0 0.0
        %1913 = vmatpush1.msra.mxu0 0.0
        %1914 = vmatprep.subr.mxu0 0.0
        %1915 = vmatpush1.msra.mxu0 0.0
        %1916 = vmatprep.subr.mxu0 0.0
        %1917 = vmatpush1.msra.mxu0 0.0
        %1918 = vmatprep.subr.mxu0 0.0
        %1919 = vmatpush1.msra.mxu0 0.0
        %1920 = vmatprep.subr.mxu0 0.0
        %1921 = vmatpush1.msra.mxu0 0.0
        %1922 = vmatprep.subr.mxu0 0.0
        %1923 = vmatpush1.msra.mxu0 0.0
        %1924 = vmatprep.subr.mxu0 0.0
        %1925 = vmatpush1.msra.mxu0 0.0
        %1926 = vmatprep.subr.mxu0 0.0
        %1927 = vmatpush1.msra.mxu0 0.0
        %1928 = vmatprep.subr.mxu0 0.0
        %1929 = vmatpush1.msra.mxu0 0.0
        %1930 = vmatprep.subr.mxu0 0.0
        %1931 = vmatpush1.msra.mxu0 0.0
        %1932 = vmatprep.subr.mxu0 0.0
        %1933 = vmatpush1.msra.mxu0 0.0
        %1934 = vmatprep.subr.mxu0 0.0
        %1935 = vmatpush1.msra.mxu0 0.0
        %1936 = vmatprep.subr.mxu0 0.0
        %1937 = vmatpush1.msra.mxu0 0.0
        %1938 = vmatprep.subr.mxu0 0.0
        %1939 = vmatpush1.msra.mxu0 0.0
        %1940 = vmatprep.subr.mxu0 0.0
        %1941 = vmatpush1.msra.mxu0 0.0
        %1942 = vmatprep.subr.mxu0 0.0
        %1943 = vmatpush1.msra.mxu0 0.0
        %1944 = vmatprep.subr.mxu0 0.0
        %1945 = vmatpush1.msra.mxu0 0.0
        %1946 = vmatprep.subr.mxu0 0.0
        %1947 = vmatpush1.msra.mxu0 0.0
        %1948 = vmatprep.subr.mxu0 0.0
        %1949 = vmatpush1.msra.mxu0 0.0
        %1950 = vmatprep.subr.mxu0 0.0
        %1951 = vmatpush1.msra.mxu0 0.0
        %1952 = vmatprep.subr.mxu0 0.0
        %1953 = vmatpush1.msra.mxu0 0.0
        %1954 = vmatprep.mubr.f32.mxu0 0.0
        %1955 = vmatmul.mubr.f32.gmra.mrb[0].mxu0 %v1808
        %v1956 = vpop.f32.mrb[0].mxu0
        %v1957 = vadd.f32 0.0, %v1956
        %v1958 = vpop.f32.mrb[0].mxu0
        %v1959 = vadd.f32 0.0, %v1958
        %1960 = vmatprep.mubr.f32.mxu0 0.0
        %1961 = vmatmul.mubr.f32.gmra.mrb[0].mxu0 %v1811
        %v1962 = vpop.f32.mrb[0].mxu0
        %v1963 = vadd.f32 0.0, %v1962
        %v1964 = vpop.f32.mrb[0].mxu0
        %v1965 = vadd.f32 0.0, %v1964
        %1966 = vdwg.mxu0
        %1967 = vmatprep.subr.mxu0 %v1578
        %1968 = vmatpush1.msra.mxu0 %v1577
        %1969 = vmatprep.subr.mxu0 %v1610
        %1970 = vmatpush1.msra.mxu0 %v1609
        %1971 = vmatprep.subr.mxu0 %v1642
        %1972 = vmatpush1.msra.mxu0 %v1641
        %1973 = vmatprep.subr.mxu0 %v1674
        %1974 = vmatpush1.msra.mxu0 %v1673
        %1975 = vmatprep.subr.mxu0 %v1546
        %1976 = vmatpush1.msra.mxu0 %v1545
        %1977 = vmatprep.subr.mxu0 %v1706
        %1978 = vmatpush1.msra.mxu0 %v1705
        %1979 = vmatprep.subr.mxu0 %v1738
        %1980 = vmatpush1.msra.mxu0 %v1737
        %1981 = vmatprep.subr.mxu0 %v1770
        %1982 = vmatpush1.msra.mxu0 %v1769
        %1983 = vmatprep.subr.mxu0 %v1802
        %1984 = vmatpush1.msra.mxu0 %v1801
        %1985 = vmatprep.subr.mxu0 0.0
        %1986 = vmatpush1.msra.mxu0 0.0
        %1987 = vmatprep.subr.mxu0 0.0
        %1988 = vmatpush1.msra.mxu0 0.0
        %1989 = vmatprep.subr.mxu0 0.0
        %1990 = vmatpush1.msra.mxu0 0.0
        %1991 = vmatprep.subr.mxu0 0.0
        %1992 = vmatpush1.msra.mxu0 0.0
        %1993 = vmatprep.subr.mxu0 0.0
        %1994 = vmatpush1.msra.mxu0 0.0
        %1995 = vmatprep.subr.mxu0 0.0
        %1996 = vmatpush1.msra.mxu0 0.0
        %1997 = vmatprep.subr.mxu0 0.0
        %1998 = vmatpush1.msra.mxu0 0.0
        %1999 = vmatprep.subr.mxu0 0.0
        %2000 = vmatpush1.msra.mxu0 0.0
        %2001 = vmatprep.subr.mxu0 0.0
        %2002 = vmatpush1.msra.mxu0 0.0
        %2003 = vmatprep.subr.mxu0 0.0
        %2004 = vmatpush1.msra.mxu0 0.0
        %2005 = vmatprep.subr.mxu0 0.0
        %2006 = vmatpush1.msra.mxu0 0.0
        %2007 = vmatprep.subr.mxu0 0.0
        %2008 = vmatpush1.msra.mxu0 0.0
        %2009 = vmatprep.subr.mxu0 0.0
        %2010 = vmatpush1.msra.mxu0 0.0
        %2011 = vmatprep.subr.mxu0 0.0
        %2012 = vmatpush1.msra.mxu0 0.0
        %2013 = vmatprep.subr.mxu0 0.0
        %2014 = vmatpush1.msra.mxu0 0.0
        %2015 = vmatprep.subr.mxu0 0.0
        %2016 = vmatpush1.msra.mxu0 0.0
        %2017 = vmatprep.subr.mxu0 0.0
        %2018 = vmatpush1.msra.mxu0 0.0
        %2019 = vmatprep.subr.mxu0 0.0
        %2020 = vmatpush1.msra.mxu0 0.0
        %2021 = vmatprep.subr.mxu0 0.0
        %2022 = vmatpush1.msra.mxu0 0.0
        %2023 = vmatprep.subr.mxu0 0.0
        %2024 = vmatpush1.msra.mxu0 0.0
        %2025 = vmatprep.subr.mxu0 0.0
        %2026 = vmatpush1.msra.mxu0 0.0
        %2027 = vmatprep.subr.mxu0 0.0
        %2028 = vmatpush1.msra.mxu0 0.0
        %2029 = vmatprep.subr.mxu0 0.0
        %2030 = vmatpush1.msra.mxu0 0.0
        %2031 = vmatprep.mubr.f32.mxu0 0.0
        %2032 = vmatmul.mubr.f32.gmra.mrb[0].mxu0 %v1808
        %v2033 = vpop.f32.mrb[0].mxu0
        %v2034 = vadd.f32 0.0, %v2033
        %v2035 = vpop.f32.mrb[0].mxu0
        %v2036 = vadd.f32 0.0, %v2035
        %2037 = vmatprep.mubr.f32.mxu0 0.0
        %2038 = vmatmul.mubr.f32.gmra.mrb[0].mxu0 %v1811
        %v2039 = vpop.f32.mrb[0].mxu0
        %v2040 = vadd.f32 0.0, %v2039
        %v2041 = vpop.f32.mrb[0].mxu0
        %v2042 = vadd.f32 0.0, %v2041
        %2043 = vdwg.mxu0
        %2044 = vmatprep.subr.mxu0 %v1580
        %2045 = vmatpush1.msra.mxu0 %v1579
        %2046 = vmatprep.subr.mxu0 %v1612
        %2047 = vmatpush1.msra.mxu0 %v1611
        %2048 = vmatprep.subr.mxu0 %v1644
        %2049 = vmatpush1.msra.mxu0 %v1643
        %2050 = vmatprep.subr.mxu0 %v1676
        %2051 = vmatpush1.msra.mxu0 %v1675
        %2052 = vmatprep.subr.mxu0 %v1548
        %2053 = vmatpush1.msra.mxu0 %v1547
        %2054 = vmatprep.subr.mxu0 %v1708
        %2055 = vmatpush1.msra.mxu0 %v1707
        %2056 = vmatprep.subr.mxu0 %v1740
        %2057 = vmatpush1.msra.mxu0 %v1739
        %2058 = vmatprep.subr.mxu0 %v1772
        %2059 = vmatpush1.msra.mxu0 %v1771
        %2060 = vmatprep.subr.mxu0 %v1804
        %2061 = vmatpush1.msra.mxu0 %v1803
        %2062 = vmatprep.subr.mxu0 0.0
        %2063 = vmatpush1.msra.mxu0 0.0
        %2064 = vmatprep.subr.mxu0 0.0
        %2065 = vmatpush1.msra.mxu0 0.0
        %2066 = vmatprep.subr.mxu0 0.0
        %2067 = vmatpush1.msra.mxu0 0.0
        %2068 = vmatprep.subr.mxu0 0.0
        %2069 = vmatpush1.msra.mxu0 0.0
        %2070 = vmatprep.subr.mxu0 0.0
        %2071 = vmatpush1.msra.mxu0 0.0
        %2072 = vmatprep.subr.mxu0 0.0
        %2073 = vmatpush1.msra.mxu0 0.0
        %2074 = vmatprep.subr.mxu0 0.0
        %2075 = vmatpush1.msra.mxu0 0.0
        %2076 = vmatprep.subr.mxu0 0.0
        %2077 = vmatpush1.msra.mxu0 0.0
        %2078 = vmatprep.subr.mxu0 0.0
        %2079 = vmatpush1.msra.mxu0 0.0
        %2080 = vmatprep.subr.mxu0 0.0
        %2081 = vmatpush1.msra.mxu0 0.0
        %2082 = vmatprep.subr.mxu0 0.0
        %2083 = vmatpush1.msra.mxu0 0.0
        %2084 = vmatprep.subr.mxu0 0.0
        %2085 = vmatpush1.msra.mxu0 0.0
        %2086 = vmatprep.subr.mxu0 0.0
        %2087 = vmatpush1.msra.mxu0 0.0
        %2088 = vmatprep.subr.mxu0 0.0
        %2089 = vmatpush1.msra.mxu0 0.0
        %2090 = vmatprep.subr.mxu0 0.0
        %2091 = vmatpush1.msra.mxu0 0.0
        %2092 = vmatprep.subr.mxu0 0.0
        %2093 = vmatpush1.msra.mxu0 0.0
        %2094 = vmatprep.subr.mxu0 0.0
        %2095 = vmatpush1.msra.mxu0 0.0
        %2096 = vmatprep.subr.mxu0 0.0
        %2097 = vmatpush1.msra.mxu0 0.0
        %2098 = vmatprep.subr.mxu0 0.0
        %2099 = vmatpush1.msra.mxu0 0.0
        %2100 = vmatprep.subr.mxu0 0.0
        %2101 = vmatpush1.msra.mxu0 0.0
        %2102 = vmatprep.subr.mxu0 0.0
        %2103 = vmatpush1.msra.mxu0 0.0
        %2104 = vmatprep.subr.mxu0 0.0
        %2105 = vmatpush1.msra.mxu0 0.0
        %2106 = vmatprep.subr.mxu0 0.0
        %2107 = vmatpush1.msra.mxu0 0.0
        %2108 = vmatprep.mubr.f32.mxu0 0.0
        %2109 = vmatmul.mubr.f32.gmra.mrb[0].mxu0 %v1808
        %v2110 = vpop.f32.mrb[0].mxu0
        %v2111 = vadd.f32 0.0, %v2110
        %v2112 = vpop.f32.mrb[0].mxu0
        %v2113 = vadd.f32 0.0, %v2112
        %2114 = vmatprep.mubr.f32.mxu0 0.0
        %2115 = vmatmul.mubr.f32.gmra.mrb[0].mxu0 %v1811
        %v2116 = vpop.f32.mrb[0].mxu0
        %v2117 = vadd.f32 0.0, %v2116
        %v2118 = vpop.f32.mrb[0].mxu0
        %v2119 = vadd.f32 0.0, %v2118
        %2120 = vdwg.mxu0
        %v2121 = vld [vmem:[%s9] sm:$0xff]
        %v2122 = vld [vmem:[%s9 + $0x8] sm:$0xff]
        %2124 = vset.pattern.permute.xlu0 0
        %2125 = vperm.xlu0 %2124, %v2121
        %v2126 = vpop.permute.xlu0 %2125
        %2129 = vset.pattern.permute.xlu0 0
        %2130 = vperm.xlu0 %2129, %v2122
        %v2131 = vpop.permute.xlu0 %2130
        %v2133 = vmul.f32 %v1880, %v2126
        %v2134 = vmul.f32 %v1882, %v2126
        %v2135 = vmul.f32 %v1957, %v2126
        %v2136 = vmul.f32 %v1959, %v2126
        %v2137 = vmul.f32 %v2034, %v2126
        %v2138 = vmul.f32 %v2036, %v2126
        %v2139 = vmul.f32 %v2111, %v2126
        %v2140 = vmul.f32 %v2113, %v2126
        %v2141 = vmul.f32 %v1886, %v2131
        %v2142 = vmul.f32 %v1888, %v2131
        %v2143 = vmul.f32 %v1963, %v2131
        %v2144 = vmul.f32 %v1965, %v2131
        %v2145 = vmul.f32 %v2040, %v2131
        %v2146 = vmul.f32 %v2042, %v2131
        %v2147 = vmul.f32 %v2117, %v2131
        %v2148 = vmul.f32 %v2119, %v2131
        %v2149 = vld [vmem:[%s10] sm:$0xff]
        %v2150 = vld [vmem:[%s10 + $0x8] sm:$0xff]
        %2152 = vset.pattern.permute.xlu0 0
        %2153 = vperm.xlu0 %2152, %v2149
        %v2154 = vpop.permute.xlu0 %2153
        %2157 = vset.pattern.permute.xlu0 0
        %2158 = vperm.xlu0 %2157, %v2150
        %v2159 = vpop.permute.xlu0 %2158
        %v2161 = vadd.f32 %v2133, %v2154
        %v2162 = vadd.f32 %v2134, %v2154
        %v2163 = vadd.f32 %v2135, %v2154
        %v2164 = vadd.f32 %v2136, %v2154
        %v2165 = vadd.f32 %v2137, %v2154
        %v2166 = vadd.f32 %v2138, %v2154
        %v2167 = vadd.f32 %v2139, %v2154
        %v2168 = vadd.f32 %v2140, %v2154
        %v2169 = vadd.f32 %v2141, %v2159
        %v2170 = vadd.f32 %v2142, %v2159
        %v2171 = vadd.f32 %v2143, %v2159
        %v2172 = vadd.f32 %v2144, %v2159
        %v2173 = vadd.f32 %v2145, %v2159
        %v2174 = vadd.f32 %v2146, %v2159
        %v2175 = vadd.f32 %v2147, %v2159
        %v2176 = vadd.f32 %v2148, %v2159
        %v2177 = vmax.f32 %v2161, 0.0
        %v2178 = vmax.f32 %v2162, 0.0
        %v2179 = vmax.f32 %v2163, 0.0
        %v2180 = vmax.f32 %v2164, 0.0
        %v2181 = vmax.f32 %v2165, 0.0
        %v2182 = vmax.f32 %v2166, 0.0
        %v2183 = vmax.f32 %v2167, 0.0
        %v2184 = vmax.f32 %v2168, 0.0
        %v2185 = vmax.f32 %v2169, 0.0
        %v2186 = vmax.f32 %v2170, 0.0
        %v2187 = vmax.f32 %v2171, 0.0
        %v2188 = vmax.f32 %v2172, 0.0
        %v2189 = vmax.f32 %v2173, 0.0
        %v2190 = vmax.f32 %v2174, 0.0
        %v2191 = vmax.f32 %v2175, 0.0
        %v2192 = vmax.f32 %v2176, 0.0
        %2193 = vrot.lane.b32.xlu0 %v2177, 127
        %v2194 = vpop.permute.xlu0 %2193
        %2195 = vrot.lane.b32.xlu0 %v2185, 127
        %v2196 = vpop.permute.xlu0 %2195
        %2197 = vrot.lane.b32.xlu0 %v2178, 127
        %v2198 = vpop.permute.xlu0 %2197
        %2199 = vrot.lane.b32.xlu0 %v2186, 127
        %v2200 = vpop.permute.xlu0 %2199
        %2201 = vrot.lane.b32.xlu0 %v2179, 127
        %v2202 = vpop.permute.xlu0 %2201
        %2203 = vrot.lane.b32.xlu0 %v2187, 127
        %v2204 = vpop.permute.xlu0 %2203
        %2205 = vrot.lane.b32.xlu0 %v2180, 127
        %v2206 = vpop.permute.xlu0 %2205
        %2207 = vrot.lane.b32.xlu0 %v2188, 127
        %v2208 = vpop.permute.xlu0 %2207
        %2209 = vrot.lane.b32.xlu0 %v2181, 127
        %v2210 = vpop.permute.xlu0 %2209
        %2211 = vrot.lane.b32.xlu0 %v2189, 127
        %v2212 = vpop.permute.xlu0 %2211
        %2213 = vrot.lane.b32.xlu0 %v2182, 127
        %v2214 = vpop.permute.xlu0 %2213
        %2215 = vrot.lane.b32.xlu0 %v2190, 127
        %v2216 = vpop.permute.xlu0 %2215
        %2217 = vrot.lane.b32.xlu0 %v2183, 127
        %v2218 = vpop.permute.xlu0 %2217
        %2219 = vrot.lane.b32.xlu0 %v2191, 127
        %v2220 = vpop.permute.xlu0 %2219
        %2221 = vrot.lane.b32.xlu0 %v2184, 127
        %v2222 = vpop.permute.xlu0 %2221
        %2223 = vrot.lane.b32.xlu0 %v2192, 127
        %v2224 = vpop.permute.xlu0 %2223
        %v2225 = vsel %vm928, %v2218, %v2222
        %v2226 = vsel %vm928, %v2220, %v2224
        %v2227 = vsel %vm928, %v2214, %v2218
        %v2228 = vsel %vm928, %v2216, %v2220
        %v2229 = vsel %vm928, %v2210, %v2214
        %v2230 = vsel %vm928, %v2212, %v2216
        %v2231 = vsel %vm928, %v2206, %v2210
        %v2232 = vsel %vm928, %v2208, %v2212
        %v2233 = vsel %vm928, %v2202, %v2206
        %v2234 = vsel %vm928, %v2204, %v2208
        %v2235 = vsel %vm928, %v2198, %v2202
        %v2236 = vsel %vm928, %v2200, %v2204
        %v2237 = vsel %vm928, %v2194, %v2198
        %v2238 = vsel %vm928, %v2196, %v2200
        %v2239 = vsel %vm928, %v2222, %v2194
        %v2240 = vsel %vm928, %v2224, %v2196
        %v2241 = vmax.f32 %v2177, %v2237
        %v2242 = vmax.f32 %v2178, %v2235
        %v2243 = vmax.f32 %v2179, %v2233
        %v2244 = vmax.f32 %v2180, %v2231
        %v2245 = vmax.f32 %v2181, %v2229
        %v2246 = vmax.f32 %v2182, %v2227
        %v2247 = vmax.f32 %v2183, %v2225
        %v2248 = vmax.f32 %v2184, %v2239
        %v2249 = vmax.f32 %v2185, %v2238
        %v2250 = vmax.f32 %v2186, %v2236
        %v2251 = vmax.f32 %v2187, %v2234
        %v2252 = vmax.f32 %v2188, %v2232
        %v2253 = vmax.f32 %v2189, %v2230
        %v2254 = vmax.f32 %v2190, %v2228
        %v2255 = vmax.f32 %v2191, %v2226
        %v2256 = vmax.f32 %v2192, %v2240
        %2257 = vrot.lane.b32.xlu0 %v2241, 112
        %v2258 = vpop.permute.xlu0 %2257
        %2259 = vrot.lane.b32.xlu0 %v2249, 112
        %v2260 = vpop.permute.xlu0 %2259
        %2261 = vrot.lane.b32.xlu0 %v2242, 112
        %v2262 = vpop.permute.xlu0 %2261
        %2263 = vrot.lane.b32.xlu0 %v2250, 112
        %v2264 = vpop.permute.xlu0 %2263
        %2265 = vrot.lane.b32.xlu0 %v2243, 112
        %v2266 = vpop.permute.xlu0 %2265
        %2267 = vrot.lane.b32.xlu0 %v2251, 112
        %v2268 = vpop.permute.xlu0 %2267
        %2269 = vrot.lane.b32.xlu0 %v2244, 112
        %v2270 = vpop.permute.xlu0 %2269
        %2271 = vrot.lane.b32.xlu0 %v2252, 112
        %v2272 = vpop.permute.xlu0 %2271
        %2273 = vrot.lane.b32.xlu0 %v2245, 112
        %v2274 = vpop.permute.xlu0 %2273
        %2275 = vrot.lane.b32.xlu0 %v2253, 112
        %v2276 = vpop.permute.xlu0 %2275
        %2277 = vrot.lane.b32.xlu0 %v2246, 112
        %v2278 = vpop.permute.xlu0 %2277
        %2279 = vrot.lane.b32.xlu0 %v2254, 112
        %v2280 = vpop.permute.xlu0 %2279
        %2281 = vrot.lane.b32.xlu0 %v2247, 112
        %v2282 = vpop.permute.xlu0 %2281
        %2283 = vrot.lane.b32.xlu0 %v2255, 112
        %v2284 = vpop.permute.xlu0 %2283
        %2285 = vrot.lane.b32.xlu0 %v2248, 112
        %v2286 = vpop.permute.xlu0 %2285
        %2287 = vrot.lane.b32.xlu0 %v2256, 112
        %v2288 = vpop.permute.xlu0 %2287
        %v2289 = vsel %vm1084, %v2282, %v2286
        %v2290 = vsel %vm1084, %v2284, %v2288
        %v2291 = vsel %vm1084, %v2278, %v2282
        %v2292 = vsel %vm1084, %v2280, %v2284
        %v2293 = vsel %vm1084, %v2274, %v2278
        %v2294 = vsel %vm1084, %v2276, %v2280
        %v2295 = vsel %vm1084, %v2270, %v2274
        %v2296 = vsel %vm1084, %v2272, %v2276
        %v2297 = vsel %vm1084, %v2266, %v2270
        %v2298 = vsel %vm1084, %v2268, %v2272
        %v2299 = vsel %vm1084, %v2262, %v2266
        %v2300 = vsel %vm1084, %v2264, %v2268
        %v2301 = vsel %vm1084, %v2258, %v2262
        %v2302 = vsel %vm1084, %v2260, %v2264
        %v2303 = vsel %vm1084, %v2286, %v2258
        %v2304 = vsel %vm1084, %v2288, %v2260
        %v2305 = vmax.f32 %v2241, %v2301
        %v2306 = vmax.f32 %v2242, %v2299
        %v2307 = vmax.f32 %v2243, %v2297
        %v2308 = vmax.f32 %v2244, %v2295
        %v2309 = vmax.f32 %v2245, %v2293
        %v2310 = vmax.f32 %v2246, %v2291
        %v2311 = vmax.f32 %v2247, %v2289
        %v2312 = vmax.f32 %v2248, %v2303
        %v2313 = vmax.f32 %v2249, %v2302
        %v2314 = vmax.f32 %v2250, %v2300
        %v2315 = vmax.f32 %v2251, %v2298
        %v2316 = vmax.f32 %v2252, %v2296
        %v2317 = vmax.f32 %v2253, %v2294
        %v2318 = vmax.f32 %v2254, %v2292
        %v2319 = vmax.f32 %v2255, %v2290
        %v2320 = vmax.f32 %v2256, %v2304
        %v2321 = vld [vmem:[#allocation2] sm:$0xff]
        %v2322 = vld [vmem:[#allocation2 + $0x8] sm:$0xff]
        %v2323 = vld [vmem:[#allocation2 + $0x10] sm:$0xff]
        %v2324 = vld [vmem:[#allocation2 + $0x18] sm:$0xff]
        %v2325 = vld [vmem:[#allocation2 + $0x20] sm:$0xff]
        %v2326 = vld [vmem:[#allocation2 + $0x28] sm:$0xff]
        %v2327 = vld [vmem:[#allocation2 + $0x30] sm:$0xff]
        %v2328 = vld [vmem:[#allocation2 + $0x38] sm:$0xff]
        %v2329 = vld [vmem:[#allocation2 + $0x40] sm:$0xff]
        %v2330 = vld [vmem:[#allocation2 + $0x48] sm:$0xff]
        %v2331 = vld [vmem:[#allocation2 + $0x50] sm:$0xff]
        %v2332 = vld [vmem:[#allocation2 + $0x58] sm:$0xff]
        %v2333 = vld [vmem:[#allocation2 + $0x60] sm:$0xff]
        %v2334 = vld [vmem:[#allocation2 + $0x68] sm:$0xff]
        %v2335 = vld [vmem:[#allocation2 + $0x70] sm:$0xff]
        %v2336 = vld [vmem:[#allocation2 + $0x78] sm:$0xff]
        %v2337 = vld [vmem:[#allocation2 + $0x80] sm:$0xff]
        %v2338 = vld [vmem:[#allocation2 + $0x88] sm:$0xff]
        %v2339 = vld [vmem:[#allocation2 + $0x90] sm:$0xff]
        %v2340 = vld [vmem:[#allocation2 + $0x98] sm:$0xff]
        %v2341 = vld [vmem:[#allocation2 + $0xa0] sm:$0xff]
        %v2342 = vld [vmem:[#allocation2 + $0xa8] sm:$0xff]
        %v2343 = vld [vmem:[#allocation2 + $0xb0] sm:$0xff]
        %v2344 = vld [vmem:[#allocation2 + $0xb8] sm:$0xff]
        %v2345 = vld [vmem:[#allocation2 + $0xc0] sm:$0xff]
        %v2346 = vld [vmem:[#allocation2 + $0xc8] sm:$0xff]
        %v2347 = vld [vmem:[#allocation2 + $0xd0] sm:$0xff]
        %v2348 = vld [vmem:[#allocation2 + $0xd8] sm:$0xff]
        %v2349 = vld [vmem:[#allocation2 + $0xe0] sm:$0xff]
        %v2350 = vld [vmem:[#allocation2 + $0xe8] sm:$0xff]
        %v2351 = vld [vmem:[#allocation2 + $0xf0] sm:$0xff]
        %v2352 = vld [vmem:[#allocation2 + $0xf8] sm:$0xff]
        %v2353 = vld [vmem:[#allocation2 + $0x100] sm:$0xff]
        %v2354 = vld [vmem:[#allocation2 + $0x108] sm:$0xff]
        %v2355 = vld [vmem:[#allocation2 + $0x110] sm:$0xff]
        %v2356 = vld [vmem:[#allocation2 + $0x118] sm:$0xff]
        %v2357 = vld [vmem:[#allocation2 + $0x120] sm:$0xff]
        %v2358 = vld [vmem:[#allocation2 + $0x128] sm:$0xff]
        %v2359 = vld [vmem:[#allocation2 + $0x130] sm:$0xff]
        %v2360 = vld [vmem:[#allocation2 + $0x138] sm:$0xff]
        %v2361 = vld [vmem:[#allocation2 + $0x140] sm:$0xff]
        %v2362 = vld [vmem:[#allocation2 + $0x148] sm:$0xff]
        %v2363 = vld [vmem:[#allocation2 + $0x150] sm:$0xff]
        %v2364 = vld [vmem:[#allocation2 + $0x158] sm:$0xff]
        %v2365 = vld [vmem:[#allocation2 + $0x160] sm:$0xff]
        %v2366 = vld [vmem:[#allocation2 + $0x168] sm:$0xff]
        %v2367 = vld [vmem:[#allocation2 + $0x170] sm:$0xff]
        %v2368 = vld [vmem:[#allocation2 + $0x178] sm:$0xff]
        %v2369 = vld [vmem:[#allocation2 + $0x180] sm:$0xff]
        %v2370 = vld [vmem:[#allocation2 + $0x188] sm:$0xff]
        %v2371 = vld [vmem:[#allocation2 + $0x190] sm:$0xff]
        %v2372 = vld [vmem:[#allocation2 + $0x198] sm:$0xff]
        %v2373 = vld [vmem:[#allocation2 + $0x1a0] sm:$0xff]
        %v2374 = vld [vmem:[#allocation2 + $0x1a8] sm:$0xff]
        %v2375 = vld [vmem:[#allocation2 + $0x1b0] sm:$0xff]
        %v2376 = vld [vmem:[#allocation2 + $0x1b8] sm:$0xff]
        %v2377 = vld [vmem:[#allocation2 + $0x1c0] sm:$0xff]
        %v2378 = vld [vmem:[#allocation2 + $0x1c8] sm:$0xff]
        %v2379 = vld [vmem:[#allocation2 + $0x1d0] sm:$0xff]
        %v2380 = vld [vmem:[#allocation2 + $0x1d8] sm:$0xff]
        %v2381 = vld [vmem:[#allocation2 + $0x1e0] sm:$0xff]
        %v2382 = vld [vmem:[#allocation2 + $0x1e8] sm:$0xff]
        %v2383 = vld [vmem:[#allocation2 + $0x1f0] sm:$0xff]
        %v2384 = vld [vmem:[#allocation2 + $0x1f8] sm:$0xff]
        %v2385 = vld [vmem:[#allocation2 + $0x200] sm:$0xff]
        %v2386 = vld [vmem:[#allocation2 + $0x208] sm:$0xff]
        %v2387 = vld [vmem:[#allocation2 + $0x210] sm:$0xff]
        %v2388 = vld [vmem:[#allocation2 + $0x218] sm:$0xff]
        %v2389 = vld [vmem:[#allocation2 + $0x220] sm:$0xff]
        %v2390 = vld [vmem:[#allocation2 + $0x228] sm:$0xff]
        %v2391 = vld [vmem:[#allocation2 + $0x230] sm:$0xff]
        %v2392 = vld [vmem:[#allocation2 + $0x238] sm:$0xff]
        %v2393 = vld [vmem:[#allocation2 + $0x240] sm:$0xff]
        %v2394 = vld [vmem:[#allocation2 + $0x248] sm:$0xff]
        %v2395 = vld [vmem:[#allocation2 + $0x250] sm:$0xff]
        %v2396 = vld [vmem:[#allocation2 + $0x258] sm:$0xff]
        %v2397 = vld [vmem:[#allocation2 + $0x260] sm:$0xff]
        %v2398 = vld [vmem:[#allocation2 + $0x268] sm:$0xff]
        %v2399 = vld [vmem:[#allocation2 + $0x270] sm:$0xff]
        %v2400 = vld [vmem:[#allocation2 + $0x278] sm:$0xff]
        %v2401 = vld [vmem:[#allocation2 + $0x280] sm:$0xff]
        %v2402 = vld [vmem:[#allocation2 + $0x288] sm:$0xff]
        %v2403 = vld [vmem:[#allocation2 + $0x290] sm:$0xff]
        %v2404 = vld [vmem:[#allocation2 + $0x298] sm:$0xff]
        %v2405 = vld [vmem:[#allocation2 + $0x2a0] sm:$0xff]
        %v2406 = vld [vmem:[#allocation2 + $0x2a8] sm:$0xff]
        %v2407 = vld [vmem:[#allocation2 + $0x2b0] sm:$0xff]
        %v2408 = vld [vmem:[#allocation2 + $0x2b8] sm:$0xff]
        %v2409 = vld [vmem:[#allocation2 + $0x2c0] sm:$0xff]
        %v2410 = vld [vmem:[#allocation2 + $0x2c8] sm:$0xff]
        %v2411 = vld [vmem:[#allocation2 + $0x2d0] sm:$0xff]
        %v2412 = vld [vmem:[#allocation2 + $0x2d8] sm:$0xff]
        %v2413 = vld [vmem:[#allocation2 + $0x2e0] sm:$0xff]
        %v2414 = vld [vmem:[#allocation2 + $0x2e8] sm:$0xff]
        %v2415 = vld [vmem:[#allocation2 + $0x2f0] sm:$0xff]
        %v2416 = vld [vmem:[#allocation2 + $0x2f8] sm:$0xff]
        %v2417 = vld [vmem:[#allocation2 + $0x300] sm:$0xff]
        %v2418 = vld [vmem:[#allocation2 + $0x308] sm:$0xff]
        %v2419 = vld [vmem:[#allocation2 + $0x310] sm:$0xff]
        %v2420 = vld [vmem:[#allocation2 + $0x318] sm:$0xff]
        %v2421 = vld [vmem:[#allocation2 + $0x320] sm:$0xff]
        %v2422 = vld [vmem:[#allocation2 + $0x328] sm:$0xff]
        %v2423 = vld [vmem:[#allocation2 + $0x330] sm:$0xff]
        %v2424 = vld [vmem:[#allocation2 + $0x338] sm:$0xff]
        %v2425 = vld [vmem:[#allocation2 + $0x340] sm:$0xff]
        %v2426 = vld [vmem:[#allocation2 + $0x348] sm:$0xff]
        %v2427 = vld [vmem:[#allocation2 + $0x350] sm:$0xff]
        %v2428 = vld [vmem:[#allocation2 + $0x358] sm:$0xff]
        %v2429 = vld [vmem:[#allocation2 + $0x360] sm:$0xff]
        %v2430 = vld [vmem:[#allocation2 + $0x368] sm:$0xff]
        %v2431 = vld [vmem:[#allocation2 + $0x370] sm:$0xff]
        %v2432 = vld [vmem:[#allocation2 + $0x378] sm:$0xff]
        %v2433 = vld [vmem:[#allocation2 + $0x380] sm:$0xff]
        %v2434 = vld [vmem:[#allocation2 + $0x388] sm:$0xff]
        %v2435 = vld [vmem:[#allocation2 + $0x390] sm:$0xff]
        %v2436 = vld [vmem:[#allocation2 + $0x398] sm:$0xff]
        %v2437 = vld [vmem:[#allocation2 + $0x3a0] sm:$0xff]
        %v2438 = vld [vmem:[#allocation2 + $0x3a8] sm:$0xff]
        %v2439 = vld [vmem:[#allocation2 + $0x3b0] sm:$0xff]
        %v2440 = vld [vmem:[#allocation2 + $0x3b8] sm:$0xff]
        %v2441 = vld [vmem:[#allocation2 + $0x3c0] sm:$0xff]
        %v2442 = vld [vmem:[#allocation2 + $0x3c8] sm:$0xff]
        %v2443 = vld [vmem:[#allocation2 + $0x3d0] sm:$0xff]
        %v2444 = vld [vmem:[#allocation2 + $0x3d8] sm:$0xff]
        %v2445 = vld [vmem:[#allocation2 + $0x3e0] sm:$0xff]
        %v2446 = vld [vmem:[#allocation2 + $0x3e8] sm:$0xff]
        %v2447 = vld [vmem:[#allocation2 + $0x3f0] sm:$0xff]
        %v2448 = vld [vmem:[#allocation2 + $0x3f8] sm:$0xff]
        %v2449 = vld [vmem:[#allocation2 + $0x400] sm:$0xff]
        %v2450 = vld [vmem:[#allocation2 + $0x408] sm:$0xff]
        %v2451 = vld [vmem:[#allocation2 + $0x410] sm:$0xff]
        %v2452 = vld [vmem:[#allocation2 + $0x418] sm:$0xff]
        %v2453 = vld [vmem:[#allocation2 + $0x420] sm:$0xff]
        %v2454 = vld [vmem:[#allocation2 + $0x428] sm:$0xff]
        %v2455 = vld [vmem:[#allocation2 + $0x430] sm:$0xff]
        %v2456 = vld [vmem:[#allocation2 + $0x438] sm:$0xff]
        %v2457 = vld [vmem:[#allocation2 + $0x440] sm:$0xff]
        %v2458 = vld [vmem:[#allocation2 + $0x448] sm:$0xff]
        %v2459 = vld [vmem:[#allocation2 + $0x450] sm:$0xff]
        %v2460 = vld [vmem:[#allocation2 + $0x458] sm:$0xff]
        %v2461 = vld [vmem:[#allocation2 + $0x460] sm:$0xff]
        %v2462 = vld [vmem:[#allocation2 + $0x468] sm:$0xff]
        %v2463 = vld [vmem:[#allocation2 + $0x470] sm:$0xff]
        %v2464 = vld [vmem:[#allocation2 + $0x478] sm:$0xff]
        %v2465 = vld [vmem:[#allocation2 + $0x480] sm:$0xff]
        %v2466 = vld [vmem:[#allocation2 + $0x488] sm:$0xff]
        %v2467 = vld [vmem:[#allocation2 + $0x490] sm:$0xff]
        %v2468 = vld [vmem:[#allocation2 + $0x498] sm:$0xff]
        %v2469 = vld [vmem:[#allocation2 + $0x4a0] sm:$0xff]
        %v2470 = vld [vmem:[#allocation2 + $0x4a8] sm:$0xff]
        %v2471 = vld [vmem:[#allocation2 + $0x4b0] sm:$0xff]
        %v2472 = vld [vmem:[#allocation2 + $0x4b8] sm:$0xff]
        %v2473 = vld [vmem:[#allocation2 + $0x4c0] sm:$0xff]
        %v2474 = vld [vmem:[#allocation2 + $0x4c8] sm:$0xff]
        %v2475 = vld [vmem:[#allocation2 + $0x4d0] sm:$0xff]
        %v2476 = vld [vmem:[#allocation2 + $0x4d8] sm:$0xff]
        %v2477 = vld [vmem:[#allocation2 + $0x4e0] sm:$0xff]
        %v2478 = vld [vmem:[#allocation2 + $0x4e8] sm:$0xff]
        %v2479 = vld [vmem:[#allocation2 + $0x4f0] sm:$0xff]
        %v2480 = vld [vmem:[#allocation2 + $0x4f8] sm:$0xff]
        %v2481 = vld [vmem:[#allocation2 + $0x500] sm:$0xff]
        %v2482 = vld [vmem:[#allocation2 + $0x508] sm:$0xff]
        %v2483 = vld [vmem:[#allocation2 + $0x510] sm:$0xff]
        %v2484 = vld [vmem:[#allocation2 + $0x518] sm:$0xff]
        %v2485 = vld [vmem:[#allocation2 + $0x520] sm:$0xff]
        %v2486 = vld [vmem:[#allocation2 + $0x528] sm:$0xff]
        %v2487 = vld [vmem:[#allocation2 + $0x530] sm:$0xff]
        %v2488 = vld [vmem:[#allocation2 + $0x538] sm:$0xff]
        %v2489 = vld [vmem:[#allocation2 + $0x540] sm:$0xff]
        %v2490 = vld [vmem:[#allocation2 + $0x548] sm:$0xff]
        %v2491 = vld [vmem:[#allocation2 + $0x550] sm:$0xff]
        %v2492 = vld [vmem:[#allocation2 + $0x558] sm:$0xff]
        %v2493 = vld [vmem:[#allocation2 + $0x560] sm:$0xff]
        %v2494 = vld [vmem:[#allocation2 + $0x568] sm:$0xff]
        %v2495 = vld [vmem:[#allocation2 + $0x570] sm:$0xff]
        %v2496 = vld [vmem:[#allocation2 + $0x578] sm:$0xff]
        %v2497 = vld [vmem:[#allocation2 + $0x580] sm:$0xff]
        %v2498 = vld [vmem:[#allocation2 + $0x588] sm:$0xff]
        %v2499 = vld [vmem:[#allocation2 + $0x590] sm:$0xff]
        %v2500 = vld [vmem:[#allocation2 + $0x598] sm:$0xff]
        %v2501 = vld [vmem:[#allocation2 + $0x5a0] sm:$0xff]
        %v2502 = vld [vmem:[#allocation2 + $0x5a8] sm:$0xff]
        %v2503 = vld [vmem:[#allocation2 + $0x5b0] sm:$0xff]
        %v2504 = vld [vmem:[#allocation2 + $0x5b8] sm:$0xff]
        %v2505 = vld [vmem:[#allocation2 + $0x5c0] sm:$0xff]
        %v2506 = vld [vmem:[#allocation2 + $0x5c8] sm:$0xff]
        %v2507 = vld [vmem:[#allocation2 + $0x5d0] sm:$0xff]
        %v2508 = vld [vmem:[#allocation2 + $0x5d8] sm:$0xff]
        %v2509 = vld [vmem:[#allocation2 + $0x5e0] sm:$0xff]
        %v2510 = vld [vmem:[#allocation2 + $0x5e8] sm:$0xff]
        %v2511 = vld [vmem:[#allocation2 + $0x5f0] sm:$0xff]
        %v2512 = vld [vmem:[#allocation2 + $0x5f8] sm:$0xff]
        %v2513 = vld [vmem:[#allocation2 + $0x600] sm:$0xff]
        %v2514 = vld [vmem:[#allocation2 + $0x608] sm:$0xff]
        %v2515 = vld [vmem:[#allocation2 + $0x610] sm:$0xff]
        %v2516 = vld [vmem:[#allocation2 + $0x618] sm:$0xff]
        %v2517 = vld [vmem:[#allocation2 + $0x620] sm:$0xff]
        %v2518 = vld [vmem:[#allocation2 + $0x628] sm:$0xff]
        %v2519 = vld [vmem:[#allocation2 + $0x630] sm:$0xff]
        %v2520 = vld [vmem:[#allocation2 + $0x638] sm:$0xff]
        %v2521 = vld [vmem:[#allocation2 + $0x640] sm:$0xff]
        %v2522 = vld [vmem:[#allocation2 + $0x648] sm:$0xff]
        %v2523 = vld [vmem:[#allocation2 + $0x650] sm:$0xff]
        %v2524 = vld [vmem:[#allocation2 + $0x658] sm:$0xff]
        %v2525 = vld [vmem:[#allocation2 + $0x660] sm:$0xff]
        %v2526 = vld [vmem:[#allocation2 + $0x668] sm:$0xff]
        %v2527 = vld [vmem:[#allocation2 + $0x670] sm:$0xff]
        %v2528 = vld [vmem:[#allocation2 + $0x678] sm:$0xff]
        %v2529 = vld [vmem:[#allocation2 + $0x680] sm:$0xff]
        %v2530 = vld [vmem:[#allocation2 + $0x688] sm:$0xff]
        %v2531 = vld [vmem:[#allocation2 + $0x690] sm:$0xff]
        %v2532 = vld [vmem:[#allocation2 + $0x698] sm:$0xff]
        %v2533 = vld [vmem:[#allocation2 + $0x6a0] sm:$0xff]
        %v2534 = vld [vmem:[#allocation2 + $0x6a8] sm:$0xff]
        %v2535 = vld [vmem:[#allocation2 + $0x6b0] sm:$0xff]
        %v2536 = vld [vmem:[#allocation2 + $0x6b8] sm:$0xff]
        %v2537 = vld [vmem:[#allocation2 + $0x6c0] sm:$0xff]
        %v2538 = vld [vmem:[#allocation2 + $0x6c8] sm:$0xff]
        %v2539 = vld [vmem:[#allocation2 + $0x6d0] sm:$0xff]
        %v2540 = vld [vmem:[#allocation2 + $0x6d8] sm:$0xff]
        %v2541 = vld [vmem:[#allocation2 + $0x6e0] sm:$0xff]
        %v2542 = vld [vmem:[#allocation2 + $0x6e8] sm:$0xff]
        %v2543 = vld [vmem:[#allocation2 + $0x6f0] sm:$0xff]
        %v2544 = vld [vmem:[#allocation2 + $0x6f8] sm:$0xff]
        %v2545 = vld [vmem:[#allocation2 + $0x700] sm:$0xff]
        %v2546 = vld [vmem:[#allocation2 + $0x708] sm:$0xff]
        %v2547 = vld [vmem:[#allocation2 + $0x710] sm:$0xff]
        %v2548 = vld [vmem:[#allocation2 + $0x718] sm:$0xff]
        %v2549 = vld [vmem:[#allocation2 + $0x720] sm:$0xff]
        %v2550 = vld [vmem:[#allocation2 + $0x728] sm:$0xff]
        %v2551 = vld [vmem:[#allocation2 + $0x730] sm:$0xff]
        %v2552 = vld [vmem:[#allocation2 + $0x738] sm:$0xff]
        %v2553 = vld [vmem:[#allocation2 + $0x740] sm:$0xff]
        %v2554 = vld [vmem:[#allocation2 + $0x748] sm:$0xff]
        %v2555 = vld [vmem:[#allocation2 + $0x750] sm:$0xff]
        %v2556 = vld [vmem:[#allocation2 + $0x758] sm:$0xff]
        %v2557 = vld [vmem:[#allocation2 + $0x760] sm:$0xff]
        %v2558 = vld [vmem:[#allocation2 + $0x768] sm:$0xff]
        %v2559 = vld [vmem:[#allocation2 + $0x770] sm:$0xff]
        %v2560 = vld [vmem:[#allocation2 + $0x778] sm:$0xff]
        %v2561 = vld [vmem:[#allocation2 + $0x780] sm:$0xff]
        %v2562 = vld [vmem:[#allocation2 + $0x788] sm:$0xff]
        %v2563 = vld [vmem:[#allocation2 + $0x790] sm:$0xff]
        %v2564 = vld [vmem:[#allocation2 + $0x798] sm:$0xff]
        %v2565 = vld [vmem:[#allocation2 + $0x7a0] sm:$0xff]
        %v2566 = vld [vmem:[#allocation2 + $0x7a8] sm:$0xff]
        %v2567 = vld [vmem:[#allocation2 + $0x7b0] sm:$0xff]
        %v2568 = vld [vmem:[#allocation2 + $0x7b8] sm:$0xff]
        %v2569 = vld [vmem:[#allocation2 + $0x7c0] sm:$0xff]
        %v2570 = vld [vmem:[#allocation2 + $0x7c8] sm:$0xff]
        %v2571 = vld [vmem:[#allocation2 + $0x7d0] sm:$0xff]
        %v2572 = vld [vmem:[#allocation2 + $0x7d8] sm:$0xff]
        %v2573 = vld [vmem:[#allocation2 + $0x7e0] sm:$0xff]
        %v2574 = vld [vmem:[#allocation2 + $0x7e8] sm:$0xff]
        %v2575 = vld [vmem:[#allocation2 + $0x7f0] sm:$0xff]
        %v2576 = vld [vmem:[#allocation2 + $0x7f8] sm:$0xff]
        %2577 = vmatprep.subr.mxu0 %v2322
        %2578 = vmatpush1.msra.mxu0 %v2321
        %2579 = vmatprep.subr.mxu0 %v2324
        %2580 = vmatpush1.msra.mxu0 %v2323
        %2581 = vmatprep.subr.mxu0 %v2326
        %2582 = vmatpush1.msra.mxu0 %v2325
        %2583 = vmatprep.subr.mxu0 %v2328
        %2584 = vmatpush1.msra.mxu0 %v2327
        %2585 = vmatprep.subr.mxu0 %v2330
        %2586 = vmatpush1.msra.mxu0 %v2329
        %2587 = vmatprep.subr.mxu0 %v2332
        %2588 = vmatpush1.msra.mxu0 %v2331
        %2589 = vmatprep.subr.mxu0 %v2334
        %2590 = vmatpush1.msra.mxu0 %v2333
        %2591 = vmatprep.subr.mxu0 %v2336
        %2592 = vmatpush1.msra.mxu0 %v2335
        %2593 = vmatprep.subr.mxu0 %v2338
        %2594 = vmatpush1.msra.mxu0 %v2337
        %2595 = vmatprep.subr.mxu0 %v2340
        %2596 = vmatpush1.msra.mxu0 %v2339
        %2597 = vmatprep.subr.mxu0 %v2342
        %2598 = vmatpush1.msra.mxu0 %v2341
        %2599 = vmatprep.subr.mxu0 %v2344
        %2600 = vmatpush1.msra.mxu0 %v2343
        %2601 = vmatprep.subr.mxu0 %v2346
        %2602 = vmatpush1.msra.mxu0 %v2345
        %2603 = vmatprep.subr.mxu0 %v2348
        %2604 = vmatpush1.msra.mxu0 %v2347
        %2605 = vmatprep.subr.mxu0 %v2350
        %2606 = vmatpush1.msra.mxu0 %v2349
        %2607 = vmatprep.subr.mxu0 %v2352
        %2608 = vmatpush1.msra.mxu0 %v2351
        %2609 = vmatprep.subr.mxu0 %v2354
        %2610 = vmatpush1.msra.mxu0 %v2353
        %2611 = vmatprep.subr.mxu0 %v2356
        %2612 = vmatpush1.msra.mxu0 %v2355
        %2613 = vmatprep.subr.mxu0 %v2358
        %2614 = vmatpush1.msra.mxu0 %v2357
        %2615 = vmatprep.subr.mxu0 %v2360
        %2616 = vmatpush1.msra.mxu0 %v2359
        %2617 = vmatprep.subr.mxu0 %v2362
        %2618 = vmatpush1.msra.mxu0 %v2361
        %2619 = vmatprep.subr.mxu0 %v2364
        %2620 = vmatpush1.msra.mxu0 %v2363
        %2621 = vmatprep.subr.mxu0 %v2366
        %2622 = vmatpush1.msra.mxu0 %v2365
        %2623 = vmatprep.subr.mxu0 %v2368
        %2624 = vmatpush1.msra.mxu0 %v2367
        %2625 = vmatprep.subr.mxu0 %v2370
        %2626 = vmatpush1.msra.mxu0 %v2369
        %2627 = vmatprep.subr.mxu0 %v2372
        %2628 = vmatpush1.msra.mxu0 %v2371
        %2629 = vmatprep.subr.mxu0 %v2374
        %2630 = vmatpush1.msra.mxu0 %v2373
        %2631 = vmatprep.subr.mxu0 %v2376
        %2632 = vmatpush1.msra.mxu0 %v2375
        %2633 = vmatprep.subr.mxu0 %v2378
        %2634 = vmatpush1.msra.mxu0 %v2377
        %2635 = vmatprep.subr.mxu0 %v2380
        %2636 = vmatpush1.msra.mxu0 %v2379
        %2637 = vmatprep.subr.mxu0 %v2382
        %2638 = vmatpush1.msra.mxu0 %v2381
        %2639 = vmatprep.subr.mxu0 %v2384
        %2640 = vmatpush1.msra.mxu0 %v2383
        %2641 = vmatprep.mubr.f32.mxu0 %v2306
        %2642 = vmatmul.mubr.f32.gmra.mrb[0].mxu0 %v2305
        %v2643 = vpop.f32.mrb[0].mxu0
        %v2644 = vadd.f32 0.0, %v2643
        %v2645 = vpop.f32.mrb[0].mxu0
        %v2646 = vadd.f32 0.0, %v2645
        %2647 = vmatprep.mubr.f32.mxu0 %v2314
        %2648 = vmatmul.mubr.f32.gmra.mrb[0].mxu0 %v2313
        %v2649 = vpop.f32.mrb[0].mxu0
        %v2650 = vadd.f32 0.0, %v2649
        %v2651 = vpop.f32.mrb[0].mxu0
        %v2652 = vadd.f32 0.0, %v2651
        %2653 = vdwg.mxu0
        %2654 = vmatprep.subr.mxu0 %v2386
        %2655 = vmatpush1.msra.mxu0 %v2385
        %2656 = vmatprep.subr.mxu0 %v2388
        %2657 = vmatpush1.msra.mxu0 %v2387
        %2658 = vmatprep.subr.mxu0 %v2390
        %2659 = vmatpush1.msra.mxu0 %v2389
        %2660 = vmatprep.subr.mxu0 %v2392
        %2661 = vmatpush1.msra.mxu0 %v2391
        %2662 = vmatprep.subr.mxu0 %v2394
        %2663 = vmatpush1.msra.mxu0 %v2393
        %2664 = vmatprep.subr.mxu0 %v2396
        %2665 = vmatpush1.msra.mxu0 %v2395
        %2666 = vmatprep.subr.mxu0 %v2398
        %2667 = vmatpush1.msra.mxu0 %v2397
        %2668 = vmatprep.subr.mxu0 %v2400
        %2669 = vmatpush1.msra.mxu0 %v2399
        %2670 = vmatprep.subr.mxu0 %v2402
        %2671 = vmatpush1.msra.mxu0 %v2401
        %2672 = vmatprep.subr.mxu0 %v2404
        %2673 = vmatpush1.msra.mxu0 %v2403
        %2674 = vmatprep.subr.mxu0 %v2406
        %2675 = vmatpush1.msra.mxu0 %v2405
        %2676 = vmatprep.subr.mxu0 %v2408
        %2677 = vmatpush1.msra.mxu0 %v2407
        %2678 = vmatprep.subr.mxu0 %v2410
        %2679 = vmatpush1.msra.mxu0 %v2409
        %2680 = vmatprep.subr.mxu0 %v2412
        %2681 = vmatpush1.msra.mxu0 %v2411
        %2682 = vmatprep.subr.mxu0 %v2414
        %2683 = vmatpush1.msra.mxu0 %v2413
        %2684 = vmatprep.subr.mxu0 %v2416
        %2685 = vmatpush1.msra.mxu0 %v2415
        %2686 = vmatprep.subr.mxu0 %v2418
        %2687 = vmatpush1.msra.mxu0 %v2417
        %2688 = vmatprep.subr.mxu0 %v2420
        %2689 = vmatpush1.msra.mxu0 %v2419
        %2690 = vmatprep.subr.mxu0 %v2422
        %2691 = vmatpush1.msra.mxu0 %v2421
        %2692 = vmatprep.subr.mxu0 %v2424
        %2693 = vmatpush1.msra.mxu0 %v2423
        %2694 = vmatprep.subr.mxu0 %v2426
        %2695 = vmatpush1.msra.mxu0 %v2425
        %2696 = vmatprep.subr.mxu0 %v2428
        %2697 = vmatpush1.msra.mxu0 %v2427
        %2698 = vmatprep.subr.mxu0 %v2430
        %2699 = vmatpush1.msra.mxu0 %v2429
        %2700 = vmatprep.subr.mxu0 %v2432
        %2701 = vmatpush1.msra.mxu0 %v2431
        %2702 = vmatprep.subr.mxu0 %v2434
        %2703 = vmatpush1.msra.mxu0 %v2433
        %2704 = vmatprep.subr.mxu0 %v2436
        %2705 = vmatpush1.msra.mxu0 %v2435
        %2706 = vmatprep.subr.mxu0 %v2438
        %2707 = vmatpush1.msra.mxu0 %v2437
        %2708 = vmatprep.subr.mxu0 %v2440
        %2709 = vmatpush1.msra.mxu0 %v2439
        %2710 = vmatprep.subr.mxu0 %v2442
        %2711 = vmatpush1.msra.mxu0 %v2441
        %2712 = vmatprep.subr.mxu0 %v2444
        %2713 = vmatpush1.msra.mxu0 %v2443
        %2714 = vmatprep.subr.mxu0 %v2446
        %2715 = vmatpush1.msra.mxu0 %v2445
        %2716 = vmatprep.subr.mxu0 %v2448
        %2717 = vmatpush1.msra.mxu0 %v2447
        %2718 = vmatprep.mubr.f32.mxu0 %v2308
        %2719 = vmatmul.mubr.f32.gmra.mrb[0].mxu0 %v2307
        %v2720 = vpop.f32.mrb[0].mxu0
        %v2721 = vadd.f32 %v2644, %v2720
        %v2722 = vpop.f32.mrb[0].mxu0
        %v2723 = vadd.f32 %v2646, %v2722
        %2724 = vmatprep.mubr.f32.mxu0 %v2316
        %2725 = vmatmul.mubr.f32.gmra.mrb[0].mxu0 %v2315
        %v2726 = vpop.f32.mrb[0].mxu0
        %v2727 = vadd.f32 %v2650, %v2726
        %v2728 = vpop.f32.mrb[0].mxu0
        %v2729 = vadd.f32 %v2652, %v2728
        %2730 = vdwg.mxu0
        %2731 = vmatprep.subr.mxu0 %v2450
        %2732 = vmatpush1.msra.mxu0 %v2449
        %2733 = vmatprep.subr.mxu0 %v2452
        %2734 = vmatpush1.msra.mxu0 %v2451
        %2735 = vmatprep.subr.mxu0 %v2454
        %2736 = vmatpush1.msra.mxu0 %v2453
        %2737 = vmatprep.subr.mxu0 %v2456
        %2738 = vmatpush1.msra.mxu0 %v2455
        %2739 = vmatprep.subr.mxu0 %v2458
        %2740 = vmatpush1.msra.mxu0 %v2457
        %2741 = vmatprep.subr.mxu0 %v2460
        %2742 = vmatpush1.msra.mxu0 %v2459
        %2743 = vmatprep.subr.mxu0 %v2462
        %2744 = vmatpush1.msra.mxu0 %v2461
        %2745 = vmatprep.subr.mxu0 %v2464
        %2746 = vmatpush1.msra.mxu0 %v2463
        %2747 = vmatprep.subr.mxu0 %v2466
        %2748 = vmatpush1.msra.mxu0 %v2465
        %2749 = vmatprep.subr.mxu0 %v2468
        %2750 = vmatpush1.msra.mxu0 %v2467
        %2751 = vmatprep.subr.mxu0 %v2470
        %2752 = vmatpush1.msra.mxu0 %v2469
        %2753 = vmatprep.subr.mxu0 %v2472
        %2754 = vmatpush1.msra.mxu0 %v2471
        %2755 = vmatprep.subr.mxu0 %v2474
        %2756 = vmatpush1.msra.mxu0 %v2473
        %2757 = vmatprep.subr.mxu0 %v2476
        %2758 = vmatpush1.msra.mxu0 %v2475
        %2759 = vmatprep.subr.mxu0 %v2478
        %2760 = vmatpush1.msra.mxu0 %v2477
        %2761 = vmatprep.subr.mxu0 %v2480
        %2762 = vmatpush1.msra.mxu0 %v2479
        %2763 = vmatprep.subr.mxu0 %v2482
        %2764 = vmatpush1.msra.mxu0 %v2481
        %2765 = vmatprep.subr.mxu0 %v2484
        %2766 = vmatpush1.msra.mxu0 %v2483
        %2767 = vmatprep.subr.mxu0 %v2486
        %2768 = vmatpush1.msra.mxu0 %v2485
        %2769 = vmatprep.subr.mxu0 %v2488
        %2770 = vmatpush1.msra.mxu0 %v2487
        %2771 = vmatprep.subr.mxu0 %v2490
        %2772 = vmatpush1.msra.mxu0 %v2489
        %2773 = vmatprep.subr.mxu0 %v2492
        %2774 = vmatpush1.msra.mxu0 %v2491
        %2775 = vmatprep.subr.mxu0 %v2494
        %2776 = vmatpush1.msra.mxu0 %v2493
        %2777 = vmatprep.subr.mxu0 %v2496
        %2778 = vmatpush1.msra.mxu0 %v2495
        %2779 = vmatprep.subr.mxu0 %v2498
        %2780 = vmatpush1.msra.mxu0 %v2497
        %2781 = vmatprep.subr.mxu0 %v2500
        %2782 = vmatpush1.msra.mxu0 %v2499
        %2783 = vmatprep.subr.mxu0 %v2502
        %2784 = vmatpush1.msra.mxu0 %v2501
        %2785 = vmatprep.subr.mxu0 %v2504
        %2786 = vmatpush1.msra.mxu0 %v2503
        %2787 = vmatprep.subr.mxu0 %v2506
        %2788 = vmatpush1.msra.mxu0 %v2505
        %2789 = vmatprep.subr.mxu0 %v2508
        %2790 = vmatpush1.msra.mxu0 %v2507
        %2791 = vmatprep.subr.mxu0 %v2510
        %2792 = vmatpush1.msra.mxu0 %v2509
        %2793 = vmatprep.subr.mxu0 %v2512
        %2794 = vmatpush1.msra.mxu0 %v2511
        %2795 = vmatprep.mubr.f32.mxu0 %v2310
        %2796 = vmatmul.mubr.f32.gmra.mrb[0].mxu0 %v2309
        %v2797 = vpop.f32.mrb[0].mxu0
        %v2798 = vadd.f32 %v2721, %v2797
        %v2799 = vpop.f32.mrb[0].mxu0
        %v2800 = vadd.f32 %v2723, %v2799
        %2801 = vmatprep.mubr.f32.mxu0 %v2318
        %2802 = vmatmul.mubr.f32.gmra.mrb[0].mxu0 %v2317
        %v2803 = vpop.f32.mrb[0].mxu0
        %v2804 = vadd.f32 %v2727, %v2803
        %v2805 = vpop.f32.mrb[0].mxu0
        %v2806 = vadd.f32 %v2729, %v2805
        %2807 = vdwg.mxu0
        %2808 = vmatprep.subr.mxu0 %v2514
        %2809 = vmatpush1.msra.mxu0 %v2513
        %2810 = vmatprep.subr.mxu0 %v2516
        %2811 = vmatpush1.msra.mxu0 %v2515
        %2812 = vmatprep.subr.mxu0 %v2518
        %2813 = vmatpush1.msra.mxu0 %v2517
        %2814 = vmatprep.subr.mxu0 %v2520
        %2815 = vmatpush1.msra.mxu0 %v2519
        %2816 = vmatprep.subr.mxu0 %v2522
        %2817 = vmatpush1.msra.mxu0 %v2521
        %2818 = vmatprep.subr.mxu0 %v2524
        %2819 = vmatpush1.msra.mxu0 %v2523
        %2820 = vmatprep.subr.mxu0 %v2526
        %2821 = vmatpush1.msra.mxu0 %v2525
        %2822 = vmatprep.subr.mxu0 %v2528
        %2823 = vmatpush1.msra.mxu0 %v2527
        %2824 = vmatprep.subr.mxu0 %v2530
        %2825 = vmatpush1.msra.mxu0 %v2529
        %2826 = vmatprep.subr.mxu0 %v2532
        %2827 = vmatpush1.msra.mxu0 %v2531
        %2828 = vmatprep.subr.mxu0 %v2534
        %2829 = vmatpush1.msra.mxu0 %v2533
        %2830 = vmatprep.subr.mxu0 %v2536
        %2831 = vmatpush1.msra.mxu0 %v2535
        %2832 = vmatprep.subr.mxu0 %v2538
        %2833 = vmatpush1.msra.mxu0 %v2537
        %2834 = vmatprep.subr.mxu0 %v2540
        %2835 = vmatpush1.msra.mxu0 %v2539
        %2836 = vmatprep.subr.mxu0 %v2542
        %2837 = vmatpush1.msra.mxu0 %v2541
        %2838 = vmatprep.subr.mxu0 %v2544
        %2839 = vmatpush1.msra.mxu0 %v2543
        %2840 = vmatprep.subr.mxu0 %v2546
        %2841 = vmatpush1.msra.mxu0 %v2545
        %2842 = vmatprep.subr.mxu0 %v2548
        %2843 = vmatpush1.msra.mxu0 %v2547
        %2844 = vmatprep.subr.mxu0 %v2550
        %2845 = vmatpush1.msra.mxu0 %v2549
        %2846 = vmatprep.subr.mxu0 %v2552
        %2847 = vmatpush1.msra.mxu0 %v2551
        %2848 = vmatprep.subr.mxu0 %v2554
        %2849 = vmatpush1.msra.mxu0 %v2553
        %2850 = vmatprep.subr.mxu0 %v2556
        %2851 = vmatpush1.msra.mxu0 %v2555
        %2852 = vmatprep.subr.mxu0 %v2558
        %2853 = vmatpush1.msra.mxu0 %v2557
        %2854 = vmatprep.subr.mxu0 %v2560
        %2855 = vmatpush1.msra.mxu0 %v2559
        %2856 = vmatprep.subr.mxu0 %v2562
        %2857 = vmatpush1.msra.mxu0 %v2561
        %2858 = vmatprep.subr.mxu0 %v2564
        %2859 = vmatpush1.msra.mxu0 %v2563
        %2860 = vmatprep.subr.mxu0 %v2566
        %2861 = vmatpush1.msra.mxu0 %v2565
        %2862 = vmatprep.subr.mxu0 %v2568
        %2863 = vmatpush1.msra.mxu0 %v2567
        %2864 = vmatprep.subr.mxu0 %v2570
        %2865 = vmatpush1.msra.mxu0 %v2569
        %2866 = vmatprep.subr.mxu0 %v2572
        %2867 = vmatpush1.msra.mxu0 %v2571
        %2868 = vmatprep.subr.mxu0 %v2574
        %2869 = vmatpush1.msra.mxu0 %v2573
        %2870 = vmatprep.subr.mxu0 %v2576
        %2871 = vmatpush1.msra.mxu0 %v2575
        %2872 = vmatprep.mubr.f32.mxu0 %v2312
        %2873 = vmatmul.mubr.f32.gmra.mrb[0].mxu0 %v2311
        %v2874 = vpop.f32.mrb[0].mxu0
        %v2875 = vadd.f32 %v2798, %v2874
        %v2876 = vpop.f32.mrb[0].mxu0
        %v2877 = vadd.f32 %v2800, %v2876
        %2878 = vmatprep.mubr.f32.mxu0 %v2320
        %2879 = vmatmul.mubr.f32.gmra.mrb[0].mxu0 %v2319
        %v2880 = vpop.f32.mrb[0].mxu0
        %v2881 = vadd.f32 %v2804, %v2880
        %v2882 = vpop.f32.mrb[0].mxu0
        %v2883 = vadd.f32 %v2806, %v2882
        %2884 = vdwg.mxu0
        %2885 = vrot.lane.b32.xlu0 %v2875, 9
        %v2886 = vpop.permute.xlu0 %2885
        %2887 = vrot.lane.b32.xlu0 %v2881, 9
        %v2888 = vpop.permute.xlu0 %2887
        %2889 = vrot.lane.b32.xlu0 %v2877, 9
        %v2890 = vpop.permute.xlu0 %2889
        %2891 = vrot.lane.b32.xlu0 %v2883, 9
        %v2892 = vpop.permute.xlu0 %2891
        %vm2893 = vcmp.lt.s32.totalorder %v616, 9
        %v2894 = vsel %vm2893, %v2886, %v2890
        %v2895 = vsel %vm2893, %v2888, %v2892
        %v2896 = vsel %vm2893, %v2890, %v2886
        %v2897 = vsel %vm2893, %v2892, %v2888
        %v2898 = vld [vmem:[%s2] ss:$8 sm:$0x3]
        %v2900 = vlaneseq
        %v2901 = vshrl.u32 %v2900, 7
        %v2902 = vsub.s32 0, %v2901
        %v2903 = vrot.slane %v2898, %v2902
        %v2904 = vlaneseq
        %v2905 = vshrl.u32 %v2904, 7
        %v2906 = vsub.s32 1, %v2905
        %v2907 = vrot.slane %v2898, %v2906
        %v2910 = vmul.f32 %v2896, %v2903
        %v2911 = vmul.f32 %v2894, %v2907
        %v2912 = vmul.f32 %v2897, %v2903
        %v2913 = vmul.f32 %v2895, %v2907
        %2914 = vrot.lane.b32.xlu0 %v2875, 8
        %v2915 = vpop.permute.xlu0 %2914
        %2916 = vrot.lane.b32.xlu0 %v2881, 8
        %v2917 = vpop.permute.xlu0 %2916
        %2918 = vrot.lane.b32.xlu0 %v2877, 8
        %v2919 = vpop.permute.xlu0 %2918
        %2920 = vrot.lane.b32.xlu0 %v2883, 8
        %v2921 = vpop.permute.xlu0 %2920
        %vm2922 = vcmp.lt.s32.totalorder %v616, 8
        %v2923 = vsel %vm2922, %v2915, %v2919
        %v2924 = vsel %vm2922, %v2917, %v2921
        %v2925 = vsel %vm2922, %v2919, %v2915
        %v2926 = vsel %vm2922, %v2921, %v2917
        %s2927 = scalar_lea.vmem %s2, 1
        %v2928 = vld [vmem:[%s2927] ss:$8 sm:$0x3]
        %v2930 = vlaneseq
        %v2931 = vshrl.u32 %v2930, 7
        %v2932 = vsub.s32 0, %v2931
        %v2933 = vrot.slane %v2928, %v2932
        %v2934 = vlaneseq
        %v2935 = vshrl.u32 %v2934, 7
        %v2936 = vsub.s32 1, %v2935
        %v2937 = vrot.slane %v2928, %v2936
        %v2940 = vmul.f32 %v2925, %v2933
        %v2941 = vmul.f32 %v2923, %v2937
        %v2942 = vmul.f32 %v2926, %v2933
        %v2943 = vmul.f32 %v2924, %v2937
        %2944 = vrot.lane.b32.xlu0 %v2875, 7
        %v2945 = vpop.permute.xlu0 %2944
        %2946 = vrot.lane.b32.xlu0 %v2881, 7
        %v2947 = vpop.permute.xlu0 %2946
        %2948 = vrot.lane.b32.xlu0 %v2877, 7
        %v2949 = vpop.permute.xlu0 %2948
        %2950 = vrot.lane.b32.xlu0 %v2883, 7
        %v2951 = vpop.permute.xlu0 %2950
        %vm2952 = vcmp.lt.s32.totalorder %v616, 7
        %v2953 = vsel %vm2952, %v2945, %v2949
        %v2954 = vsel %vm2952, %v2947, %v2951
        %v2955 = vsel %vm2952, %v2949, %v2945
        %v2956 = vsel %vm2952, %v2951, %v2947
        %s2957 = scalar_lea.vmem %s2, 2
        %v2958 = vld [vmem:[%s2957] ss:$8 sm:$0x3]
        %v2960 = vlaneseq
        %v2961 = vshrl.u32 %v2960, 7
        %v2962 = vsub.s32 0, %v2961
        %v2963 = vrot.slane %v2958, %v2962
        %v2964 = vlaneseq
        %v2965 = vshrl.u32 %v2964, 7
        %v2966 = vsub.s32 1, %v2965
        %v2967 = vrot.slane %v2958, %v2966
        %v2970 = vmul.f32 %v2955, %v2963
        %v2971 = vmul.f32 %v2953, %v2967
        %v2972 = vmul.f32 %v2956, %v2963
        %v2973 = vmul.f32 %v2954, %v2967
        %2974 = vrot.lane.b32.xlu0 %v2875, 1
        %v2975 = vpop.permute.xlu0 %2974
        %2976 = vrot.lane.b32.xlu0 %v2881, 1
        %v2977 = vpop.permute.xlu0 %2976
        %2978 = vrot.lane.b32.xlu0 %v2877, 1
        %v2979 = vpop.permute.xlu0 %2978
        %2980 = vrot.lane.b32.xlu0 %v2883, 1
        %v2981 = vpop.permute.xlu0 %2980
        %v2982 = vsel %vm850, %v2975, %v2979
        %v2983 = vsel %vm850, %v2977, %v2981
        %v2984 = vsel %vm850, %v2979, %v2975
        %v2985 = vsel %vm850, %v2981, %v2977
        %s2986 = scalar_lea.vmem %s2, 3
        %v2987 = vld [vmem:[%s2986] ss:$8 sm:$0x3]
        %v2989 = vlaneseq
        %v2990 = vshrl.u32 %v2989, 7
        %v2991 = vsub.s32 0, %v2990
        %v2992 = vrot.slane %v2987, %v2991
        %v2993 = vlaneseq
        %v2994 = vshrl.u32 %v2993, 7
        %v2995 = vsub.s32 1, %v2994
        %v2996 = vrot.slane %v2987, %v2995
        %v2999 = vmul.f32 %v2984, %v2992
        %v3000 = vmul.f32 %v2982, %v2996
        %v3001 = vmul.f32 %v2985, %v2992
        %v3002 = vmul.f32 %v2983, %v2996
        %3003 = vrot.lane.b32.xlu0 %v2875, 127
        %v3004 = vpop.permute.xlu0 %3003
        %3005 = vrot.lane.b32.xlu0 %v2881, 127
        %v3006 = vpop.permute.xlu0 %3005
        %3007 = vrot.lane.b32.xlu0 %v2877, 127
        %v3008 = vpop.permute.xlu0 %3007
        %3009 = vrot.lane.b32.xlu0 %v2883, 127
        %v3010 = vpop.permute.xlu0 %3009
        %v3011 = vsel %vm928, %v3004, %v3008
        %v3012 = vsel %vm928, %v3006, %v3010
        %v3013 = vsel %vm928, %v3008, %v3004
        %v3014 = vsel %vm928, %v3010, %v3006
        %s3015 = scalar_lea.vmem %s2, 5
        %v3016 = vld [vmem:[%s3015] ss:$8 sm:$0x3]
        %v3018 = vlaneseq
        %v3019 = vshrl.u32 %v3018, 7
        %v3020 = vsub.s32 0, %v3019
        %v3021 = vrot.slane %v3016, %v3020
        %v3022 = vlaneseq
        %v3023 = vshrl.u32 %v3022, 7
        %v3024 = vsub.s32 1, %v3023
        %v3025 = vrot.slane %v3016, %v3024
        %v3028 = vmul.f32 %v3011, %v3021
        %v3029 = vmul.f32 %v3013, %v3025
        %v3030 = vmul.f32 %v3012, %v3021
        %v3031 = vmul.f32 %v3014, %v3025
        %3032 = vrot.lane.b32.xlu0 %v2875, 121
        %v3033 = vpop.permute.xlu0 %3032
        %3034 = vrot.lane.b32.xlu0 %v2881, 121
        %v3035 = vpop.permute.xlu0 %3034
        %3036 = vrot.lane.b32.xlu0 %v2877, 121
        %v3037 = vpop.permute.xlu0 %3036
        %3038 = vrot.lane.b32.xlu0 %v2883, 121
        %v3039 = vpop.permute.xlu0 %3038
        %vm3040 = vcmp.lt.s32.totalorder %v616, 121
        %v3041 = vsel %vm3040, %v3033, %v3037
        %v3042 = vsel %vm3040, %v3035, %v3039
        %v3043 = vsel %vm3040, %v3037, %v3033
        %v3044 = vsel %vm3040, %v3039, %v3035
        %s3045 = scalar_lea.vmem %s2, 6
        %v3046 = vld [vmem:[%s3045] ss:$8 sm:$0x3]
        %v3048 = vlaneseq
        %v3049 = vshrl.u32 %v3048, 7
        %v3050 = vsub.s32 0, %v3049
        %v3051 = vrot.slane %v3046, %v3050
        %v3052 = vlaneseq
        %v3053 = vshrl.u32 %v3052, 7
        %v3054 = vsub.s32 1, %v3053
        %v3055 = vrot.slane %v3046, %v3054
        %v3058 = vmul.f32 %v3041, %v3051
        %v3059 = vmul.f32 %v3043, %v3055
        %v3060 = vmul.f32 %v3042, %v3051
        %v3061 = vmul.f32 %v3044, %v3055
        %3062 = vrot.lane.b32.xlu0 %v2875, 120
        %v3063 = vpop.permute.xlu0 %3062
        %3064 = vrot.lane.b32.xlu0 %v2881, 120
        %v3065 = vpop.permute.xlu0 %3064
        %3066 = vrot.lane.b32.xlu0 %v2877, 120
        %v3067 = vpop.permute.xlu0 %3066
        %3068 = vrot.lane.b32.xlu0 %v2883, 120
        %v3069 = vpop.permute.xlu0 %3068
        %vm3070 = vcmp.lt.s32.totalorder %v616, 120
        %v3071 = vsel %vm3070, %v3063, %v3067
        %v3072 = vsel %vm3070, %v3065, %v3069
        %v3073 = vsel %vm3070, %v3067, %v3063
        %v3074 = vsel %vm3070, %v3069, %v3065
        %s3075 = scalar_lea.vmem %s2, 7
        %v3076 = vld [vmem:[%s3075] ss:$8 sm:$0x3]
        %v3078 = vlaneseq
        %v3079 = vshrl.u32 %v3078, 7
        %v3080 = vsub.s32 0, %v3079
        %v3081 = vrot.slane %v3076, %v3080
        %v3082 = vlaneseq
        %v3083 = vshrl.u32 %v3082, 7
        %v3084 = vsub.s32 1, %v3083
        %v3085 = vrot.slane %v3076, %v3084
        %v3088 = vmul.f32 %v3071, %v3081
        %v3089 = vmul.f32 %v3073, %v3085
        %v3090 = vmul.f32 %v3072, %v3081
        %v3091 = vmul.f32 %v3074, %v3085
        %3092 = vrot.lane.b32.xlu0 %v2875, 119
        %v3093 = vpop.permute.xlu0 %3092
        %3094 = vrot.lane.b32.xlu0 %v2881, 119
        %v3095 = vpop.permute.xlu0 %3094
        %3096 = vrot.lane.b32.xlu0 %v2877, 119
        %v3097 = vpop.permute.xlu0 %3096
        %3098 = vrot.lane.b32.xlu0 %v2883, 119
        %v3099 = vpop.permute.xlu0 %3098
        %vm3100 = vcmp.lt.s32.totalorder %v616, 119
        %v3101 = vsel %vm3100, %v3093, %v3097
        %v3102 = vsel %vm3100, %v3095, %v3099
        %v3103 = vsel %vm3100, %v3097, %v3093
        %v3104 = vsel %vm3100, %v3099, %v3095
        %s3105 = scalar_lea.vmem %s2, 16
        %v3106 = vld [vmem:[%s3105] ss:$8 sm:$0x3]
        %v3108 = vlaneseq
        %v3109 = vshrl.u32 %v3108, 7
        %v3110 = vsub.s32 0, %v3109
        %v3111 = vrot.slane %v3106, %v3110
        %v3112 = vlaneseq
        %v3113 = vshrl.u32 %v3112, 7
        %v3114 = vsub.s32 1, %v3113
        %v3115 = vrot.slane %v3106, %v3114
        %v3118 = vmul.f32 %v3101, %v3111
        %v3119 = vmul.f32 %v3103, %v3115
        %v3120 = vmul.f32 %v3102, %v3111
        %v3121 = vmul.f32 %v3104, %v3115
        %v3122 = vld [vmem:[%s11] sm:$0xff]
        %v3123 = vld [vmem:[%s11 + $0x8] sm:$0xff]
        %v3124 = vld [vmem:[%s11 + $0x10] sm:$0xff]
        %v3125 = vld [vmem:[%s11 + $0x18] sm:$0xff]
        %v3126 = vld [vmem:[%s11 + $0x20] sm:$0xff]
        %v3127 = vld [vmem:[%s11 + $0x28] sm:$0xff]
        %v3128 = vld [vmem:[%s11 + $0x30] sm:$0xff]
        %v3129 = vld [vmem:[%s11 + $0x38] sm:$0xff]
        %vm3130 = vcmask 130048
        %v3132 = vsel %vm3130, %v3123, 0
        %v3135 = vsel %vm3130, %v3125, 0
        %v3138 = vsel %vm3130, %v3127, 0
        %v3141 = vsel %vm3130, %v3129, 0
        %3143 = vmatprep.subr.mxu0 %v2911
        %3144 = vmatpush1.msra.mxu0 %v2910
        %3145 = vmatprep.subr.mxu0 %v2913
        %3146 = vmatpush1.msra.mxu0 %v2912
        %3147 = vmatprep.subr.mxu0 %v2941
        %3148 = vmatpush1.msra.mxu0 %v2940
        %3149 = vmatprep.subr.mxu0 %v2943
        %3150 = vmatpush1.msra.mxu0 %v2942
        %3151 = vmatprep.subr.mxu0 %v2971
        %3152 = vmatpush1.msra.mxu0 %v2970
        %3153 = vmatprep.subr.mxu0 %v2973
        %3154 = vmatpush1.msra.mxu0 %v2972
        %3155 = vmatprep.subr.mxu0 %v3000
        %3156 = vmatpush1.msra.mxu0 %v2999
        %3157 = vmatprep.subr.mxu0 %v3002
        %3158 = vmatpush1.msra.mxu0 %v3001
        %3159 = vmatprep.subr.mxu0 %v2877
        %3160 = vmatpush1.msra.mxu0 %v2875
        %3161 = vmatprep.subr.mxu0 %v2883
        %3162 = vmatpush1.msra.mxu0 %v2881
        %3163 = vmatprep.subr.mxu0 %v3029
        %3164 = vmatpush1.msra.mxu0 %v3028
        %3165 = vmatprep.subr.mxu0 %v3031
        %3166 = vmatpush1.msra.mxu0 %v3030
        %3167 = vmatprep.subr.mxu0 %v3059
        %3168 = vmatpush1.msra.mxu0 %v3058
        %3169 = vmatprep.subr.mxu0 %v3061
        %3170 = vmatpush1.msra.mxu0 %v3060
        %3171 = vmatprep.subr.mxu0 %v3089
        %3172 = vmatpush1.msra.mxu0 %v3088
        %3173 = vmatprep.subr.mxu0 %v3091
        %3174 = vmatpush1.msra.mxu0 %v3090
        %3175 = vmatprep.subr.mxu0 %v3119
        %3176 = vmatpush1.msra.mxu0 %v3118
        %3177 = vmatprep.subr.mxu0 %v3121
        %3178 = vmatpush1.msra.mxu0 %v3120
        %3179 = vmatprep.subr.mxu0 0.0
        %3180 = vmatpush1.msra.mxu0 0.0
        %3181 = vmatprep.subr.mxu0 0.0
        %3182 = vmatpush1.msra.mxu0 0.0
        %3183 = vmatprep.subr.mxu0 0.0
        %3184 = vmatpush1.msra.mxu0 0.0
        %3185 = vmatprep.subr.mxu0 0.0
        %3186 = vmatpush1.msra.mxu0 0.0
        %3187 = vmatprep.subr.mxu0 0.0
        %3188 = vmatpush1.msra.mxu0 0.0
        %3189 = vmatprep.subr.mxu0 0.0
        %3190 = vmatpush1.msra.mxu0 0.0
        %3191 = vmatprep.subr.mxu0 0.0
        %3192 = vmatpush1.msra.mxu0 0.0
        %3193 = vmatprep.subr.mxu0 0.0
        %3194 = vmatpush1.msra.mxu0 0.0
        %3195 = vmatprep.subr.mxu0 0.0
        %3196 = vmatpush1.msra.mxu0 0.0
        %3197 = vmatprep.subr.mxu0 0.0
        %3198 = vmatpush1.msra.mxu0 0.0
        %3199 = vmatprep.subr.mxu0 0.0
        %3200 = vmatpush1.msra.mxu0 0.0
        %3201 = vmatprep.subr.mxu0 0.0
        %3202 = vmatpush1.msra.mxu0 0.0
        %3203 = vmatprep.subr.mxu0 0.0
        %3204 = vmatpush1.msra.mxu0 0.0
        %3205 = vmatprep.subr.mxu0 0.0
        %3206 = vmatpush1.msra.mxu0 0.0
        %3207 = vmatprep.mubr.f32.mxu0 %v3132
        %3208 = vmatmul.mubr.f32.gmra.mrb[0].mxu0 %v3122
        %v3209 = vpop.f32.mrb[0].mxu0
        %v3210 = vadd.f32 0.0, %v3209
        %v3211 = vpop.f32.mrb[0].mxu0
        %v3212 = vadd.f32 0.0, %v3211
        %3213 = vmatprep.mubr.f32.mxu0 %v3135
        %3214 = vmatmul.mubr.f32.gmra.mrb[0].mxu0 %v3124
        %v3215 = vpop.f32.mrb[0].mxu0
        %v3216 = vadd.f32 0.0, %v3215
        %v3217 = vpop.f32.mrb[0].mxu0
        %v3218 = vadd.f32 0.0, %v3217
        %3219 = vmatprep.mubr.f32.mxu0 %v3138
        %3220 = vmatmul.mubr.f32.gmra.mrb[0].mxu0 %v3126
        %v3221 = vpop.f32.mrb[0].mxu0
        %v3222 = vadd.f32 0.0, %v3221
        %v3223 = vpop.f32.mrb[0].mxu0
        %v3224 = vadd.f32 0.0, %v3223
        %3225 = vmatprep.mubr.f32.mxu0 %v3141
        %3226 = vmatmul.mubr.f32.gmra.mrb[0].mxu0 %v3128
        %v3227 = vpop.f32.mrb[0].mxu0
        %v3228 = vadd.f32 0.0, %v3227
        %v3229 = vpop.f32.mrb[0].mxu0
        %v3230 = vadd.f32 0.0, %v3229
        %3231 = vdwg.mxu0
        %v3232 = vld [vmem:[%s12] sm:$0xff]
        %v3233 = vld [vmem:[%s12 + $0x8] sm:$0xff]
        %v3234 = vld [vmem:[%s12 + $0x10] sm:$0xff]
        %v3235 = vld [vmem:[%s12 + $0x18] sm:$0xff]
        %3237 = vset.pattern.permute.xlu0 0
        %3238 = vperm.xlu0 %3237, %v3232
        %v3239 = vpop.permute.xlu0 %3238
        %3242 = vset.pattern.permute.xlu0 0
        %3243 = vperm.xlu0 %3242, %v3233
        %v3244 = vpop.permute.xlu0 %3243
        %3247 = vset.pattern.permute.xlu0 0
        %3248 = vperm.xlu0 %3247, %v3234
        %v3249 = vpop.permute.xlu0 %3248
        %3252 = vset.pattern.permute.xlu0 0
        %3253 = vperm.xlu0 %3252, %v3235
        %v3254 = vpop.permute.xlu0 %3253
        %v3256 = vmul.f32 %v3210, %v3239
        %v3257 = vmul.f32 %v3212, %v3239
        %v3258 = vmul.f32 %v3216, %v3244
        %v3259 = vmul.f32 %v3218, %v3244
        %v3260 = vmul.f32 %v3222, %v3249
        %v3261 = vmul.f32 %v3224, %v3249
        %v3262 = vmul.f32 %v3228, %v3254
        %v3263 = vmul.f32 %v3230, %v3254
        %v3264 = vld [vmem:[%s13] sm:$0xff]
        %v3265 = vld [vmem:[%s13 + $0x8] sm:$0xff]
        %v3266 = vld [vmem:[%s13 + $0x10] sm:$0xff]
        %v3267 = vld [vmem:[%s13 + $0x18] sm:$0xff]
        %3269 = vset.pattern.permute.xlu0 0
        %3270 = vperm.xlu0 %3269, %v3264
        %v3271 = vpop.permute.xlu0 %3270
        %3274 = vset.pattern.permute.xlu0 0
        %3275 = vperm.xlu0 %3274, %v3265
        %v3276 = vpop.permute.xlu0 %3275
        %3279 = vset.pattern.permute.xlu0 0
        %3280 = vperm.xlu0 %3279, %v3266
        %v3281 = vpop.permute.xlu0 %3280
        %3284 = vset.pattern.permute.xlu0 0
        %3285 = vperm.xlu0 %3284, %v3267
        %v3286 = vpop.permute.xlu0 %3285
        %v3288 = vadd.f32 %v3256, %v3271
        %v3289 = vadd.f32 %v3257, %v3271
        %v3290 = vadd.f32 %v3258, %v3276
        %v3291 = vadd.f32 %v3259, %v3276
        %v3292 = vadd.f32 %v3260, %v3281
        %v3293 = vadd.f32 %v3261, %v3281
        %v3294 = vadd.f32 %v3262, %v3286
        %v3295 = vadd.f32 %v3263, %v3286
        %v3296 = vmax.f32 %v3288, 0.0
        %v3297 = vmax.f32 %v3289, 0.0
        %v3298 = vmax.f32 %v3290, 0.0
        %v3299 = vmax.f32 %v3291, 0.0
        %v3300 = vmax.f32 %v3292, 0.0
        %v3301 = vmax.f32 %v3293, 0.0
        %v3302 = vmax.f32 %v3294, 0.0
        %v3303 = vmax.f32 %v3295, 0.0
        %3304 = vrot.lane.b32.xlu0 %v3296, 127
        %v3305 = vpop.permute.xlu0 %3304
        %3306 = vrot.lane.b32.xlu0 %v3298, 127
        %v3307 = vpop.permute.xlu0 %3306
        %3308 = vrot.lane.b32.xlu0 %v3300, 127
        %v3309 = vpop.permute.xlu0 %3308
        %3310 = vrot.lane.b32.xlu0 %v3302, 127
        %v3311 = vpop.permute.xlu0 %3310
        %3312 = vrot.lane.b32.xlu0 %v3297, 127
        %v3313 = vpop.permute.xlu0 %3312
        %3314 = vrot.lane.b32.xlu0 %v3299, 127
        %v3315 = vpop.permute.xlu0 %3314
        %3316 = vrot.lane.b32.xlu0 %v3301, 127
        %v3317 = vpop.permute.xlu0 %3316
        %3318 = vrot.lane.b32.xlu0 %v3303, 127
        %v3319 = vpop.permute.xlu0 %3318
        %v3320 = vsel %vm928, %v3305, %v3313
        %v3321 = vsel %vm928, %v3307, %v3315
        %v3322 = vsel %vm928, %v3309, %v3317
        %v3323 = vsel %vm928, %v3311, %v3319
        %v3324 = vsel %vm928, %v3313, %v3305
        %v3325 = vsel %vm928, %v3315, %v3307
        %v3326 = vsel %vm928, %v3317, %v3309
        %v3327 = vsel %vm928, %v3319, %v3311
        %v3328 = vmax.f32 %v3296, %v3320
        %v3329 = vmax.f32 %v3297, %v3324
        %v3330 = vmax.f32 %v3298, %v3321
        %v3331 = vmax.f32 %v3299, %v3325
        %v3332 = vmax.f32 %v3300, %v3322
        %v3333 = vmax.f32 %v3301, %v3326
        %v3334 = vmax.f32 %v3302, %v3323
        %v3335 = vmax.f32 %v3303, %v3327
        %3336 = vrot.lane.b32.xlu0 %v3328, 120
        %v3337 = vpop.permute.xlu0 %3336
        %3338 = vrot.lane.b32.xlu0 %v3330, 120
        %v3339 = vpop.permute.xlu0 %3338
        %3340 = vrot.lane.b32.xlu0 %v3332, 120
        %v3341 = vpop.permute.xlu0 %3340
        %3342 = vrot.lane.b32.xlu0 %v3334, 120
        %v3343 = vpop.permute.xlu0 %3342
        %3344 = vrot.lane.b32.xlu0 %v3329, 120
        %v3345 = vpop.permute.xlu0 %3344
        %3346 = vrot.lane.b32.xlu0 %v3331, 120
        %v3347 = vpop.permute.xlu0 %3346
        %3348 = vrot.lane.b32.xlu0 %v3333, 120
        %v3349 = vpop.permute.xlu0 %3348
        %3350 = vrot.lane.b32.xlu0 %v3335, 120
        %v3351 = vpop.permute.xlu0 %3350
        %v3352 = vsel %vm3070, %v3337, %v3345
        %v3353 = vsel %vm3070, %v3339, %v3347
        %v3354 = vsel %vm3070, %v3341, %v3349
        %v3355 = vsel %vm3070, %v3343, %v3351
        %v3356 = vsel %vm3070, %v3345, %v3337
        %v3357 = vsel %vm3070, %v3347, %v3339
        %v3358 = vsel %vm3070, %v3349, %v3341
        %v3359 = vsel %vm3070, %v3351, %v3343
        %v3360 = vmax.f32 %v3328, %v3352
        %v3361 = vmax.f32 %v3329, %v3356
        %v3362 = vmax.f32 %v3330, %v3353
        %v3363 = vmax.f32 %v3331, %v3357
        %v3364 = vmax.f32 %v3332, %v3354
        %v3365 = vmax.f32 %v3333, %v3358
        %v3366 = vmax.f32 %v3334, %v3355
        %v3367 = vmax.f32 %v3335, %v3359
        %v3368 = vld [vmem:[%s4] sm:$0xff]
        %v3369 = vld [vmem:[%s4 + $0x8] sm:$0xff]
        %v3370 = vld [vmem:[%s4 + $0x10] sm:$0xff]
        %v3371 = vld [vmem:[%s4 + $0x18] sm:$0xff]
        %v3372 = vld [vmem:[%s4 + $0x20] sm:$0xff]
        %v3373 = vld [vmem:[%s4 + $0x28] sm:$0xff]
        %v3374 = vld [vmem:[%s4 + $0x30] sm:$0xff]
        %v3375 = vld [vmem:[%s4 + $0x38] sm:$0xff]
        %v3376 = vld [vmem:[%s4 + $0x40] sm:$0xff]
        %v3377 = vld [vmem:[%s4 + $0x48] sm:$0xff]
        %v3378 = vld [vmem:[%s4 + $0x50] sm:$0xff]
        %v3379 = vld [vmem:[%s4 + $0x58] sm:$0xff]
        %v3380 = vld [vmem:[%s4 + $0x60] sm:$0xff]
        %v3381 = vld [vmem:[%s4 + $0x68] sm:$0xff]
        %v3382 = vld [vmem:[%s4 + $0x70] sm:$0xff]
        %v3383 = vld [vmem:[%s4 + $0x78] sm:$0xff]
        %v3384 = vld [vmem:[%s4 + $0x80] sm:$0xff]
        %v3385 = vld [vmem:[%s4 + $0x88] sm:$0xff]
        %v3386 = vld [vmem:[%s4 + $0x90] sm:$0xff]
        %v3387 = vld [vmem:[%s4 + $0x98] sm:$0xff]
        %v3388 = vld [vmem:[%s4 + $0xa0] sm:$0xff]
        %v3389 = vld [vmem:[%s4 + $0xa8] sm:$0xff]
        %v3390 = vld [vmem:[%s4 + $0xb0] sm:$0xff]
        %v3391 = vld [vmem:[%s4 + $0xb8] sm:$0xff]
        %v3392 = vld [vmem:[%s4 + $0xc0] sm:$0xff]
        %v3393 = vld [vmem:[%s4 + $0xc8] sm:$0xff]
        %v3394 = vld [vmem:[%s4 + $0xd0] sm:$0xff]
        %v3395 = vld [vmem:[%s4 + $0xd8] sm:$0xff]
        %v3396 = vld [vmem:[%s4 + $0xe0] sm:$0xff]
        %v3397 = vld [vmem:[%s4 + $0xe8] sm:$0xff]
        %v3398 = vld [vmem:[%s4 + $0xf0] sm:$0xff]
        %v3399 = vld [vmem:[%s4 + $0xf8] sm:$0xff]
        %3400 = vmatprep.subr.mxu0 0.0
        %3401 = vmatpush1.msra.mxu0 %v3368
        %3402 = vmatprep.subr.mxu0 0.0
        %3403 = vmatpush1.msra.mxu0 %v3369
        %3404 = vmatprep.subr.mxu0 0.0
        %3405 = vmatpush1.msra.mxu0 %v3370
        %3406 = vmatprep.subr.mxu0 0.0
        %3407 = vmatpush1.msra.mxu0 %v3371
        %3408 = vmatprep.subr.mxu0 0.0
        %3409 = vmatpush1.msra.mxu0 %v3372
        %3410 = vmatprep.subr.mxu0 0.0
        %3411 = vmatpush1.msra.mxu0 %v3373
        %3412 = vmatprep.subr.mxu0 0.0
        %3413 = vmatpush1.msra.mxu0 %v3374
        %3414 = vmatprep.subr.mxu0 0.0
        %3415 = vmatpush1.msra.mxu0 %v3375
        %3416 = vmatprep.subr.mxu0 0.0
        %3417 = vmatpush1.msra.mxu0 %v3376
        %3418 = vmatprep.subr.mxu0 0.0
        %3419 = vmatpush1.msra.mxu0 %v3377
        %3420 = vmatprep.subr.mxu0 0.0
        %3421 = vmatpush1.msra.mxu0 %v3378
        %3422 = vmatprep.subr.mxu0 0.0
        %3423 = vmatpush1.msra.mxu0 %v3379
        %3424 = vmatprep.subr.mxu0 0.0
        %3425 = vmatpush1.msra.mxu0 %v3380
        %3426 = vmatprep.subr.mxu0 0.0
        %3427 = vmatpush1.msra.mxu0 %v3381
        %3428 = vmatprep.subr.mxu0 0.0
        %3429 = vmatpush1.msra.mxu0 %v3382
        %3430 = vmatprep.subr.mxu0 0.0
        %3431 = vmatpush1.msra.mxu0 %v3383
        %3432 = vmatprep.subr.mxu0 0.0
        %3433 = vmatpush1.msra.mxu0 %v3384
        %3434 = vmatprep.subr.mxu0 0.0
        %3435 = vmatpush1.msra.mxu0 %v3385
        %3436 = vmatprep.subr.mxu0 0.0
        %3437 = vmatpush1.msra.mxu0 %v3386
        %3438 = vmatprep.subr.mxu0 0.0
        %3439 = vmatpush1.msra.mxu0 %v3387
        %3440 = vmatprep.subr.mxu0 0.0
        %3441 = vmatpush1.msra.mxu0 %v3388
        %3442 = vmatprep.subr.mxu0 0.0
        %3443 = vmatpush1.msra.mxu0 %v3389
        %3444 = vmatprep.subr.mxu0 0.0
        %3445 = vmatpush1.msra.mxu0 %v3390
        %3446 = vmatprep.subr.mxu0 0.0
        %3447 = vmatpush1.msra.mxu0 %v3391
        %3448 = vmatprep.subr.mxu0 0.0
        %3449 = vmatpush1.msra.mxu0 %v3392
        %3450 = vmatprep.subr.mxu0 0.0
        %3451 = vmatpush1.msra.mxu0 %v3393
        %3452 = vmatprep.subr.mxu0 0.0
        %3453 = vmatpush1.msra.mxu0 %v3394
        %3454 = vmatprep.subr.mxu0 0.0
        %3455 = vmatpush1.msra.mxu0 %v3395
        %3456 = vmatprep.subr.mxu0 0.0
        %3457 = vmatpush1.msra.mxu0 %v3396
        %3458 = vmatprep.subr.mxu0 0.0
        %3459 = vmatpush1.msra.mxu0 %v3397
        %3460 = vmatprep.subr.mxu0 0.0
        %3461 = vmatpush1.msra.mxu0 %v3398
        %3462 = vmatprep.subr.mxu0 0.0
        %3463 = vmatpush1.msra.mxu0 %v3399
        %3464 = vmatprep.mubr.f32.mxu0 %v3361
        %3465 = vmatmul.mubr.f32.gmra.mrb[0].mxu0 %v3360
        %v3466 = vpop.f32.mrb[0].mxu0
        %v3467 = vadd.f32 0.0, %v3466
        %v3468 = vpop.f32.mrb[0].mxu0
        %3469 = vmatprep.mubr.f32.mxu0 %v3363
        %3470 = vmatmul.mubr.f32.gmra.mrb[0].mxu0 %v3362
        %v3471 = vpop.f32.mrb[0].mxu0
        %v3472 = vadd.f32 0.0, %v3471
        %v3473 = vpop.f32.mrb[0].mxu0
        %3474 = vmatprep.mubr.f32.mxu0 %v3365
        %3475 = vmatmul.mubr.f32.gmra.mrb[0].mxu0 %v3364
        %v3476 = vpop.f32.mrb[0].mxu0
        %v3477 = vadd.f32 0.0, %v3476
        %v3478 = vpop.f32.mrb[0].mxu0
        %3479 = vmatprep.mubr.f32.mxu0 %v3367
        %3480 = vmatmul.mubr.f32.gmra.mrb[0].mxu0 %v3366
        %v3481 = vpop.f32.mrb[0].mxu0
        %v3482 = vadd.f32 0.0, %v3481
        %v3483 = vpop.f32.mrb[0].mxu0
        %3484 = vdwg.mxu0
        %v3485 = vld [vmem:[%s14] sm:$0xff]
        %v3486 = vld [vmem:[%s14 + $0x8] sm:$0xff]
        %v3487 = vld [vmem:[%s14 + $0x10] sm:$0xff]
        %v3488 = vld [vmem:[%s14 + $0x18] sm:$0xff]
        %v3489 = vld [vmem:[%s14 + $0x20] sm:$0xff]
        %v3490 = vld [vmem:[%s14 + $0x28] sm:$0xff]
        %v3491 = vld [vmem:[%s14 + $0x30] sm:$0xff]
        %v3492 = vld [vmem:[%s14 + $0x38] sm:$0xff]
        %v3493 = vld [vmem:[%s15] sm:$0xff]
        %v3494 = vld [vmem:[%s15 + $0x8] sm:$0xff]
        %v3495 = vld [vmem:[%s15 + $0x10] sm:$0xff]
        %v3496 = vld [vmem:[%s15 + $0x18] sm:$0xff]
        %v3497 = vld [vmem:[%s15 + $0x20] sm:$0xff]
        %v3498 = vld [vmem:[%s15 + $0x28] sm:$0xff]
        %v3499 = vld [vmem:[%s15 + $0x30] sm:$0xff]
        %v3500 = vld [vmem:[%s15 + $0x38] sm:$0xff]
        %3502 = vset.pattern.permute.xlu0 0
        %3503 = vperm.xlu0 %3502, %v3493
        %v3504 = vpop.permute.xlu0 %3503
        %3507 = vset.pattern.permute.xlu0 0
        %3508 = vperm.xlu0 %3507, %v3494
        %v3509 = vpop.permute.xlu0 %3508
        %3512 = vset.pattern.permute.xlu0 0
        %3513 = vperm.xlu0 %3512, %v3495
        %v3514 = vpop.permute.xlu0 %3513
        %3517 = vset.pattern.permute.xlu0 0
        %3518 = vperm.xlu0 %3517, %v3496
        %v3519 = vpop.permute.xlu0 %3518
        %3522 = vset.pattern.permute.xlu0 0
        %3523 = vperm.xlu0 %3522, %v3497
        %v3524 = vpop.permute.xlu0 %3523
        %3527 = vset.pattern.permute.xlu0 0
        %3528 = vperm.xlu0 %3527, %v3498
        %v3529 = vpop.permute.xlu0 %3528
        %3532 = vset.pattern.permute.xlu0 0
        %3533 = vperm.xlu0 %3532, %v3499
        %v3534 = vpop.permute.xlu0 %3533
        %3537 = vset.pattern.permute.xlu0 0
        %3538 = vperm.xlu0 %3537, %v3500
        %v3539 = vpop.permute.xlu0 %3538
        %vm3541 = vcmask 261120
        %v3543 = vsel %vm3541, %v3485, 0
        %v3546 = vsel %vm3541, %v3486, 0
        %v3549 = vsel %vm3541, %v3487, 0
        %v3552 = vsel %vm3541, %v3488, 0
        %v3555 = vsel %vm3541, %v3489, 0
        %v3558 = vsel %vm3541, %v3490, 0
        %v3561 = vsel %vm3541, %v3491, 0
        %v3564 = vsel %vm3541, %v3492, 0
        %3566 = vmatprep.subr.mxu0 0.0
        %3567 = vmatpush1.msra.mxu0 %v3467
        %3568 = vmatprep.subr.mxu0 0.0
        %3569 = vmatpush1.msra.mxu0 %v3472
        %3570 = vmatprep.subr.mxu0 0.0
        %3571 = vmatpush1.msra.mxu0 %v3477
        %3572 = vmatprep.subr.mxu0 0.0
        %3573 = vmatpush1.msra.mxu0 %v3482
        %3574 = vmatprep.subr.mxu0 0.0
        %3575 = vmatpush1.msra.mxu0 0.0
        %3576 = vmatprep.subr.mxu0 0.0
        %3577 = vmatpush1.msra.mxu0 0.0
        %3578 = vmatprep.subr.mxu0 0.0
        %3579 = vmatpush1.msra.mxu0 0.0
        %3580 = vmatprep.subr.mxu0 0.0
        %3581 = vmatpush1.msra.mxu0 0.0
        %3582 = vmatprep.subr.mxu0 0.0
        %3583 = vmatpush1.msra.mxu0 0.0
        %3584 = vmatprep.subr.mxu0 0.0
        %3585 = vmatpush1.msra.mxu0 0.0
        %3586 = vmatprep.subr.mxu0 0.0
        %3587 = vmatpush1.msra.mxu0 0.0
        %3588 = vmatprep.subr.mxu0 0.0
        %3589 = vmatpush1.msra.mxu0 0.0
        %3590 = vmatprep.subr.mxu0 0.0
        %3591 = vmatpush1.msra.mxu0 0.0
        %3592 = vmatprep.subr.mxu0 0.0
        %3593 = vmatpush1.msra.mxu0 0.0
        %3594 = vmatprep.subr.mxu0 0.0
        %3595 = vmatpush1.msra.mxu0 0.0
        %3596 = vmatprep.subr.mxu0 0.0
        %3597 = vmatpush1.msra.mxu0 0.0
        %3598 = vmatprep.subr.mxu0 0.0
        %3599 = vmatpush1.msra.mxu0 0.0
        %3600 = vmatprep.subr.mxu0 0.0
        %3601 = vmatpush1.msra.mxu0 0.0
        %3602 = vmatprep.subr.mxu0 0.0
        %3603 = vmatpush1.msra.mxu0 0.0
        %3604 = vmatprep.subr.mxu0 0.0
        %3605 = vmatpush1.msra.mxu0 0.0
        %3606 = vmatprep.subr.mxu0 0.0
        %3607 = vmatpush1.msra.mxu0 0.0
        %3608 = vmatprep.subr.mxu0 0.0
        %3609 = vmatpush1.msra.mxu0 0.0
        %3610 = vmatprep.subr.mxu0 0.0
        %3611 = vmatpush1.msra.mxu0 0.0
        %3612 = vmatprep.subr.mxu0 0.0
        %3613 = vmatpush1.msra.mxu0 0.0
        %3614 = vmatprep.subr.mxu0 0.0
        %3615 = vmatpush1.msra.mxu0 0.0
        %3616 = vmatprep.subr.mxu0 0.0
        %3617 = vmatpush1.msra.mxu0 0.0
        %3618 = vmatprep.subr.mxu0 0.0
        %3619 = vmatpush1.msra.mxu0 0.0
        %3620 = vmatprep.subr.mxu0 0.0
        %3621 = vmatpush1.msra.mxu0 0.0
        %3622 = vmatprep.subr.mxu0 0.0
        %3623 = vmatpush1.msra.mxu0 0.0
        %3624 = vmatprep.subr.mxu0 0.0
        %3625 = vmatpush1.msra.mxu0 0.0
        %3626 = vmatprep.subr.mxu0 0.0
        %3627 = vmatpush1.msra.mxu0 0.0
        %3628 = vmatprep.subr.mxu0 0.0
        %3629 = vmatpush1.msra.mxu0 0.0
        %3630 = vmatprep.mubr.f32.mxu0 0.0
        %3631 = vmatmul.mubr.f32.gmra.mrb[0].mxu0 %v3543
        %v3632 = vpop.f32.mrb[0].mxu0
        %v3633 = vadd.f32 %v3504, %v3632
        %v3634 = vpop.f32.mrb[0].mxu0
        %3635 = vmatprep.mubr.f32.mxu0 0.0
        %3636 = vmatmul.mubr.f32.gmra.mrb[0].mxu0 %v3546
        %v3637 = vpop.f32.mrb[0].mxu0
        %v3638 = vadd.f32 %v3509, %v3637
        %v3639 = vpop.f32.mrb[0].mxu0
        %3640 = vmatprep.mubr.f32.mxu0 0.0
        %3641 = vmatmul.mubr.f32.gmra.mrb[0].mxu0 %v3549
        %v3642 = vpop.f32.mrb[0].mxu0
        %v3643 = vadd.f32 %v3514, %v3642
        %v3644 = vpop.f32.mrb[0].mxu0
        %3645 = vmatprep.mubr.f32.mxu0 0.0
        %3646 = vmatmul.mubr.f32.gmra.mrb[0].mxu0 %v3552
        %v3647 = vpop.f32.mrb[0].mxu0
        %v3648 = vadd.f32 %v3519, %v3647
        %v3649 = vpop.f32.mrb[0].mxu0
        %3650 = vmatprep.mubr.f32.mxu0 0.0
        %3651 = vmatmul.mubr.f32.gmra.mrb[0].mxu0 %v3555
        %v3652 = vpop.f32.mrb[0].mxu0
        %v3653 = vadd.f32 %v3524, %v3652
        %v3654 = vpop.f32.mrb[0].mxu0
        %3655 = vmatprep.mubr.f32.mxu0 0.0
        %3656 = vmatmul.mubr.f32.gmra.mrb[0].mxu0 %v3558
        %v3657 = vpop.f32.mrb[0].mxu0
        %v3658 = vadd.f32 %v3529, %v3657
        %v3659 = vpop.f32.mrb[0].mxu0
        %3660 = vmatprep.mubr.f32.mxu0 0.0
        %3661 = vmatmul.mubr.f32.gmra.mrb[0].mxu0 %v3561
        %v3662 = vpop.f32.mrb[0].mxu0
        %v3663 = vadd.f32 %v3534, %v3662
        %v3664 = vpop.f32.mrb[0].mxu0
        %3665 = vmatprep.mubr.f32.mxu0 0.0
        %3666 = vmatmul.mubr.f32.gmra.mrb[0].mxu0 %v3564
        %v3667 = vpop.f32.mrb[0].mxu0
        %v3668 = vadd.f32 %v3539, %v3667
        %v3669 = vpop.f32.mrb[0].mxu0
        %3670 = vdwg.mxu0
        %v3671 = vmax.f32 %v3633, 0.0
        %v3672 = vmax.f32 %v3638, 0.0
        %v3673 = vmax.f32 %v3643, 0.0
        %v3674 = vmax.f32 %v3648, 0.0
        %v3675 = vmax.f32 %v3653, 0.0
        %v3676 = vmax.f32 %v3658, 0.0
        %v3677 = vmax.f32 %v3663, 0.0
        %v3678 = vmax.f32 %v3668, 0.0
        %v3679 = vld [vmem:[%s16] sm:$0xff]
        %v3680 = vld [vmem:[%s16 + $0x8] sm:$0x3]
        %v3681 = vld [vmem:[%s17] sm:$0xff]
        %v3682 = vld [vmem:[%s17 + $0x8] sm:$0x3]
        %3684 = vset.pattern.permute.xlu0 0
        %3685 = vperm.xlu0 %3684, %v3681
        %v3686 = vpop.permute.xlu0 %3685
        %3689 = vset.pattern.permute.xlu0 0
        %3690 = vperm.xlu0 %3689, %v3682
        %v3691 = vpop.permute.xlu0 %3690
        %vm3693 = vcmask 523264
        %v3695 = vsel %vm3693, %v3679, 0
        %v3698 = vsel %vm3693, %v3680, 0
        %3700 = vmatprep.subr.mxu0 0.0
        %3701 = vmatpush1.msra.mxu0 %v3671
        %3702 = vmatprep.subr.mxu0 0.0
        %3703 = vmatpush1.msra.mxu0 %v3672
        %3704 = vmatprep.subr.mxu0 0.0
        %3705 = vmatpush1.msra.mxu0 %v3673
        %3706 = vmatprep.subr.mxu0 0.0
        %3707 = vmatpush1.msra.mxu0 %v3674
        %3708 = vmatprep.subr.mxu0 0.0
        %3709 = vmatpush1.msra.mxu0 %v3675
        %3710 = vmatprep.subr.mxu0 0.0
        %3711 = vmatpush1.msra.mxu0 %v3676
        %3712 = vmatprep.subr.mxu0 0.0
        %3713 = vmatpush1.msra.mxu0 %v3677
        %3714 = vmatprep.subr.mxu0 0.0
        %3715 = vmatpush1.msra.mxu0 %v3678
        %3716 = vmatprep.subr.mxu0 0.0
        %3717 = vmatpush1.msra.mxu0 0.0
        %3718 = vmatprep.subr.mxu0 0.0
        %3719 = vmatpush1.msra.mxu0 0.0
        %3720 = vmatprep.subr.mxu0 0.0
        %3721 = vmatpush1.msra.mxu0 0.0
        %3722 = vmatprep.subr.mxu0 0.0
        %3723 = vmatpush1.msra.mxu0 0.0
        %3724 = vmatprep.subr.mxu0 0.0
        %3725 = vmatpush1.msra.mxu0 0.0
        %3726 = vmatprep.subr.mxu0 0.0
        %3727 = vmatpush1.msra.mxu0 0.0
        %3728 = vmatprep.subr.mxu0 0.0
        %3729 = vmatpush1.msra.mxu0 0.0
        %3730 = vmatprep.subr.mxu0 0.0
        %3731 = vmatpush1.msra.mxu0 0.0
        %3732 = vmatprep.subr.mxu0 0.0
        %3733 = vmatpush1.msra.mxu0 0.0
        %3734 = vmatprep.subr.mxu0 0.0
        %3735 = vmatpush1.msra.mxu0 0.0
        %3736 = vmatprep.subr.mxu0 0.0
        %3737 = vmatpush1.msra.mxu0 0.0
        %3738 = vmatprep.subr.mxu0 0.0
        %3739 = vmatpush1.msra.mxu0 0.0
        %3740 = vmatprep.subr.mxu0 0.0
        %3741 = vmatpush1.msra.mxu0 0.0
        %3742 = vmatprep.subr.mxu0 0.0
        %3743 = vmatpush1.msra.mxu0 0.0
        %3744 = vmatprep.subr.mxu0 0.0
        %3745 = vmatpush1.msra.mxu0 0.0
        %3746 = vmatprep.subr.mxu0 0.0
        %3747 = vmatpush1.msra.mxu0 0.0
        %3748 = vmatprep.subr.mxu0 0.0
        %3749 = vmatpush1.msra.mxu0 0.0
        %3750 = vmatprep.subr.mxu0 0.0
        %3751 = vmatpush1.msra.mxu0 0.0
        %3752 = vmatprep.subr.mxu0 0.0
        %3753 = vmatpush1.msra.mxu0 0.0
        %3754 = vmatprep.subr.mxu0 0.0
        %3755 = vmatpush1.msra.mxu0 0.0
        %3756 = vmatprep.subr.mxu0 0.0
        %3757 = vmatpush1.msra.mxu0 0.0
        %3758 = vmatprep.subr.mxu0 0.0
        %3759 = vmatpush1.msra.mxu0 0.0
        %3760 = vmatprep.subr.mxu0 0.0
        %3761 = vmatpush1.msra.mxu0 0.0
        %3762 = vmatprep.subr.mxu0 0.0
        %3763 = vmatpush1.msra.mxu0 0.0
        %3764 = vmatprep.mubr.f32.mxu0 0.0
        %3765 = vmatmul.mubr.f32.gmra.mrb[0].mxu0 %v3695
        %v3766 = vpop.f32.mrb[0].mxu0
        %v3767 = vadd.f32 %v3686, %v3766
        %v3768 = vpop.f32.mrb[0].mxu0
        %3769 = vmatprep.mubr.f32.mxu0 0.0
        %3770 = vmatmul.mubr.f32.gmra.mrb[0].mxu0 %v3698
        %v3771 = vpop.f32.mrb[0].mxu0
        %v3772 = vadd.f32 %v3691, %v3771
        %v3773 = vpop.f32.mrb[0].mxu0
        %3774 = vdwg.mxu0
        %vm3775 = vcmask 31744
        %3776 = vst.msk [vmem:[%s590] sm:$0xff] %vm3775, %v3767
        %vm3777 = vcmask 25600
        %3778 = vst.msk [vmem:[%s590 + $0x8] sm:$0x3] %vm3777, %v3772
        %p3779 = scmp.lt.s32.totalorder %s30, 1
        %s3780 = scalar_select %p3779, %s30, 1
        %s3781 = smul.addr %s3780, 2
        %s3782 = smul.addr %s3781, 8
        %s3783 = scalar_lea.vmem %s18, %s3782
        // Predicated region
        $region97: #{proxy_vgg2_forward.1} parent=91 // pred_check
          %p3784 = pneg %p431
        $region98: #{proxy_vgg2_forward.1} parent=91 // pred_check_branch
          %3786 = sbr.rel (%p3784) target = $region100
        $region99: #{proxy_vgg2_forward.1} parent=91 // pred_region
          _
        $region100: #{proxy_vgg2_forward.1} parent=91 // pred_fallthru
          _
      $region92: #{proxy_vgg2_forward.1} parent=5 // pred_fallthru
        _
      %p3787 = scmp.le.s32.totalorder 2, %s25
      // Predicated region
      $region101: #{proxy_vgg2_forward.1} parent=5 // pred_check
        %p3788 = pneg %p3787
      $region102: #{proxy_vgg2_forward.1} parent=5 // pred_check_branch
        %3790 = sbr.rel (%p3788) target = $region104
      $region103: #{proxy_vgg2_forward.1} parent=5 // pred_region
        %s3791 = ssub.s32 %s25, 2
        // Predicated region
        $region105: #{proxy_vgg2_forward.1} parent=103 // pred_check
          %p3792 = pneg %p437
        $region106: #{proxy_vgg2_forward.1} parent=103 // pred_check_branch
          %3794 = sbr.rel (%p3792) target = $region108
        $region107: #{proxy_vgg2_forward.1} parent=103 // pred_region
          %p3795 = scmp.lt.s32.totalorder %s31, 1
          %s3796 = scalar_select %p3795, %s31, 1
          %s3797 = smul.addr %s3796, 2
          %s3798 = smul.addr %s3797, 8
          %s3799 = scalar_lea.vmem %s18, %s3798
        $region108: #{proxy_vgg2_forward.1} parent=103 // pred_fallthru
          _
      $region104: #{proxy_vgg2_forward.1} parent=5 // pred_fallthru
        _
    $region6: #{proxy_vgg2_forward.1} parent=1 // loop_footer
      %s29 = sadd.s32 1, %s25
    $region7: #{proxy_vgg2_forward.1} parent=1 // loop_footer_branch
      %24 = sbr.rel target = $region3
    $region8: #{proxy_vgg2_forward.1} parent=1 // loop_exit
      _
    %3800 = vsyncpa [#allocation3], 1
    %s3801 = scalar_lea.sflag [#allocation3], 1
    %3802 = vsyncpa %s3801, 1

</llo_original>
